<compile_context>
chip_gen: v6e
topology: v6e:2x2x1
jax: 0.10.0
libtpu: 0.0.40
codegen_flags: <defaults>
</compile_context>

<pallas_src>
import functools
import math

import jax
import jax.numpy as jnp
from jax import lax
from jax.experimental import pallas as pl
from jax.experimental.pallas import tpu as pltpu

NEG_INF = -1e30  # finite large-negative mask (causal diagonal is never fully masked)


def _layernorm(v, gamma, beta, eps):
    mu = jnp.mean(v, axis=-1, keepdims=True)
    var = jnp.mean((v - mu) ** 2, axis=-1, keepdims=True)
    return (v - mu) * lax.rsqrt(var + eps) * gamma + beta


def gpt_block_kernel(x_ref, wq_ref, wk_ref, wv_ref,
                     g1_ref, b1_ref, g2_ref, b2_ref,
                     w1c_ref, bf1c_ref, w2c_ref, bf2_ref,
                     o_ref,
                     k_scr, v_scr, m_scr, l_scr, acc_scr,
                     *, H, TQ, NFF, eps=1e-5):
    qi = pl.program_id(1)
    _, D = x_ref.shape
    DpH = D // H
    scale = 1.0 / math.sqrt(DpH)

    # ---- LN1 + Q/K/V projection for THIS query tile only (incremental) -----
    x_tile = x_ref[...]                                           # (TQ, D) f32
    xn = _layernorm(x_tile, g1_ref[...], b1_ref[...], eps)
    xn_bf = xn.astype(jnp.bfloat16)

    q = jnp.dot(xn_bf, wq_ref[...], preferred_element_type=jnp.float32) * scale
    k = jnp.dot(xn_bf, wk_ref[...], preferred_element_type=jnp.float32)
    v = jnp.dot(xn_bf, wv_ref[...], preferred_element_type=jnp.float32)

    qh = jnp.transpose(q.reshape(TQ, H, DpH), (1, 0, 2)).astype(jnp.bfloat16)
    kh = jnp.transpose(k.reshape(TQ, H, DpH), (1, 0, 2)).astype(jnp.bfloat16)
    vh = jnp.transpose(v.reshape(TQ, H, DpH), (1, 0, 2)).astype(jnp.bfloat16)
    # Append this tile's K/V to the per-batch cache. Causal attention only
    # ever reads tiles <= qi, which were written by this or earlier steps
    # (the query-tile grid axis is "arbitrary" => sequential, in order).
    k_scr[qi] = kh
    v_scr[qi] = vh

    # ---- flash attention: online softmax over KV tiles 0..qi (causal skip) --
    m_scr[...] = jnp.full_like(m_scr, NEG_INF)
    l_scr[...] = jnp.zeros_like(l_scr)
    acc_scr[...] = jnp.zeros_like(acc_scr)

    @pl.loop(0, qi)                                # strictly-below-diagonal tiles
    def _(j):
        kj = k_scr[j]                                             # (H, TQ, DpH)
        vj = v_scr[j]
        s = jnp.einsum('hqd,hkd->hqk', qh, kj,
                       preferred_element_type=jnp.float32)        # (H, TQ, TQ)
        m_prev = m_scr[...]
        m_new = jnp.maximum(m_prev, s.max(-1, keepdims=True))
        a = jnp.exp(m_prev - m_new)
        p = jnp.exp(s - m_new)
        l_scr[...] = a * l_scr[...] + p.sum(-1, keepdims=True)
        acc_scr[...] = a * acc_scr[...] + jnp.einsum(
            'hqk,hkd->hqd', p.astype(jnp.bfloat16), vj,
            preferred_element_type=jnp.float32)
        m_scr[...] = m_new

    # Diagonal tile: static lower-triangular mask within the tile.
    s = jnp.einsum('hqd,hkd->hqk', qh, kh, preferred_element_type=jnp.float32)
    rows = lax.broadcasted_iota(jnp.int32, (TQ, TQ), 0)
    cols = lax.broadcasted_iota(jnp.int32, (TQ, TQ), 1)
    s = jnp.where((rows >= cols)[None, :, :], s, NEG_INF)
    m_prev = m_scr[...]
    m_new = jnp.maximum(m_prev, s.max(-1, keepdims=True))
    a = jnp.exp(m_prev - m_new)
    p = jnp.exp(s - m_new)
    l_fin = a * l_scr[...] + p.sum(-1, keepdims=True)
    acc_fin = a * acc_scr[...] + jnp.einsum(
        'hqk,hkd->hqd', p.astype(jnp.bfloat16), vh,
        preferred_element_type=jnp.float32)
    # TODO(synk): attention dropout (P=0.2) is identity in eval mode; no RNG mask.

    attn = acc_fin * pl.reciprocal(l_fin, approx=True)            # (H, TQ, DpH)
    attn = jnp.transpose(attn, (1, 0, 2)).reshape(TQ, D)

    x1 = attn + x_tile                                            # residual 1

    # ---- MLP fused over chunks of the 4D hidden dim (unrolled) --------------
    xn2 = _layernorm(x1, g2_ref[...], b2_ref[...], eps)
    xn2_bf = xn2.astype(jnp.bfloat16)

    def ff_body(c, acc_y):
        h = jnp.dot(xn2_bf, w1c_ref[c], preferred_element_type=jnp.float32)
        h = jnp.maximum(h + bf1c_ref[c], 0.0).astype(jnp.bfloat16)  # bias + ReLU
        return acc_y + jnp.dot(h, w2c_ref[c], preferred_element_type=jnp.float32)

    y = lax.fori_loop(0, NFF, ff_body, jnp.zeros((TQ, D), jnp.float32),
                      unroll=True)
    y = y + bf2_ref[...]
    # TODO(synk): FF dropout (P=0.2) is identity in eval mode.

    o_ref[...] = (y + x1).astype(o_ref.dtype)                     # residual 2


def _vmem_limit_bytes():
    # Generation-aware VMEM budget: ~85% of the physical per-core VMEM
    # (~54 MiB on v7x's 64 MiB, ~108 MiB on v5e/v6e's 128 MiB), leaving
    # headroom for compiler scratch.
    try:
        cap = int(pltpu.get_tpu_info().vmem_capacity_bytes)
    except Exception:
        cap = 64 * 1024 * 1024  # conservative fallback
    return min(int(cap * 0.85), 110 * 1024 * 1024)


def gpt_block(x, params, H, *, q_tile=None, ff_chunk=None, eps=1e-5):
    B, S, D = x.shape
    DFF = params["w1_t"].shape[1]
    assert D % H == 0
    DpH = D // H

    if q_tile is None:
        q_tile = min(S, 256)
    if ff_chunk is None:
        ff_chunk = min(DFF, 512)
    assert S % q_tile == 0 and q_tile % 8 == 0
    assert DFF % ff_chunk == 0
    NQ = S // q_tile
    NFF = DFF // ff_chunk

    # MXU operands in bf16 (halves resident weight VMEM); element-wise math
    # stays f32 in-kernel. (fp8 weights would halve VMEM again on v7x only;
    # not done here to stay correct on v5e/v6e.)
    wq = params["wq_t"].astype(jnp.bfloat16)
    wk = params["wk_t"].astype(jnp.bfloat16)
    wv = params["wv_t"].astype(jnp.bfloat16)
    # pre-chunk FF weights along the 4D hidden dim for the fused MLP loop
    w1c = params["w1_t"].reshape(D, NFF, ff_chunk).transpose(1, 0, 2).astype(jnp.bfloat16)
    w2c = params["w2_t"].reshape(NFF, ff_chunk, D).astype(jnp.bfloat16)
    bf1c = params["bf1"].reshape(NFF, 1, ff_chunk)

    inputs = [x, wq, wk, wv,
              params["g1"], params["b1"], params["g2"], params["b2"],
              w1c, bf1c, w2c, params["bf2"]]

    def weight_spec(a, single_buffer):
        n = a.ndim
        idx = lambda b, q, n=n: (0,) * n
        if single_buffer:
            # Constant-index resident weights are never re-fetched, so
            # double-buffering only doubles VMEM. Buffered(1) halves it.
            return pl.BlockSpec(a.shape, idx, pipeline_mode=pl.Buffered(1))
        return pl.BlockSpec(a.shape, idx)

    x_spec = pl.BlockSpec((None, q_tile, D), lambda b, q: (b, q, 0))
    out_spec = pl.BlockSpec((None, q_tile, D), lambda b, q: (b, q, 0))

    weight_bytes = sum(int(a.size) * a.dtype.itemsize for a in inputs[1:])
    cost = pl.CostEstimate(
        flops=int(B * S * D * (22 * D + 2 * S)),              # causal attention
        transcendentals=int(B * H * S * S // 2 + 4 * B * S),
        bytes_accessed=int(2 * x.size * x.dtype.itemsize + weight_bytes),
    )

    kernel = functools.partial(gpt_block_kernel, H=H, TQ=q_tile, NFF=NFF, eps=eps)

    def build(single_buffer_weights):
        in_specs = [x_spec] + [weight_spec(a, single_buffer_weights)
                               for a in inputs[1:]]
        return pl.pallas_call(
            kernel,
            out_shape=jax.ShapeDtypeStruct((B, S, D), x.dtype),
            grid_spec=pltpu.PrefetchScalarGridSpec(
                num_scalar_prefetch=0,
                grid=(B, NQ),
                in_specs=in_specs,
                out_specs=out_spec,
                scratch_shapes=[
                    pltpu.VMEM((NQ, H, q_tile, DpH), jnp.bfloat16),  # K cache
                    pltpu.VMEM((NQ, H, q_tile, DpH), jnp.bfloat16),  # V cache
                    pltpu.VMEM((H, q_tile, 1), jnp.float32),         # running max
                    pltpu.VMEM((H, q_tile, 1), jnp.float32),         # running sum
                    pltpu.VMEM((H, q_tile, DpH), jnp.float32),       # PV accumulator
                ],
            ),
            compiler_params=pltpu.CompilerParams(
                # batch axis may split across TensorCores; the query-tile axis
                # carries the per-batch K/V cache, so it stays sequential.
                dimension_semantics=("parallel", "arbitrary"),
                vmem_limit_bytes=_vmem_limit_bytes(),
            ),
            cost_estimate=cost,
        )

    try:
        return build(single_buffer_weights=True)(*inputs)
    except Exception:
        # Fallback if this Pallas build rejects pipeline_mode=pl.Buffered(1):
        # identical kernel with default (double-buffered) weight specs.
        return build(single_buffer_weights=False)(*inputs)


def gpt_block_ref(x, params, H, eps=1e-5):
    """Pure-JAX f32 reference mirroring the PyTorch forward (eval mode)."""
    B, S, D = x.shape
    DpH = D // H

    def ln(v, g, b):
        mu = v.mean(-1, keepdims=True)
        var = ((v - mu) ** 2).mean(-1, keepdims=True)
        return (v - mu) / jnp.sqrt(var + eps) * g + b

    xn = ln(x, params["g1"][0], params["b1"][0])
    q = (xn @ params["wq_t"]).reshape(B, S, H, DpH).transpose(0, 2, 1, 3)
    k = (xn @ params["wk_t"]).reshape(B, S, H, DpH).transpose(0, 2, 3, 1)
    v = (xn @ params["wv_t"]).reshape(B, S, H, DpH).transpose(0, 2, 1, 3)
    s = (q @ k) / (DpH ** 0.5)
    mask = jnp.tril(jnp.ones((S, S)))[None, None]
    s = jnp.where(mask == 0, -jnp.inf, s)
    p = jax.nn.softmax(s, axis=-1)
    att = (p @ v).transpose(0, 2, 1, 3).reshape(B, S, D)
    x1 = att + x
    xn2 = ln(x1, params["g2"][0], params["b2"][0])
    h = jnp.maximum(xn2 @ params["w1_t"] + params["bf1"][0], 0.0)
    return h @ params["w2_t"] + params["bf2"][0] + x1


def init_params(key, D):
    ks = jax.random.split(key, 8)
    scale = 0.02
    return {
        # attention projection weights, stored pre-transposed: (in, out)
        "wq_t": jax.random.normal(ks[0], (D, D), jnp.float32) * scale,
        "wk_t": jax.random.normal(ks[1], (D, D), jnp.float32) * scale,
        "wv_t": jax.random.normal(ks[2], (D, D), jnp.float32) * scale,
        # layernorm affine params, kept 2D (1, D) for TPU-friendly layout
        "g1": jnp.ones((1, D), jnp.float32),
        "b1": jnp.zeros((1, D), jnp.float32),
        "g2": jnp.ones((1, D), jnp.float32),
        "b2": jnp.zeros((1, D), jnp.float32),
        # feed-forward, pre-transposed: (D, 4D) and (4D, D)
        "w1_t": jax.random.normal(ks[3], (D, 4 * D), jnp.float32) * scale,
        "bf1": jax.random.normal(ks[4], (1, 4 * D), jnp.float32) * scale,
        "w2_t": jax.random.normal(ks[5], (4 * D, D), jnp.float32) * scale,
        "bf2": jax.random.normal(ks[6], (1, D), jnp.float32) * scale,
    }


if __name__ == "__main__":
    # small shapes, but chosen so the query-tile axis (NQ=2 -> exercises the
    # incremental K/V cache and the causal-skip KV loop) and the fused-MLP
    # chunk loop (NFF=2) are both exercised.
    B, S, D, H = 2, 16, 64, 4
    key = jax.random.PRNGKey(0)
    kx, kp = jax.random.split(key)
    x = jax.random.normal(kx, (B, S, D), jnp.float32)
    params = init_params(kp, D)

    out = gpt_block(x, params, H, q_tile=8, ff_chunk=128)
    out = jax.block_until_ready(out)

    ref = gpt_block_ref(x, params, H)
    assert out.shape == (B, S, D)
    err = jnp.max(jnp.abs(out - ref))
    # bf16 MXU operands + approx reciprocal => compare against f32 ref loosely
    assert jnp.allclose(out, ref, atol=2e-2, rtol=2e-2), f"mismatch vs ref, max abs err={err}"

    print("KERNEL_OK")
</pallas_src>

<mosaic_0001>
module attributes {stable_mosaic.version = 11 : i64} {
  func.func @gpt_block_kernel(%arg0: i32, %arg1: i32, %arg2: memref<1x8x64xf32, #tpu.memory_space<vmem>>, %arg3: memref<64x64xbf16, #tpu.memory_space<vmem>>, %arg4: memref<64x64xbf16, #tpu.memory_space<vmem>>, %arg5: memref<64x64xbf16, #tpu.memory_space<vmem>>, %arg6: memref<1x64xf32, #tpu.memory_space<vmem>>, %arg7: memref<1x64xf32, #tpu.memory_space<vmem>>, %arg8: memref<1x64xf32, #tpu.memory_space<vmem>>, %arg9: memref<1x64xf32, #tpu.memory_space<vmem>>, %arg10: memref<2x64x128xbf16, #tpu.memory_space<vmem>>, %arg11: memref<2x1x128xf32, #tpu.memory_space<vmem>>, %arg12: memref<2x128x64xbf16, #tpu.memory_space<vmem>>, %arg13: memref<1x64xf32, #tpu.memory_space<vmem>>, %arg14: memref<1x8x64xf32, #tpu.memory_space<vmem>>, %arg15: memref<2x4x8x16xbf16, #tpu.memory_space<vmem>>, %arg16: memref<2x4x8x16xbf16, #tpu.memory_space<vmem>>, %arg17: memref<4x8x1xf32, #tpu.memory_space<vmem>>, %arg18: memref<4x8x1xf32, #tpu.memory_space<vmem>>, %arg19: memref<4x8x16xf32, #tpu.memory_space<vmem>>) attributes {dimension_semantics = [#tpu.dimension_semantics<parallel>, #tpu.dimension_semantics<arbitrary>], iteration_bounds = array<i64: 2, 2>, scalar_prefetch = 0 : i64, scratch_operands = 5 : i64, tpu.core_type = #tpu.core_type<tc>, window_params = [{transform_indices = @transform_0, window_bounds = array<i64: 1, 8, 64>}, {pipeline_mode = #tpu.pipeline_mode<synchronous>, transform_indices = @transform_1, window_bounds = array<i64: 64, 64>}, {pipeline_mode = #tpu.pipeline_mode<synchronous>, transform_indices = @transform_2, window_bounds = array<i64: 64, 64>}, {pipeline_mode = #tpu.pipeline_mode<synchronous>, transform_indices = @transform_3, window_bounds = array<i64: 64, 64>}, {pipeline_mode = #tpu.pipeline_mode<synchronous>, transform_indices = @transform_4, window_bounds = array<i64: 1, 64>}, {pipeline_mode = #tpu.pipeline_mode<synchronous>, transform_indices = @transform_5, window_bounds = array<i64: 1, 64>}, {pipeline_mode = #tpu.pipeline_mode<synchronous>, transform_indices = @transform_6, window_bounds = array<i64: 1, 64>}, {pipeline_mode = #tpu.pipeline_mode<synchronous>, transform_indices = @transform_7, window_bounds = array<i64: 1, 64>}, {pipeline_mode = #tpu.pipeline_mode<synchronous>, transform_indices = @transform_8, window_bounds = array<i64: 2, 64, 128>}, {pipeline_mode = #tpu.pipeline_mode<synchronous>, transform_indices = @transform_9, window_bounds = array<i64: 2, 1, 128>}, {pipeline_mode = #tpu.pipeline_mode<synchronous>, transform_indices = @transform_10, window_bounds = array<i64: 2, 128, 64>}, {pipeline_mode = #tpu.pipeline_mode<synchronous>, transform_indices = @transform_11, window_bounds = array<i64: 1, 64>}, {transform_indices = @transform_12, window_bounds = array<i64: 1, 8, 64>}]} {
    %c0 = arith.constant 0 : index
    %c0_0 = arith.constant 0 : index
    %c0_1 = arith.constant 0 : index
    %0 = vector.load %arg2[%c0, %c0_0, %c0_1] : memref<1x8x64xf32, #tpu.memory_space<vmem>>, vector<1x8x64xf32>
    %1 = vector.shape_cast %0 : vector<1x8x64xf32> to vector<8x64xf32>
    %c0_2 = arith.constant 0 : index
    %c0_3 = arith.constant 0 : index
    %2 = vector.load %arg6[%c0_2, %c0_3] : memref<1x64xf32, #tpu.memory_space<vmem>>, vector<1x64xf32>
    %c0_4 = arith.constant 0 : index
    %c0_5 = arith.constant 0 : index
    %3 = vector.load %arg7[%c0_4, %c0_5] : memref<1x64xf32, #tpu.memory_space<vmem>>, vector<1x64xf32>
    %cst = arith.constant dense<0.000000e+00> : vector<8xf32>
    %4 = vector.multi_reduction <add>, %1, %cst [1] : vector<8x64xf32> to vector<8xf32>
    %5 = vector.shape_cast %4 : vector<8xf32> to vector<8x1xf32>
    %cst_6 = arith.constant 6.400000e+01 : f32
    %6 = vector.broadcast %cst_6 : f32 to vector<8x1xf32>
    %7 = arith.divf %5, %6 : vector<8x1xf32>
    %8 = vector.broadcast %7 : vector<8x1xf32> to vector<8x64xf32>
    %9 = arith.subf %1, %8 : vector<8x64xf32>
    %10 = arith.mulf %9, %9 : vector<8x64xf32>
    %cst_7 = arith.constant dense<0.000000e+00> : vector<8xf32>
    %11 = vector.multi_reduction <add>, %10, %cst_7 [1] : vector<8x64xf32> to vector<8xf32>
    %12 = vector.shape_cast %11 : vector<8xf32> to vector<8x1xf32>
    %cst_8 = arith.constant 6.400000e+01 : f32
    %13 = vector.broadcast %cst_8 : f32 to vector<8x1xf32>
    %14 = arith.divf %12, %13 : vector<8x1xf32>
    %15 = vector.broadcast %7 : vector<8x1xf32> to vector<8x64xf32>
    %16 = arith.subf %1, %15 : vector<8x64xf32>
    %cst_9 = arith.constant 9.99999974E-6 : f32
    %17 = vector.broadcast %cst_9 : f32 to vector<8x1xf32>
    %18 = arith.addf %14, %17 : vector<8x1xf32>
    %19 = math.rsqrt %18 : vector<8x1xf32>
    %20 = vector.broadcast %19 : vector<8x1xf32> to vector<8x64xf32>
    %21 = arith.mulf %16, %20 : vector<8x64xf32>
    %22 = vector.broadcast %2 : vector<1x64xf32> to vector<8x64xf32>
    %23 = arith.mulf %21, %22 : vector<8x64xf32>
    %24 = vector.broadcast %3 : vector<1x64xf32> to vector<8x64xf32>
    %25 = arith.addf %23, %24 : vector<8x64xf32>
    %26 = arith.truncf %25 : vector<8x64xf32> to vector<8x64xbf16>
    %c0_10 = arith.constant 0 : index
    %c0_11 = arith.constant 0 : index
    %27 = vector.load %arg3[%c0_10, %c0_11] : memref<64x64xbf16, #tpu.memory_space<vmem>>, vector<64x64xbf16>
    %cst_12 = arith.constant dense<0.000000e+00> : vector<8x64xf32>
    %28 = tpu.matmul %26, %27, %cst_12 {dimension_numbers = #tpu.dot_dimension_numbers<[1], [0], [0], [1], [0, 0, 1, 1], [], []>} : vector<8x64xbf16>, vector<64x64xbf16>, vector<8x64xf32> -> vector<8x64xf32>
    %cst_13 = arith.constant 2.500000e-01 : f32
    %29 = vector.broadcast %cst_13 : f32 to vector<8x64xf32>
    %30 = arith.mulf %28, %29 : vector<8x64xf32>
    %c0_14 = arith.constant 0 : index
    %c0_15 = arith.constant 0 : index
    %31 = vector.load %arg4[%c0_14, %c0_15] : memref<64x64xbf16, #tpu.memory_space<vmem>>, vector<64x64xbf16>
    %cst_16 = arith.constant dense<0.000000e+00> : vector<8x64xf32>
    %32 = tpu.matmul %26, %31, %cst_16 {dimension_numbers = #tpu.dot_dimension_numbers<[1], [0], [0], [1], [0, 0, 1, 1], [], []>} : vector<8x64xbf16>, vector<64x64xbf16>, vector<8x64xf32> -> vector<8x64xf32>
    %c0_17 = arith.constant 0 : index
    %c0_18 = arith.constant 0 : index
    %33 = vector.load %arg5[%c0_17, %c0_18] : memref<64x64xbf16, #tpu.memory_space<vmem>>, vector<64x64xbf16>
    %cst_19 = arith.constant dense<0.000000e+00> : vector<8x64xf32>
    %34 = tpu.matmul %26, %33, %cst_19 {dimension_numbers = #tpu.dot_dimension_numbers<[1], [0], [0], [1], [0, 0, 1, 1], [], []>} : vector<8x64xbf16>, vector<64x64xbf16>, vector<8x64xf32> -> vector<8x64xf32>
    %35 = vector.shape_cast %30 : vector<8x64xf32> to vector<8x4x16xf32>
    %36 = tpu.transpose %35, [1, 0, 2] : vector<8x4x16xf32> -> vector<4x8x16xf32>
    %37 = arith.truncf %36 : vector<4x8x16xf32> to vector<4x8x16xbf16>
    %38 = vector.shape_cast %32 : vector<8x64xf32> to vector<8x4x16xf32>
    %39 = tpu.transpose %38, [1, 0, 2] : vector<8x4x16xf32> -> vector<4x8x16xf32>
    %40 = arith.truncf %39 : vector<4x8x16xf32> to vector<4x8x16xbf16>
    %41 = vector.shape_cast %34 : vector<8x64xf32> to vector<8x4x16xf32>
    %42 = tpu.transpose %41, [1, 0, 2] : vector<8x4x16xf32> -> vector<4x8x16xf32>
    %43 = arith.truncf %42 : vector<4x8x16xf32> to vector<4x8x16xbf16>
    %44 = arith.index_cast %arg1 : i32 to index
    %c0_20 = arith.constant 0 : index
    %c0_21 = arith.constant 0 : index
    %c0_22 = arith.constant 0 : index
    %45 = vector.load %arg15[%44, %c0_20, %c0_21, %c0_22] : memref<2x4x8x16xbf16, #tpu.memory_space<vmem>>, vector<1x4x8x16xbf16>
    %46 = vector.shape_cast %45 : vector<1x4x8x16xbf16> to vector<4x8x16xbf16>
    %47 = vector.shape_cast %40 : vector<4x8x16xbf16> to vector<1x4x8x16xbf16>
    tpu.vector_store %arg15[%44, %c0_20, %c0_21, %c0_22], %47 {strides = array<i32>} : memref<2x4x8x16xbf16, #tpu.memory_space<vmem>>, vector<1x4x8x16xbf16>,
    %48 = arith.index_cast %arg1 : i32 to index
    %c0_23 = arith.constant 0 : index
    %c0_24 = arith.constant 0 : index
    %c0_25 = arith.constant 0 : index
    %49 = vector.load %arg16[%48, %c0_23, %c0_24, %c0_25] : memref<2x4x8x16xbf16, #tpu.memory_space<vmem>>, vector<1x4x8x16xbf16>
    %50 = vector.shape_cast %49 : vector<1x4x8x16xbf16> to vector<4x8x16xbf16>
    %51 = vector.shape_cast %43 : vector<4x8x16xbf16> to vector<1x4x8x16xbf16>
    tpu.vector_store %arg16[%48, %c0_23, %c0_24, %c0_25], %51 {strides = array<i32>} : memref<2x4x8x16xbf16, #tpu.memory_space<vmem>>, vector<1x4x8x16xbf16>,
    %cst_26 = arith.constant -1.000000e+30 : f32
    %52 = vector.broadcast %cst_26 : f32 to vector<4x8x1xf32>
    %c0_27 = arith.constant 0 : index
    %c0_28 = arith.constant 0 : index
    %c0_29 = arith.constant 0 : index
    %53 = vector.load %arg17[%c0_27, %c0_28, %c0_29] : memref<4x8x1xf32, #tpu.memory_space<vmem>>, vector<4x8x1xf32>
    tpu.vector_store %arg17[%c0_27, %c0_28, %c0_29], %52 {strides = array<i32>} : memref<4x8x1xf32, #tpu.memory_space<vmem>>, vector<4x8x1xf32>,
    %cst_30 = arith.constant 0.000000e+00 : f32
    %54 = vector.broadcast %cst_30 : f32 to vector<4x8x1xf32>
    %c0_31 = arith.constant 0 : index
    %c0_32 = arith.constant 0 : index
    %c0_33 = arith.constant 0 : index
    %55 = vector.load %arg18[%c0_31, %c0_32, %c0_33] : memref<4x8x1xf32, #tpu.memory_space<vmem>>, vector<4x8x1xf32>
    tpu.vector_store %arg18[%c0_31, %c0_32, %c0_33], %54 {strides = array<i32>} : memref<4x8x1xf32, #tpu.memory_space<vmem>>, vector<4x8x1xf32>,
    %cst_34 = arith.constant 0.000000e+00 : f32
    %56 = vector.broadcast %cst_34 : f32 to vector<4x8x16xf32>
    %c0_35 = arith.constant 0 : index
    %c0_36 = arith.constant 0 : index
    %c0_37 = arith.constant 0 : index
    %57 = vector.load %arg19[%c0_35, %c0_36, %c0_37] : memref<4x8x16xf32, #tpu.memory_space<vmem>>, vector<4x8x16xf32>
    tpu.vector_store %arg19[%c0_35, %c0_36, %c0_37], %56 {strides = array<i32>} : memref<4x8x16xf32, #tpu.memory_space<vmem>>, vector<4x8x16xf32>,
    %c0_i32 = arith.constant 0 : i32
    %58 = arith.subi %arg1, %c0_i32 : i32
    %c1_i32 = arith.constant 1 : i32
    %c1_i32_38 = arith.constant 1 : i32
    %59 = arith.subi %c1_i32, %c1_i32_38 : i32
    %60 = arith.addi %58, %59 : i32
    %c1_i32_39 = arith.constant 1 : i32
    %61 = arith.divsi %60, %c1_i32_39 : i32
    %c1_i32_40 = arith.constant 1 : i32
    %c0_i32_41 = arith.constant 0 : i32
    %c0_i32_42 = arith.constant 0 : i32
    %62 = arith.subi %61, %c0_i32_42 : i32
    %63 = arith.addi %c0_i32_42, %62 : i32
    %c1_i32_43 = arith.constant 1 : i32
    scf.for %arg20 = %c0_i32_42 to %63 step %c1_i32_43  : i32 {
      %166 = arith.muli %arg20, %c1_i32_40 : i32
      %167 = arith.addi %c0_i32_41, %166 : i32
      %168 = arith.index_cast %167 : i32 to index
      %c0_93 = arith.constant 0 : index
      %c0_94 = arith.constant 0 : index
      %c0_95 = arith.constant 0 : index
      %169 = vector.load %arg15[%168, %c0_93, %c0_94, %c0_95] : memref<2x4x8x16xbf16, #tpu.memory_space<vmem>>, vector<1x4x8x16xbf16>
      %170 = vector.shape_cast %169 : vector<1x4x8x16xbf16> to vector<4x8x16xbf16>
      %171 = arith.index_cast %167 : i32 to index
      %c0_96 = arith.constant 0 : index
      %c0_97 = arith.constant 0 : index
      %c0_98 = arith.constant 0 : index
      %172 = vector.load %arg16[%171, %c0_96, %c0_97, %c0_98] : memref<2x4x8x16xbf16, #tpu.memory_space<vmem>>, vector<1x4x8x16xbf16>
      %173 = vector.shape_cast %172 : vector<1x4x8x16xbf16> to vector<4x8x16xbf16>
      "tpu.trace_start"() <{level = 10 : i32, message = "hqd,hkd->hqk"}> : () -> ()
      %cst_99 = arith.constant dense<0.000000e+00> : vector<4x8x8xf32>
      %174 = tpu.matmul %37, %170, %cst_99 {dimension_numbers = #tpu.dot_dimension_numbers<[2], [2], [1], [1], [0, 0, 0, 1, 1, 1], [0], [0]>} : vector<4x8x16xbf16>, vector<4x8x16xbf16>, vector<4x8x8xf32> -> vector<4x8x8xf32>
      "tpu.trace_stop"() : () -> ()
      %c0_100 = arith.constant 0 : index
      %c0_101 = arith.constant 0 : index
      %c0_102 = arith.constant 0 : index
      %175 = vector.load %arg17[%c0_100, %c0_101, %c0_102] : memref<4x8x1xf32, #tpu.memory_space<vmem>>, vector<4x8x1xf32>
      %cst_103 = arith.constant dense<0xFF800000> : vector<4x8xf32>
      %176 = vector.multi_reduction <maximumf>, %174, %cst_103 [2] : vector<4x8x8xf32> to vector<4x8xf32>
      %177 = vector.shape_cast %176 : vector<4x8xf32> to vector<4x8x1xf32>
      %178 = arith.maximumf %175, %177 : vector<4x8x1xf32>
      %179 = arith.subf %175, %178 : vector<4x8x1xf32>
      %180 = math.exp %179 : vector<4x8x1xf32>
      %181 = vector.broadcast %178 : vector<4x8x1xf32> to vector<4x8x8xf32>
      %182 = arith.subf %174, %181 : vector<4x8x8xf32>
      %183 = math.exp %182 : vector<4x8x8xf32>
      %c0_104 = arith.constant 0 : index
      %c0_105 = arith.constant 0 : index
      %c0_106 = arith.constant 0 : index
      %184 = vector.load %arg18[%c0_104, %c0_105, %c0_106] : memref<4x8x1xf32, #tpu.memory_space<vmem>>, vector<4x8x1xf32>
      %185 = arith.mulf %180, %184 : vector<4x8x1xf32>
      %cst_107 = arith.constant dense<0.000000e+00> : vector<4x8xf32>
      %186 = vector.multi_reduction <add>, %183, %cst_107 [2] : vector<4x8x8xf32> to vector<4x8xf32>
      %187 = vector.shape_cast %186 : vector<4x8xf32> to vector<4x8x1xf32>
      %188 = arith.addf %185, %187 : vector<4x8x1xf32>
      %c0_108 = arith.constant 0 : index
      %c0_109 = arith.constant 0 : index
      %c0_110 = arith.constant 0 : index
      %189 = vector.load %arg18[%c0_108, %c0_109, %c0_110] : memref<4x8x1xf32, #tpu.memory_space<vmem>>, vector<4x8x1xf32>
      tpu.vector_store %arg18[%c0_108, %c0_109, %c0_110], %188 {strides = array<i32>} : memref<4x8x1xf32, #tpu.memory_space<vmem>>, vector<4x8x1xf32>,
      %c0_111 = arith.constant 0 : index
      %c0_112 = arith.constant 0 : index
      %c0_113 = arith.constant 0 : index
      %190 = vector.load %arg19[%c0_111, %c0_112, %c0_113] : memref<4x8x16xf32, #tpu.memory_space<vmem>>, vector<4x8x16xf32>
      %191 = vector.broadcast %180 : vector<4x8x1xf32> to vector<4x8x16xf32>
      %192 = arith.mulf %191, %190 : vector<4x8x16xf32>
      %193 = arith.truncf %183 : vector<4x8x8xf32> to vector<4x8x8xbf16>
      "tpu.trace_start"() <{level = 10 : i32, message = "hqk,hkd->hqd"}> : () -> ()
      %cst_114 = arith.constant dense<0.000000e+00> : vector<4x8x16xf32>
      %194 = tpu.matmul %193, %173, %cst_114 {dimension_numbers = #tpu.dot_dimension_numbers<[2], [1], [1], [2], [0, 0, 0, 1, 1, 2], [0], [0]>} : vector<4x8x8xbf16>, vector<4x8x16xbf16>, vector<4x8x16xf32> -> vector<4x8x16xf32>
      "tpu.trace_stop"() : () -> ()
      %195 = arith.addf %192, %194 : vector<4x8x16xf32>
      %c0_115 = arith.constant 0 : index
      %c0_116 = arith.constant 0 : index
      %c0_117 = arith.constant 0 : index
      %196 = vector.load %arg19[%c0_115, %c0_116, %c0_117] : memref<4x8x16xf32, #tpu.memory_space<vmem>>, vector<4x8x16xf32>
      tpu.vector_store %arg19[%c0_115, %c0_116, %c0_117], %195 {strides = array<i32>} : memref<4x8x16xf32, #tpu.memory_space<vmem>>, vector<4x8x16xf32>,
      %c0_118 = arith.constant 0 : index
      %c0_119 = arith.constant 0 : index
      %c0_120 = arith.constant 0 : index
      %197 = vector.load %arg17[%c0_118, %c0_119, %c0_120] : memref<4x8x1xf32, #tpu.memory_space<vmem>>, vector<4x8x1xf32>
      tpu.vector_store %arg17[%c0_118, %c0_119, %c0_120], %178 {strides = array<i32>} : memref<4x8x1xf32, #tpu.memory_space<vmem>>, vector<4x8x1xf32>,
    }
    "tpu.trace_start"() <{level = 10 : i32, message = "hqd,hkd->hqk"}> : () -> ()
    %cst_44 = arith.constant dense<0.000000e+00> : vector<4x8x8xf32>
    %64 = tpu.matmul %37, %40, %cst_44 {dimension_numbers = #tpu.dot_dimension_numbers<[2], [2], [1], [1], [0, 0, 0, 1, 1, 1], [0], [0]>} : vector<4x8x16xbf16>, vector<4x8x16xbf16>, vector<4x8x8xf32> -> vector<4x8x8xf32>
    "tpu.trace_stop"() : () -> ()
    %65 = tpu.iota {dimensions = array<i32: 0>} : vector<8x8xi32>
    %66 = tpu.iota {dimensions = array<i32: 1>} : vector<8x8xi32>
    %67 = arith.cmpi sge, %65, %66 : vector<8x8xi32>
    %68 = vector.shape_cast %67 : vector<8x8xi1> to vector<1x8x8xi1>
    %cst_45 = arith.constant -1.000000e+30 : f32
    %69 = vector.shape_cast %68 : vector<1x8x8xi1> to vector<1x8x8xi1>
    %70 = vector.broadcast %69 : vector<1x8x8xi1> to vector<4x8x8xi1>
    %71 = vector.broadcast %cst_45 : f32 to vector<4x8x8xf32>
    %72 = arith.select %70, %64, %71 : vector<4x8x8xi1>, vector<4x8x8xf32>
    %c0_46 = arith.constant 0 : index
    %c0_47 = arith.constant 0 : index
    %c0_48 = arith.constant 0 : index
    %73 = vector.load %arg17[%c0_46, %c0_47, %c0_48] : memref<4x8x1xf32, #tpu.memory_space<vmem>>, vector<4x8x1xf32>
    %cst_49 = arith.constant dense<0xFF800000> : vector<4x8xf32>
    %74 = vector.multi_reduction <maximumf>, %72, %cst_49 [2] : vector<4x8x8xf32> to vector<4x8xf32>
    %75 = vector.shape_cast %74 : vector<4x8xf32> to vector<4x8x1xf32>
    %76 = arith.maximumf %73, %75 : vector<4x8x1xf32>
    %77 = arith.subf %73, %76 : vector<4x8x1xf32>
    %78 = math.exp %77 : vector<4x8x1xf32>
    %79 = vector.broadcast %76 : vector<4x8x1xf32> to vector<4x8x8xf32>
    %80 = arith.subf %72, %79 : vector<4x8x8xf32>
    %81 = math.exp %80 : vector<4x8x8xf32>
    %c0_50 = arith.constant 0 : index
    %c0_51 = arith.constant 0 : index
    %c0_52 = arith.constant 0 : index
    %82 = vector.load %arg18[%c0_50, %c0_51, %c0_52] : memref<4x8x1xf32, #tpu.memory_space<vmem>>, vector<4x8x1xf32>
    %83 = arith.mulf %78, %82 : vector<4x8x1xf32>
    %cst_53 = arith.constant dense<0.000000e+00> : vector<4x8xf32>
    %84 = vector.multi_reduction <add>, %81, %cst_53 [2] : vector<4x8x8xf32> to vector<4x8xf32>
    %85 = vector.shape_cast %84 : vector<4x8xf32> to vector<4x8x1xf32>
    %86 = arith.addf %83, %85 : vector<4x8x1xf32>
    %c0_54 = arith.constant 0 : index
    %c0_55 = arith.constant 0 : index
    %c0_56 = arith.constant 0 : index
    %87 = vector.load %arg19[%c0_54, %c0_55, %c0_56] : memref<4x8x16xf32, #tpu.memory_space<vmem>>, vector<4x8x16xf32>
    %88 = vector.broadcast %78 : vector<4x8x1xf32> to vector<4x8x16xf32>
    %89 = arith.mulf %88, %87 : vector<4x8x16xf32>
    %90 = arith.truncf %81 : vector<4x8x8xf32> to vector<4x8x8xbf16>
    "tpu.trace_start"() <{level = 10 : i32, message = "hqk,hkd->hqd"}> : () -> ()
    %cst_57 = arith.constant dense<0.000000e+00> : vector<4x8x16xf32>
    %91 = tpu.matmul %90, %43, %cst_57 {dimension_numbers = #tpu.dot_dimension_numbers<[2], [1], [1], [2], [0, 0, 0, 1, 1, 2], [0], [0]>} : vector<4x8x8xbf16>, vector<4x8x16xbf16>, vector<4x8x16xf32> -> vector<4x8x16xf32>
    "tpu.trace_stop"() : () -> ()
    %92 = arith.addf %89, %91 : vector<4x8x16xf32>
    %93 = tpu.reciprocal %86 {approx = true} : vector<4x8x1xf32> -> vector<4x8x1xf32>
    %94 = vector.broadcast %93 : vector<4x8x1xf32> to vector<4x8x16xf32>
    %95 = arith.mulf %92, %94 : vector<4x8x16xf32>
    %96 = tpu.transpose %95, [1, 0, 2] : vector<4x8x16xf32> -> vector<8x4x16xf32>
    %97 = vector.shape_cast %96 : vector<8x4x16xf32> to vector<8x64xf32>
    %98 = arith.addf %97, %1 : vector<8x64xf32>
    %c0_58 = arith.constant 0 : index
    %c0_59 = arith.constant 0 : index
    %99 = vector.load %arg8[%c0_58, %c0_59] : memref<1x64xf32, #tpu.memory_space<vmem>>, vector<1x64xf32>
    %c0_60 = arith.constant 0 : index
    %c0_61 = arith.constant 0 : index
    %100 = vector.load %arg9[%c0_60, %c0_61] : memref<1x64xf32, #tpu.memory_space<vmem>>, vector<1x64xf32>
    %cst_62 = arith.constant dense<0.000000e+00> : vector<8xf32>
    %101 = vector.multi_reduction <add>, %98, %cst_62 [1] : vector<8x64xf32> to vector<8xf32>
    %102 = vector.shape_cast %101 : vector<8xf32> to vector<8x1xf32>
    %cst_63 = arith.constant 6.400000e+01 : f32
    %103 = vector.broadcast %cst_63 : f32 to vector<8x1xf32>
    %104 = arith.divf %102, %103 : vector<8x1xf32>
    %105 = vector.broadcast %104 : vector<8x1xf32> to vector<8x64xf32>
    %106 = arith.subf %98, %105 : vector<8x64xf32>
    %107 = arith.mulf %106, %106 : vector<8x64xf32>
    %cst_64 = arith.constant dense<0.000000e+00> : vector<8xf32>
    %108 = vector.multi_reduction <add>, %107, %cst_64 [1] : vector<8x64xf32> to vector<8xf32>
    %109 = vector.shape_cast %108 : vector<8xf32> to vector<8x1xf32>
    %cst_65 = arith.constant 6.400000e+01 : f32
    %110 = vector.broadcast %cst_65 : f32 to vector<8x1xf32>
    %111 = arith.divf %109, %110 : vector<8x1xf32>
    %112 = vector.broadcast %104 : vector<8x1xf32> to vector<8x64xf32>
    %113 = arith.subf %98, %112 : vector<8x64xf32>
    %cst_66 = arith.constant 9.99999974E-6 : f32
    %114 = vector.broadcast %cst_66 : f32 to vector<8x1xf32>
    %115 = arith.addf %111, %114 : vector<8x1xf32>
    %116 = math.rsqrt %115 : vector<8x1xf32>
    %117 = vector.broadcast %116 : vector<8x1xf32> to vector<8x64xf32>
    %118 = arith.mulf %113, %117 : vector<8x64xf32>
    %119 = vector.broadcast %99 : vector<1x64xf32> to vector<8x64xf32>
    %120 = arith.mulf %118, %119 : vector<8x64xf32>
    %121 = vector.broadcast %100 : vector<1x64xf32> to vector<8x64xf32>
    %122 = arith.addf %120, %121 : vector<8x64xf32>
    %123 = arith.truncf %122 : vector<8x64xf32> to vector<8x64xbf16>
    %cst_67 = arith.constant 0.000000e+00 : f32
    %124 = vector.broadcast %cst_67 : f32 to vector<8x64xf32>
    %c0_i32_68 = arith.constant 0 : i32
    %125 = arith.index_cast %c0_i32_68 : i32 to index
    %c0_69 = arith.constant 0 : index
    %c0_70 = arith.constant 0 : index
    %126 = vector.load %arg10[%125, %c0_69, %c0_70] : memref<2x64x128xbf16, #tpu.memory_space<vmem>>, vector<1x64x128xbf16>
    %127 = vector.shape_cast %126 : vector<1x64x128xbf16> to vector<64x128xbf16>
    %cst_71 = arith.constant dense<0.000000e+00> : vector<8x128xf32>
    %128 = tpu.matmul %123, %127, %cst_71 {dimension_numbers = #tpu.dot_dimension_numbers<[1], [0], [0], [1], [0, 0, 1, 1], [], []>} : vector<8x64xbf16>, vector<64x128xbf16>, vector<8x128xf32> -> vector<8x128xf32>
    %129 = arith.index_cast %c0_i32_68 : i32 to index
    %c0_72 = arith.constant 0 : index
    %c0_73 = arith.constant 0 : index
    %130 = vector.load %arg11[%129, %c0_72, %c0_73] : memref<2x1x128xf32, #tpu.memory_space<vmem>>, vector<1x1x128xf32>
    %131 = vector.shape_cast %130 : vector<1x1x128xf32> to vector<1x128xf32>
    %132 = vector.broadcast %131 : vector<1x128xf32> to vector<8x128xf32>
    %133 = arith.addf %128, %132 : vector<8x128xf32>
    %cst_74 = arith.constant 0.000000e+00 : f32
    %134 = vector.broadcast %cst_74 : f32 to vector<8x128xf32>
    %135 = arith.maximumf %133, %134 : vector<8x128xf32>
    %136 = arith.truncf %135 : vector<8x128xf32> to vector<8x128xbf16>
    %137 = arith.index_cast %c0_i32_68 : i32 to index
    %c0_75 = arith.constant 0 : index
    %c0_76 = arith.constant 0 : index
    %138 = vector.load %arg12[%137, %c0_75, %c0_76] : memref<2x128x64xbf16, #tpu.memory_space<vmem>>, vector<1x128x64xbf16>
    %139 = vector.shape_cast %138 : vector<1x128x64xbf16> to vector<128x64xbf16>
    %cst_77 = arith.constant dense<0.000000e+00> : vector<8x64xf32>
    %140 = tpu.matmul %136, %139, %cst_77 {dimension_numbers = #tpu.dot_dimension_numbers<[1], [0], [0], [1], [0, 0, 1, 1], [], []>} : vector<8x128xbf16>, vector<128x64xbf16>, vector<8x64xf32> -> vector<8x64xf32>
    %141 = arith.addf %124, %140 : vector<8x64xf32>
    %c1_i32_78 = arith.constant 1 : i32
    %142 = arith.index_cast %c1_i32_78 : i32 to index
    %c0_79 = arith.constant 0 : index
    %c0_80 = arith.constant 0 : index
    %143 = vector.load %arg10[%142, %c0_79, %c0_80] : memref<2x64x128xbf16, #tpu.memory_space<vmem>>, vector<1x64x128xbf16>
    %144 = vector.shape_cast %143 : vector<1x64x128xbf16> to vector<64x128xbf16>
    %cst_81 = arith.constant dense<0.000000e+00> : vector<8x128xf32>
    %145 = tpu.matmul %123, %144, %cst_81 {dimension_numbers = #tpu.dot_dimension_numbers<[1], [0], [0], [1], [0, 0, 1, 1], [], []>} : vector<8x64xbf16>, vector<64x128xbf16>, vector<8x128xf32> -> vector<8x128xf32>
    %146 = arith.index_cast %c1_i32_78 : i32 to index
    %c0_82 = arith.constant 0 : index
    %c0_83 = arith.constant 0 : index
    %147 = vector.load %arg11[%146, %c0_82, %c0_83] : memref<2x1x128xf32, #tpu.memory_space<vmem>>, vector<1x1x128xf32>
    %148 = vector.shape_cast %147 : vector<1x1x128xf32> to vector<1x128xf32>
    %149 = vector.broadcast %148 : vector<1x128xf32> to vector<8x128xf32>
    %150 = arith.addf %145, %149 : vector<8x128xf32>
    %cst_84 = arith.constant 0.000000e+00 : f32
    %151 = vector.broadcast %cst_84 : f32 to vector<8x128xf32>
    %152 = arith.maximumf %150, %151 : vector<8x128xf32>
    %153 = arith.truncf %152 : vector<8x128xf32> to vector<8x128xbf16>
    %154 = arith.index_cast %c1_i32_78 : i32 to index
    %c0_85 = arith.constant 0 : index
    %c0_86 = arith.constant 0 : index
    %155 = vector.load %arg12[%154, %c0_85, %c0_86] : memref<2x128x64xbf16, #tpu.memory_space<vmem>>, vector<1x128x64xbf16>
    %156 = vector.shape_cast %155 : vector<1x128x64xbf16> to vector<128x64xbf16>
    %cst_87 = arith.constant dense<0.000000e+00> : vector<8x64xf32>
    %157 = tpu.matmul %153, %156, %cst_87 {dimension_numbers = #tpu.dot_dimension_numbers<[1], [0], [0], [1], [0, 0, 1, 1], [], []>} : vector<8x128xbf16>, vector<128x64xbf16>, vector<8x64xf32> -> vector<8x64xf32>
    %158 = arith.addf %141, %157 : vector<8x64xf32>
    %c2_i32 = arith.constant 2 : i32
    %c0_88 = arith.constant 0 : index
    %c0_89 = arith.constant 0 : index
    %159 = vector.load %arg13[%c0_88, %c0_89] : memref<1x64xf32, #tpu.memory_space<vmem>>, vector<1x64xf32>
    %160 = vector.broadcast %159 : vector<1x64xf32> to vector<8x64xf32>
    %161 = arith.addf %158, %160 : vector<8x64xf32>
    %162 = arith.addf %161, %98 : vector<8x64xf32>
    %c0_90 = arith.constant 0 : index
    %c0_91 = arith.constant 0 : index
    %c0_92 = arith.constant 0 : index
    %163 = vector.load %arg14[%c0_90, %c0_91, %c0_92] : memref<1x8x64xf32, #tpu.memory_space<vmem>>, vector<1x8x64xf32>
    %164 = vector.shape_cast %163 : vector<1x8x64xf32> to vector<8x64xf32>
    %165 = vector.shape_cast %162 : vector<8x64xf32> to vector<1x8x64xf32>
    tpu.vector_store %arg14[%c0_90, %c0_91, %c0_92], %165 {strides = array<i32>} : memref<1x8x64xf32, #tpu.memory_space<vmem>>, vector<1x8x64xf32>,
    return
  }
  func.func @transform_0(%arg0: i32, %arg1: i32) -> (i32, i32, i32) {
    %c0_i32 = arith.constant 0 : i32
    %c0_i32_0 = arith.constant 0 : i32
    return %arg0, %arg1, %c0_i32 : i32, i32, i32
  }
  func.func @transform_1(%arg0: i32, %arg1: i32) -> (i32, i32) {
    %c0_i32 = arith.constant 0 : i32
    %c0_i32_0 = arith.constant 0 : i32
    %c0_i32_1 = arith.constant 0 : i32
    return %c0_i32, %c0_i32_0 : i32, i32
  }
  func.func @transform_2(%arg0: i32, %arg1: i32) -> (i32, i32) {
    %c0_i32 = arith.constant 0 : i32
    %c0_i32_0 = arith.constant 0 : i32
    %c0_i32_1 = arith.constant 0 : i32
    return %c0_i32, %c0_i32_0 : i32, i32
  }
  func.func @transform_3(%arg0: i32, %arg1: i32) -> (i32, i32) {
    %c0_i32 = arith.constant 0 : i32
    %c0_i32_0 = arith.constant 0 : i32
    %c0_i32_1 = arith.constant 0 : i32
    return %c0_i32, %c0_i32_0 : i32, i32
  }
  func.func @transform_4(%arg0: i32, %arg1: i32) -> (i32, i32) {
    %c0_i32 = arith.constant 0 : i32
    %c0_i32_0 = arith.constant 0 : i32
    %c0_i32_1 = arith.constant 0 : i32
    return %c0_i32, %c0_i32_0 : i32, i32
  }
  func.func @transform_5(%arg0: i32, %arg1: i32) -> (i32, i32) {
    %c0_i32 = arith.constant 0 : i32
    %c0_i32_0 = arith.constant 0 : i32
    %c0_i32_1 = arith.constant 0 : i32
    return %c0_i32, %c0_i32_0 : i32, i32
  }
  func.func @transform_6(%arg0: i32, %arg1: i32) -> (i32, i32) {
    %c0_i32 = arith.constant 0 : i32
    %c0_i32_0 = arith.constant 0 : i32
    %c0_i32_1 = arith.constant 0 : i32
    return %c0_i32, %c0_i32_0 : i32, i32
  }
  func.func @transform_7(%arg0: i32, %arg1: i32) -> (i32, i32) {
    %c0_i32 = arith.constant 0 : i32
    %c0_i32_0 = arith.constant 0 : i32
    %c0_i32_1 = arith.constant 0 : i32
    return %c0_i32, %c0_i32_0 : i32, i32
  }
  func.func @transform_8(%arg0: i32, %arg1: i32) -> (i32, i32, i32) {
    %c0_i32 = arith.constant 0 : i32
    %c0_i32_0 = arith.constant 0 : i32
    %c0_i32_1 = arith.constant 0 : i32
    %c0_i32_2 = arith.constant 0 : i32
    return %c0_i32, %c0_i32_0, %c0_i32_1 : i32, i32, i32
  }
  func.func @transform_9(%arg0: i32, %arg1: i32) -> (i32, i32, i32) {
    %c0_i32 = arith.constant 0 : i32
    %c0_i32_0 = arith.constant 0 : i32
    %c0_i32_1 = arith.constant 0 : i32
    %c0_i32_2 = arith.constant 0 : i32
    return %c0_i32, %c0_i32_0, %c0_i32_1 : i32, i32, i32
  }
  func.func @transform_10(%arg0: i32, %arg1: i32) -> (i32, i32, i32) {
    %c0_i32 = arith.constant 0 : i32
    %c0_i32_0 = arith.constant 0 : i32
    %c0_i32_1 = arith.constant 0 : i32
    %c0_i32_2 = arith.constant 0 : i32
    return %c0_i32, %c0_i32_0, %c0_i32_1 : i32, i32, i32
  }
  func.func @transform_11(%arg0: i32, %arg1: i32) -> (i32, i32) {
    %c0_i32 = arith.constant 0 : i32
    %c0_i32_0 = arith.constant 0 : i32
    %c0_i32_1 = arith.constant 0 : i32
    return %c0_i32, %c0_i32_0 : i32, i32
  }
  func.func @transform_12(%arg0: i32, %arg1: i32) -> (i32, i32, i32) {
    %c0_i32 = arith.constant 0 : i32
    %c0_i32_0 = arith.constant 0 : i32
    return %arg0, %arg1, %c0_i32 : i32, i32, i32
  }
}

module attributes {stable_mosaic.version = 11 : i64} {
  func.func @gpt_block_kernel(%arg0: i32, %arg1: i32, %arg2: memref<1x8x64xf32, #tpu.memory_space<vmem>>, %arg3: memref<64x64xbf16, #tpu.memory_space<vmem>>, %arg4: memref<64x64xbf16, #tpu.memory_space<vmem>>, %arg5: memref<64x64xbf16, #tpu.memory_space<vmem>>, %arg6: memref<1x64xf32, #tpu.memory_space<vmem>>, %arg7: memref<1x64xf32, #tpu.memory_space<vmem>>, %arg8: memref<1x64xf32, #tpu.memory_space<vmem>>, %arg9: memref<1x64xf32, #tpu.memory_space<vmem>>, %arg10: memref<2x64x128xbf16, #tpu.memory_space<vmem>>, %arg11: memref<2x1x128xf32, #tpu.memory_space<vmem>>, %arg12: memref<2x128x64xbf16, #tpu.memory_space<vmem>>, %arg13: memref<1x64xf32, #tpu.memory_space<vmem>>, %arg14: memref<1x8x64xf32, #tpu.memory_space<vmem>>, %arg15: memref<2x4x8x16xbf16, #tpu.memory_space<vmem>>, %arg16: memref<2x4x8x16xbf16, #tpu.memory_space<vmem>>, %arg17: memref<4x8x1xf32, #tpu.memory_space<vmem>>, %arg18: memref<4x8x1xf32, #tpu.memory_space<vmem>>, %arg19: memref<4x8x16xf32, #tpu.memory_space<vmem>>) attributes {dimension_semantics = [#tpu.dimension_semantics<parallel>, #tpu.dimension_semantics<arbitrary>], iteration_bounds = array<i64: 2, 2>, scalar_prefetch = 0 : i64, scratch_operands = 5 : i64, tpu.core_type = #tpu.core_type<tc>, window_params = [{transform_indices = @transform_0, window_bounds = array<i64: 1, 8, 64>}, {pipeline_mode = #tpu.pipeline_mode<synchronous>, transform_indices = @transform_1, window_bounds = array<i64: 64, 64>}, {pipeline_mode = #tpu.pipeline_mode<synchronous>, transform_indices = @transform_2, window_bounds = array<i64: 64, 64>}, {pipeline_mode = #tpu.pipeline_mode<synchronous>, transform_indices = @transform_3, window_bounds = array<i64: 64, 64>}, {pipeline_mode = #tpu.pipeline_mode<synchronous>, transform_indices = @transform_4, window_bounds = array<i64: 1, 64>}, {pipeline_mode = #tpu.pipeline_mode<synchronous>, transform_indices = @transform_5, window_bounds = array<i64: 1, 64>}, {pipeline_mode = #tpu.pipeline_mode<synchronous>, transform_indices = @transform_6, window_bounds = array<i64: 1, 64>}, {pipeline_mode = #tpu.pipeline_mode<synchronous>, transform_indices = @transform_7, window_bounds = array<i64: 1, 64>}, {pipeline_mode = #tpu.pipeline_mode<synchronous>, transform_indices = @transform_8, window_bounds = array<i64: 2, 64, 128>}, {pipeline_mode = #tpu.pipeline_mode<synchronous>, transform_indices = @transform_9, window_bounds = array<i64: 2, 1, 128>}, {pipeline_mode = #tpu.pipeline_mode<synchronous>, transform_indices = @transform_10, window_bounds = array<i64: 2, 128, 64>}, {pipeline_mode = #tpu.pipeline_mode<synchronous>, transform_indices = @transform_11, window_bounds = array<i64: 1, 64>}, {transform_indices = @transform_12, window_bounds = array<i64: 1, 8, 64>}]} {
    %c0 = arith.constant 0 : index
    %c0_0 = arith.constant 0 : index
    %c0_1 = arith.constant 0 : index
    %0 = vector.load %arg2[%c0, %c0_0, %c0_1] : memref<1x8x64xf32, #tpu.memory_space<vmem>>, vector<1x8x64xf32>
    %1 = vector.shape_cast %0 : vector<1x8x64xf32> to vector<8x64xf32>
    %c0_2 = arith.constant 0 : index
    %c0_3 = arith.constant 0 : index
    %2 = vector.load %arg6[%c0_2, %c0_3] : memref<1x64xf32, #tpu.memory_space<vmem>>, vector<1x64xf32>
    %c0_4 = arith.constant 0 : index
    %c0_5 = arith.constant 0 : index
    %3 = vector.load %arg7[%c0_4, %c0_5] : memref<1x64xf32, #tpu.memory_space<vmem>>, vector<1x64xf32>
    %cst = arith.constant dense<0.000000e+00> : vector<8xf32>
    %4 = vector.multi_reduction <add>, %1, %cst [1] : vector<8x64xf32> to vector<8xf32>
    %5 = vector.shape_cast %4 : vector<8xf32> to vector<8x1xf32>
    %cst_6 = arith.constant 6.400000e+01 : f32
    %6 = vector.broadcast %cst_6 : f32 to vector<8x1xf32>
    %7 = arith.divf %5, %6 : vector<8x1xf32>
    %8 = vector.broadcast %7 : vector<8x1xf32> to vector<8x64xf32>
    %9 = arith.subf %1, %8 : vector<8x64xf32>
    %10 = arith.mulf %9, %9 : vector<8x64xf32>
    %cst_7 = arith.constant dense<0.000000e+00> : vector<8xf32>
    %11 = vector.multi_reduction <add>, %10, %cst_7 [1] : vector<8x64xf32> to vector<8xf32>
    %12 = vector.shape_cast %11 : vector<8xf32> to vector<8x1xf32>
    %cst_8 = arith.constant 6.400000e+01 : f32
    %13 = vector.broadcast %cst_8 : f32 to vector<8x1xf32>
    %14 = arith.divf %12, %13 : vector<8x1xf32>
    %15 = vector.broadcast %7 : vector<8x1xf32> to vector<8x64xf32>
    %16 = arith.subf %1, %15 : vector<8x64xf32>
    %cst_9 = arith.constant 9.99999974E-6 : f32
    %17 = vector.broadcast %cst_9 : f32 to vector<8x1xf32>
    %18 = arith.addf %14, %17 : vector<8x1xf32>
    %19 = math.rsqrt %18 : vector<8x1xf32>
    %20 = vector.broadcast %19 : vector<8x1xf32> to vector<8x64xf32>
    %21 = arith.mulf %16, %20 : vector<8x64xf32>
    %22 = vector.broadcast %2 : vector<1x64xf32> to vector<8x64xf32>
    %23 = arith.mulf %21, %22 : vector<8x64xf32>
    %24 = vector.broadcast %3 : vector<1x64xf32> to vector<8x64xf32>
    %25 = arith.addf %23, %24 : vector<8x64xf32>
    %26 = arith.truncf %25 : vector<8x64xf32> to vector<8x64xbf16>
    %c0_10 = arith.constant 0 : index
    %c0_11 = arith.constant 0 : index
    %27 = vector.load %arg3[%c0_10, %c0_11] : memref<64x64xbf16, #tpu.memory_space<vmem>>, vector<64x64xbf16>
    %cst_12 = arith.constant dense<0.000000e+00> : vector<8x64xf32>
    %28 = tpu.matmul %26, %27, %cst_12 {dimension_numbers = #tpu.dot_dimension_numbers<[1], [0], [0], [1], [0, 0, 1, 1], [], []>} : vector<8x64xbf16>, vector<64x64xbf16>, vector<8x64xf32> -> vector<8x64xf32>
    %cst_13 = arith.constant 2.500000e-01 : f32
    %29 = vector.broadcast %cst_13 : f32 to vector<8x64xf32>
    %30 = arith.mulf %28, %29 : vector<8x64xf32>
    %c0_14 = arith.constant 0 : index
    %c0_15 = arith.constant 0 : index
    %31 = vector.load %arg4[%c0_14, %c0_15] : memref<64x64xbf16, #tpu.memory_space<vmem>>, vector<64x64xbf16>
    %cst_16 = arith.constant dense<0.000000e+00> : vector<8x64xf32>
    %32 = tpu.matmul %26, %31, %cst_16 {dimension_numbers = #tpu.dot_dimension_numbers<[1], [0], [0], [1], [0, 0, 1, 1], [], []>} : vector<8x64xbf16>, vector<64x64xbf16>, vector<8x64xf32> -> vector<8x64xf32>
    %c0_17 = arith.constant 0 : index
    %c0_18 = arith.constant 0 : index
    %33 = vector.load %arg5[%c0_17, %c0_18] : memref<64x64xbf16, #tpu.memory_space<vmem>>, vector<64x64xbf16>
    %cst_19 = arith.constant dense<0.000000e+00> : vector<8x64xf32>
    %34 = tpu.matmul %26, %33, %cst_19 {dimension_numbers = #tpu.dot_dimension_numbers<[1], [0], [0], [1], [0, 0, 1, 1], [], []>} : vector<8x64xbf16>, vector<64x64xbf16>, vector<8x64xf32> -> vector<8x64xf32>
    %35 = vector.shape_cast %30 : vector<8x64xf32> to vector<8x4x16xf32>
    %36 = tpu.transpose %35, [1, 0, 2] : vector<8x4x16xf32> -> vector<4x8x16xf32>
    %37 = arith.truncf %36 : vector<4x8x16xf32> to vector<4x8x16xbf16>
    %38 = vector.shape_cast %32 : vector<8x64xf32> to vector<8x4x16xf32>
    %39 = tpu.transpose %38, [1, 0, 2] : vector<8x4x16xf32> -> vector<4x8x16xf32>
    %40 = arith.truncf %39 : vector<4x8x16xf32> to vector<4x8x16xbf16>
    %41 = vector.shape_cast %34 : vector<8x64xf32> to vector<8x4x16xf32>
    %42 = tpu.transpose %41, [1, 0, 2] : vector<8x4x16xf32> -> vector<4x8x16xf32>
    %43 = arith.truncf %42 : vector<4x8x16xf32> to vector<4x8x16xbf16>
    %44 = arith.index_cast %arg1 : i32 to index
    %c0_20 = arith.constant 0 : index
    %c0_21 = arith.constant 0 : index
    %c0_22 = arith.constant 0 : index
    %45 = vector.load %arg15[%44, %c0_20, %c0_21, %c0_22] : memref<2x4x8x16xbf16, #tpu.memory_space<vmem>>, vector<1x4x8x16xbf16>
    %46 = vector.shape_cast %45 : vector<1x4x8x16xbf16> to vector<4x8x16xbf16>
    %47 = vector.shape_cast %40 : vector<4x8x16xbf16> to vector<1x4x8x16xbf16>
    tpu.vector_store %arg15[%44, %c0_20, %c0_21, %c0_22], %47 {strides = array<i32>} : memref<2x4x8x16xbf16, #tpu.memory_space<vmem>>, vector<1x4x8x16xbf16>,
    %48 = arith.index_cast %arg1 : i32 to index
    %c0_23 = arith.constant 0 : index
    %c0_24 = arith.constant 0 : index
    %c0_25 = arith.constant 0 : index
    %49 = vector.load %arg16[%48, %c0_23, %c0_24, %c0_25] : memref<2x4x8x16xbf16, #tpu.memory_space<vmem>>, vector<1x4x8x16xbf16>
    %50 = vector.shape_cast %49 : vector<1x4x8x16xbf16> to vector<4x8x16xbf16>
    %51 = vector.shape_cast %43 : vector<4x8x16xbf16> to vector<1x4x8x16xbf16>
    tpu.vector_store %arg16[%48, %c0_23, %c0_24, %c0_25], %51 {strides = array<i32>} : memref<2x4x8x16xbf16, #tpu.memory_space<vmem>>, vector<1x4x8x16xbf16>,
    %cst_26 = arith.constant -1.000000e+30 : f32
    %52 = vector.broadcast %cst_26 : f32 to vector<4x8x1xf32>
    %c0_27 = arith.constant 0 : index
    %c0_28 = arith.constant 0 : index
    %c0_29 = arith.constant 0 : index
    %53 = vector.load %arg17[%c0_27, %c0_28, %c0_29] : memref<4x8x1xf32, #tpu.memory_space<vmem>>, vector<4x8x1xf32>
    tpu.vector_store %arg17[%c0_27, %c0_28, %c0_29], %52 {strides = array<i32>} : memref<4x8x1xf32, #tpu.memory_space<vmem>>, vector<4x8x1xf32>,
    %cst_30 = arith.constant 0.000000e+00 : f32
    %54 = vector.broadcast %cst_30 : f32 to vector<4x8x1xf32>
    %c0_31 = arith.constant 0 : index
    %c0_32 = arith.constant 0 : index
    %c0_33 = arith.constant 0 : index
    %55 = vector.load %arg18[%c0_31, %c0_32, %c0_33] : memref<4x8x1xf32, #tpu.memory_space<vmem>>, vector<4x8x1xf32>
    tpu.vector_store %arg18[%c0_31, %c0_32, %c0_33], %54 {strides = array<i32>} : memref<4x8x1xf32, #tpu.memory_space<vmem>>, vector<4x8x1xf32>,
    %cst_34 = arith.constant 0.000000e+00 : f32
    %56 = vector.broadcast %cst_34 : f32 to vector<4x8x16xf32>
    %c0_35 = arith.constant 0 : index
    %c0_36 = arith.constant 0 : index
    %c0_37 = arith.constant 0 : index
    %57 = vector.load %arg19[%c0_35, %c0_36, %c0_37] : memref<4x8x16xf32, #tpu.memory_space<vmem>>, vector<4x8x16xf32>
    tpu.vector_store %arg19[%c0_35, %c0_36, %c0_37], %56 {strides = array<i32>} : memref<4x8x16xf32, #tpu.memory_space<vmem>>, vector<4x8x16xf32>,
    %c0_i32 = arith.constant 0 : i32
    %58 = arith.subi %arg1, %c0_i32 : i32
    %c1_i32 = arith.constant 1 : i32
    %c1_i32_38 = arith.constant 1 : i32
    %59 = arith.subi %c1_i32, %c1_i32_38 : i32
    %60 = arith.addi %58, %59 : i32
    %c1_i32_39 = arith.constant 1 : i32
    %61 = arith.divsi %60, %c1_i32_39 : i32
    %c1_i32_40 = arith.constant 1 : i32
    %c0_i32_41 = arith.constant 0 : i32
    %c0_i32_42 = arith.constant 0 : i32
    %62 = arith.subi %61, %c0_i32_42 : i32
    %63 = arith.addi %c0_i32_42, %62 : i32
    %c1_i32_43 = arith.constant 1 : i32
    scf.for %arg20 = %c0_i32_42 to %63 step %c1_i32_43  : i32 {
      %166 = arith.muli %arg20, %c1_i32_40 : i32
      %167 = arith.addi %c0_i32_41, %166 : i32
      %168 = arith.index_cast %167 : i32 to index
      %c0_93 = arith.constant 0 : index
      %c0_94 = arith.constant 0 : index
      %c0_95 = arith.constant 0 : index
      %169 = vector.load %arg15[%168, %c0_93, %c0_94, %c0_95] : memref<2x4x8x16xbf16, #tpu.memory_space<vmem>>, vector<1x4x8x16xbf16>
      %170 = vector.shape_cast %169 : vector<1x4x8x16xbf16> to vector<4x8x16xbf16>
      %171 = arith.index_cast %167 : i32 to index
      %c0_96 = arith.constant 0 : index
      %c0_97 = arith.constant 0 : index
      %c0_98 = arith.constant 0 : index
      %172 = vector.load %arg16[%171, %c0_96, %c0_97, %c0_98] : memref<2x4x8x16xbf16, #tpu.memory_space<vmem>>, vector<1x4x8x16xbf16>
      %173 = vector.shape_cast %172 : vector<1x4x8x16xbf16> to vector<4x8x16xbf16>
      "tpu.trace_start"() <{level = 10 : i32, message = "hqd,hkd->hqk"}> : () -> ()
      %cst_99 = arith.constant dense<0.000000e+00> : vector<4x8x8xf32>
      %174 = tpu.matmul %37, %170, %cst_99 {dimension_numbers = #tpu.dot_dimension_numbers<[2], [2], [1], [1], [0, 0, 0, 1, 1, 1], [0], [0]>} : vector<4x8x16xbf16>, vector<4x8x16xbf16>, vector<4x8x8xf32> -> vector<4x8x8xf32>
      "tpu.trace_stop"() : () -> ()
      %c0_100 = arith.constant 0 : index
      %c0_101 = arith.constant 0 : index
      %c0_102 = arith.constant 0 : index
      %175 = vector.load %arg17[%c0_100, %c0_101, %c0_102] : memref<4x8x1xf32, #tpu.memory_space<vmem>>, vector<4x8x1xf32>
      %cst_103 = arith.constant dense<0xFF800000> : vector<4x8xf32>
      %176 = vector.multi_reduction <maximumf>, %174, %cst_103 [2] : vector<4x8x8xf32> to vector<4x8xf32>
      %177 = vector.shape_cast %176 : vector<4x8xf32> to vector<4x8x1xf32>
      %178 = arith.maximumf %175, %177 : vector<4x8x1xf32>
      %179 = arith.subf %175, %178 : vector<4x8x1xf32>
      %180 = math.exp %179 : vector<4x8x1xf32>
      %181 = vector.broadcast %178 : vector<4x8x1xf32> to vector<4x8x8xf32>
      %182 = arith.subf %174, %181 : vector<4x8x8xf32>
      %183 = math.exp %182 : vector<4x8x8xf32>
      %c0_104 = arith.constant 0 : index
      %c0_105 = arith.constant 0 : index
      %c0_106 = arith.constant 0 : index
      %184 = vector.load %arg18[%c0_104, %c0_105, %c0_106] : memref<4x8x1xf32, #tpu.memory_space<vmem>>, vector<4x8x1xf32>
      %185 = arith.mulf %180, %184 : vector<4x8x1xf32>
      %cst_107 = arith.constant dense<0.000000e+00> : vector<4x8xf32>
      %186 = vector.multi_reduction <add>, %183, %cst_107 [2] : vector<4x8x8xf32> to vector<4x8xf32>
      %187 = vector.shape_cast %186 : vector<4x8xf32> to vector<4x8x1xf32>
      %188 = arith.addf %185, %187 : vector<4x8x1xf32>
      %c0_108 = arith.constant 0 : index
      %c0_109 = arith.constant 0 : index
      %c0_110 = arith.constant 0 : index
      %189 = vector.load %arg18[%c0_108, %c0_109, %c0_110] : memref<4x8x1xf32, #tpu.memory_space<vmem>>, vector<4x8x1xf32>
      tpu.vector_store %arg18[%c0_108, %c0_109, %c0_110], %188 {strides = array<i32>} : memref<4x8x1xf32, #tpu.memory_space<vmem>>, vector<4x8x1xf32>,
      %c0_111 = arith.constant 0 : index
      %c0_112 = arith.constant 0 : index
      %c0_113 = arith.constant 0 : index
      %190 = vector.load %arg19[%c0_111, %c0_112, %c0_113] : memref<4x8x16xf32, #tpu.memory_space<vmem>>, vector<4x8x16xf32>
      %191 = vector.broadcast %180 : vector<4x8x1xf32> to vector<4x8x16xf32>
      %192 = arith.mulf %191, %190 : vector<4x8x16xf32>
      %193 = arith.truncf %183 : vector<4x8x8xf32> to vector<4x8x8xbf16>
      "tpu.trace_start"() <{level = 10 : i32, message = "hqk,hkd->hqd"}> : () -> ()
      %cst_114 = arith.constant dense<0.000000e+00> : vector<4x8x16xf32>
      %194 = tpu.matmul %193, %173, %cst_114 {dimension_numbers = #tpu.dot_dimension_numbers<[2], [1], [1], [2], [0, 0, 0, 1, 1, 2], [0], [0]>} : vector<4x8x8xbf16>, vector<4x8x16xbf16>, vector<4x8x16xf32> -> vector<4x8x16xf32>
      "tpu.trace_stop"() : () -> ()
      %195 = arith.addf %192, %194 : vector<4x8x16xf32>
      %c0_115 = arith.constant 0 : index
      %c0_116 = arith.constant 0 : index
      %c0_117 = arith.constant 0 : index
      %196 = vector.load %arg19[%c0_115, %c0_116, %c0_117] : memref<4x8x16xf32, #tpu.memory_space<vmem>>, vector<4x8x16xf32>
      tpu.vector_store %arg19[%c0_115, %c0_116, %c0_117], %195 {strides = array<i32>} : memref<4x8x16xf32, #tpu.memory_space<vmem>>, vector<4x8x16xf32>,
      %c0_118 = arith.constant 0 : index
      %c0_119 = arith.constant 0 : index
      %c0_120 = arith.constant 0 : index
      %197 = vector.load %arg17[%c0_118, %c0_119, %c0_120] : memref<4x8x1xf32, #tpu.memory_space<vmem>>, vector<4x8x1xf32>
      tpu.vector_store %arg17[%c0_118, %c0_119, %c0_120], %178 {strides = array<i32>} : memref<4x8x1xf32, #tpu.memory_space<vmem>>, vector<4x8x1xf32>,
    }
    "tpu.trace_start"() <{level = 10 : i32, message = "hqd,hkd->hqk"}> : () -> ()
    %cst_44 = arith.constant dense<0.000000e+00> : vector<4x8x8xf32>
    %64 = tpu.matmul %37, %40, %cst_44 {dimension_numbers = #tpu.dot_dimension_numbers<[2], [2], [1], [1], [0, 0, 0, 1, 1, 1], [0], [0]>} : vector<4x8x16xbf16>, vector<4x8x16xbf16>, vector<4x8x8xf32> -> vector<4x8x8xf32>
    "tpu.trace_stop"() : () -> ()
    %65 = tpu.iota {dimensions = array<i32: 0>} : vector<8x8xi32>
    %66 = tpu.iota {dimensions = array<i32: 1>} : vector<8x8xi32>
    %67 = arith.cmpi sge, %65, %66 : vector<8x8xi32>
    %68 = vector.shape_cast %67 : vector<8x8xi1> to vector<1x8x8xi1>
    %cst_45 = arith.constant -1.000000e+30 : f32
    %69 = vector.shape_cast %68 : vector<1x8x8xi1> to vector<1x8x8xi1>
    %70 = vector.broadcast %69 : vector<1x8x8xi1> to vector<4x8x8xi1>
    %71 = vector.broadcast %cst_45 : f32 to vector<4x8x8xf32>
    %72 = arith.select %70, %64, %71 : vector<4x8x8xi1>, vector<4x8x8xf32>
    %c0_46 = arith.constant 0 : index
    %c0_47 = arith.constant 0 : index
    %c0_48 = arith.constant 0 : index
    %73 = vector.load %arg17[%c0_46, %c0_47, %c0_48] : memref<4x8x1xf32, #tpu.memory_space<vmem>>, vector<4x8x1xf32>
    %cst_49 = arith.constant dense<0xFF800000> : vector<4x8xf32>
    %74 = vector.multi_reduction <maximumf>, %72, %cst_49 [2] : vector<4x8x8xf32> to vector<4x8xf32>
    %75 = vector.shape_cast %74 : vector<4x8xf32> to vector<4x8x1xf32>
    %76 = arith.maximumf %73, %75 : vector<4x8x1xf32>
    %77 = arith.subf %73, %76 : vector<4x8x1xf32>
    %78 = math.exp %77 : vector<4x8x1xf32>
    %79 = vector.broadcast %76 : vector<4x8x1xf32> to vector<4x8x8xf32>
    %80 = arith.subf %72, %79 : vector<4x8x8xf32>
    %81 = math.exp %80 : vector<4x8x8xf32>
    %c0_50 = arith.constant 0 : index
    %c0_51 = arith.constant 0 : index
    %c0_52 = arith.constant 0 : index
    %82 = vector.load %arg18[%c0_50, %c0_51, %c0_52] : memref<4x8x1xf32, #tpu.memory_space<vmem>>, vector<4x8x1xf32>
    %83 = arith.mulf %78, %82 : vector<4x8x1xf32>
    %cst_53 = arith.constant dense<0.000000e+00> : vector<4x8xf32>
    %84 = vector.multi_reduction <add>, %81, %cst_53 [2] : vector<4x8x8xf32> to vector<4x8xf32>
    %85 = vector.shape_cast %84 : vector<4x8xf32> to vector<4x8x1xf32>
    %86 = arith.addf %83, %85 : vector<4x8x1xf32>
    %c0_54 = arith.constant 0 : index
    %c0_55 = arith.constant 0 : index
    %c0_56 = arith.constant 0 : index
    %87 = vector.load %arg19[%c0_54, %c0_55, %c0_56] : memref<4x8x16xf32, #tpu.memory_space<vmem>>, vector<4x8x16xf32>
    %88 = vector.broadcast %78 : vector<4x8x1xf32> to vector<4x8x16xf32>
    %89 = arith.mulf %88, %87 : vector<4x8x16xf32>
    %90 = arith.truncf %81 : vector<4x8x8xf32> to vector<4x8x8xbf16>
    "tpu.trace_start"() <{level = 10 : i32, message = "hqk,hkd->hqd"}> : () -> ()
    %cst_57 = arith.constant dense<0.000000e+00> : vector<4x8x16xf32>
    %91 = tpu.matmul %90, %43, %cst_57 {dimension_numbers = #tpu.dot_dimension_numbers<[2], [1], [1], [2], [0, 0, 0, 1, 1, 2], [0], [0]>} : vector<4x8x8xbf16>, vector<4x8x16xbf16>, vector<4x8x16xf32> -> vector<4x8x16xf32>
    "tpu.trace_stop"() : () -> ()
    %92 = arith.addf %89, %91 : vector<4x8x16xf32>
    %93 = tpu.reciprocal %86 {approx = true} : vector<4x8x1xf32> -> vector<4x8x1xf32>
    %94 = vector.broadcast %93 : vector<4x8x1xf32> to vector<4x8x16xf32>
    %95 = arith.mulf %92, %94 : vector<4x8x16xf32>
    %96 = tpu.transpose %95, [1, 0, 2] : vector<4x8x16xf32> -> vector<8x4x16xf32>
    %97 = vector.shape_cast %96 : vector<8x4x16xf32> to vector<8x64xf32>
    %98 = arith.addf %97, %1 : vector<8x64xf32>
    %c0_58 = arith.constant 0 : index
    %c0_59 = arith.constant 0 : index
    %99 = vector.load %arg8[%c0_58, %c0_59] : memref<1x64xf32, #tpu.memory_space<vmem>>, vector<1x64xf32>
    %c0_60 = arith.constant 0 : index
    %c0_61 = arith.constant 0 : index
    %100 = vector.load %arg9[%c0_60, %c0_61] : memref<1x64xf32, #tpu.memory_space<vmem>>, vector<1x64xf32>
    %cst_62 = arith.constant dense<0.000000e+00> : vector<8xf32>
    %101 = vector.multi_reduction <add>, %98, %cst_62 [1] : vector<8x64xf32> to vector<8xf32>
    %102 = vector.shape_cast %101 : vector<8xf32> to vector<8x1xf32>
    %cst_63 = arith.constant 6.400000e+01 : f32
    %103 = vector.broadcast %cst_63 : f32 to vector<8x1xf32>
    %104 = arith.divf %102, %103 : vector<8x1xf32>
    %105 = vector.broadcast %104 : vector<8x1xf32> to vector<8x64xf32>
    %106 = arith.subf %98, %105 : vector<8x64xf32>
    %107 = arith.mulf %106, %106 : vector<8x64xf32>
    %cst_64 = arith.constant dense<0.000000e+00> : vector<8xf32>
    %108 = vector.multi_reduction <add>, %107, %cst_64 [1] : vector<8x64xf32> to vector<8xf32>
    %109 = vector.shape_cast %108 : vector<8xf32> to vector<8x1xf32>
    %cst_65 = arith.constant 6.400000e+01 : f32
    %110 = vector.broadcast %cst_65 : f32 to vector<8x1xf32>
    %111 = arith.divf %109, %110 : vector<8x1xf32>
    %112 = vector.broadcast %104 : vector<8x1xf32> to vector<8x64xf32>
    %113 = arith.subf %98, %112 : vector<8x64xf32>
    %cst_66 = arith.constant 9.99999974E-6 : f32
    %114 = vector.broadcast %cst_66 : f32 to vector<8x1xf32>
    %115 = arith.addf %111, %114 : vector<8x1xf32>
    %116 = math.rsqrt %115 : vector<8x1xf32>
    %117 = vector.broadcast %116 : vector<8x1xf32> to vector<8x64xf32>
    %118 = arith.mulf %113, %117 : vector<8x64xf32>
    %119 = vector.broadcast %99 : vector<1x64xf32> to vector<8x64xf32>
    %120 = arith.mulf %118, %119 : vector<8x64xf32>
    %121 = vector.broadcast %100 : vector<1x64xf32> to vector<8x64xf32>
    %122 = arith.addf %120, %121 : vector<8x64xf32>
    %123 = arith.truncf %122 : vector<8x64xf32> to vector<8x64xbf16>
    %cst_67 = arith.constant 0.000000e+00 : f32
    %124 = vector.broadcast %cst_67 : f32 to vector<8x64xf32>
    %c0_i32_68 = arith.constant 0 : i32
    %125 = arith.index_cast %c0_i32_68 : i32 to index
    %c0_69 = arith.constant 0 : index
    %c0_70 = arith.constant 0 : index
    %126 = vector.load %arg10[%125, %c0_69, %c0_70] : memref<2x64x128xbf16, #tpu.memory_space<vmem>>, vector<1x64x128xbf16>
    %127 = vector.shape_cast %126 : vector<1x64x128xbf16> to vector<64x128xbf16>
    %cst_71 = arith.constant dense<0.000000e+00> : vector<8x128xf32>
    %128 = tpu.matmul %123, %127, %cst_71 {dimension_numbers = #tpu.dot_dimension_numbers<[1], [0], [0], [1], [0, 0, 1, 1], [], []>} : vector<8x64xbf16>, vector<64x128xbf16>, vector<8x128xf32> -> vector<8x128xf32>
    %129 = arith.index_cast %c0_i32_68 : i32 to index
    %c0_72 = arith.constant 0 : index
    %c0_73 = arith.constant 0 : index
    %130 = vector.load %arg11[%129, %c0_72, %c0_73] : memref<2x1x128xf32, #tpu.memory_space<vmem>>, vector<1x1x128xf32>
    %131 = vector.shape_cast %130 : vector<1x1x128xf32> to vector<1x128xf32>
    %132 = vector.broadcast %131 : vector<1x128xf32> to vector<8x128xf32>
    %133 = arith.addf %128, %132 : vector<8x128xf32>
    %cst_74 = arith.constant 0.000000e+00 : f32
    %134 = vector.broadcast %cst_74 : f32 to vector<8x128xf32>
    %135 = arith.maximumf %133, %134 : vector<8x128xf32>
    %136 = arith.truncf %135 : vector<8x128xf32> to vector<8x128xbf16>
    %137 = arith.index_cast %c0_i32_68 : i32 to index
    %c0_75 = arith.constant 0 : index
    %c0_76 = arith.constant 0 : index
    %138 = vector.load %arg12[%137, %c0_75, %c0_76] : memref<2x128x64xbf16, #tpu.memory_space<vmem>>, vector<1x128x64xbf16>
    %139 = vector.shape_cast %138 : vector<1x128x64xbf16> to vector<128x64xbf16>
    %cst_77 = arith.constant dense<0.000000e+00> : vector<8x64xf32>
    %140 = tpu.matmul %136, %139, %cst_77 {dimension_numbers = #tpu.dot_dimension_numbers<[1], [0], [0], [1], [0, 0, 1, 1], [], []>} : vector<8x128xbf16>, vector<128x64xbf16>, vector<8x64xf32> -> vector<8x64xf32>
    %141 = arith.addf %124, %140 : vector<8x64xf32>
    %c1_i32_78 = arith.constant 1 : i32
    %142 = arith.index_cast %c1_i32_78 : i32 to index
    %c0_79 = arith.constant 0 : index
    %c0_80 = arith.constant 0 : index
    %143 = vector.load %arg10[%142, %c0_79, %c0_80] : memref<2x64x128xbf16, #tpu.memory_space<vmem>>, vector<1x64x128xbf16>
    %144 = vector.shape_cast %143 : vector<1x64x128xbf16> to vector<64x128xbf16>
    %cst_81 = arith.constant dense<0.000000e+00> : vector<8x128xf32>
    %145 = tpu.matmul %123, %144, %cst_81 {dimension_numbers = #tpu.dot_dimension_numbers<[1], [0], [0], [1], [0, 0, 1, 1], [], []>} : vector<8x64xbf16>, vector<64x128xbf16>, vector<8x128xf32> -> vector<8x128xf32>
    %146 = arith.index_cast %c1_i32_78 : i32 to index
    %c0_82 = arith.constant 0 : index
    %c0_83 = arith.constant 0 : index
    %147 = vector.load %arg11[%146, %c0_82, %c0_83] : memref<2x1x128xf32, #tpu.memory_space<vmem>>, vector<1x1x128xf32>
    %148 = vector.shape_cast %147 : vector<1x1x128xf32> to vector<1x128xf32>
    %149 = vector.broadcast %148 : vector<1x128xf32> to vector<8x128xf32>
    %150 = arith.addf %145, %149 : vector<8x128xf32>
    %cst_84 = arith.constant 0.000000e+00 : f32
    %151 = vector.broadcast %cst_84 : f32 to vector<8x128xf32>
    %152 = arith.maximumf %150, %151 : vector<8x128xf32>
    %153 = arith.truncf %152 : vector<8x128xf32> to vector<8x128xbf16>
    %154 = arith.index_cast %c1_i32_78 : i32 to index
    %c0_85 = arith.constant 0 : index
    %c0_86 = arith.constant 0 : index
    %155 = vector.load %arg12[%154, %c0_85, %c0_86] : memref<2x128x64xbf16, #tpu.memory_space<vmem>>, vector<1x128x64xbf16>
    %156 = vector.shape_cast %155 : vector<1x128x64xbf16> to vector<128x64xbf16>
    %cst_87 = arith.constant dense<0.000000e+00> : vector<8x64xf32>
    %157 = tpu.matmul %153, %156, %cst_87 {dimension_numbers = #tpu.dot_dimension_numbers<[1], [0], [0], [1], [0, 0, 1, 1], [], []>} : vector<8x128xbf16>, vector<128x64xbf16>, vector<8x64xf32> -> vector<8x64xf32>
    %158 = arith.addf %141, %157 : vector<8x64xf32>
    %c2_i32 = arith.constant 2 : i32
    %c0_88 = arith.constant 0 : index
    %c0_89 = arith.constant 0 : index
    %159 = vector.load %arg13[%c0_88, %c0_89] : memref<1x64xf32, #tpu.memory_space<vmem>>, vector<1x64xf32>
    %160 = vector.broadcast %159 : vector<1x64xf32> to vector<8x64xf32>
    %161 = arith.addf %158, %160 : vector<8x64xf32>
    %162 = arith.addf %161, %98 : vector<8x64xf32>
    %c0_90 = arith.constant 0 : index
    %c0_91 = arith.constant 0 : index
    %c0_92 = arith.constant 0 : index
    %163 = vector.load %arg14[%c0_90, %c0_91, %c0_92] : memref<1x8x64xf32, #tpu.memory_space<vmem>>, vector<1x8x64xf32>
    %164 = vector.shape_cast %163 : vector<1x8x64xf32> to vector<8x64xf32>
    %165 = vector.shape_cast %162 : vector<8x64xf32> to vector<1x8x64xf32>
    tpu.vector_store %arg14[%c0_90, %c0_91, %c0_92], %165 {strides = array<i32>} : memref<1x8x64xf32, #tpu.memory_space<vmem>>, vector<1x8x64xf32>,
    return
  }
  func.func @transform_0(%arg0: i32, %arg1: i32) -> (i32, i32, i32) {
    %c0_i32 = arith.constant 0 : i32
    %c0_i32_0 = arith.constant 0 : i32
    return %arg0, %arg1, %c0_i32 : i32, i32, i32
  }
  func.func @transform_1(%arg0: i32, %arg1: i32) -> (i32, i32) {
    %c0_i32 = arith.constant 0 : i32
    %c0_i32_0 = arith.constant 0 : i32
    %c0_i32_1 = arith.constant 0 : i32
    return %c0_i32, %c0_i32_0 : i32, i32
  }
  func.func @transform_2(%arg0: i32, %arg1: i32) -> (i32, i32) {
    %c0_i32 = arith.constant 0 : i32
    %c0_i32_0 = arith.constant 0 : i32
    %c0_i32_1 = arith.constant 0 : i32
    return %c0_i32, %c0_i32_0 : i32, i32
  }
  func.func @transform_3(%arg0: i32, %arg1: i32) -> (i32, i32) {
    %c0_i32 = arith.constant 0 : i32
    %c0_i32_0 = arith.constant 0 : i32
    %c0_i32_1 = arith.constant 0 : i32
    return %c0_i32, %c0_i32_0 : i32, i32
  }
  func.func @transform_4(%arg0: i32, %arg1: i32) -> (i32, i32) {
    %c0_i32 = arith.constant 0 : i32
    %c0_i32_0 = arith.constant 0 : i32
    %c0_i32_1 = arith.constant 0 : i32
    return %c0_i32, %c0_i32_0 : i32, i32
  }
  func.func @transform_5(%arg0: i32, %arg1: i32) -> (i32, i32) {
    %c0_i32 = arith.constant 0 : i32
    %c0_i32_0 = arith.constant 0 : i32
    %c0_i32_1 = arith.constant 0 : i32
    return %c0_i32, %c0_i32_0 : i32, i32
  }
  func.func @transform_6(%arg0: i32, %arg1: i32) -> (i32, i32) {
    %c0_i32 = arith.constant 0 : i32
    %c0_i32_0 = arith.constant 0 : i32
    %c0_i32_1 = arith.constant 0 : i32
    return %c0_i32, %c0_i32_0 : i32, i32
  }
  func.func @transform_7(%arg0: i32, %arg1: i32) -> (i32, i32) {
    %c0_i32 = arith.constant 0 : i32
    %c0_i32_0 = arith.constant 0 : i32
    %c0_i32_1 = arith.constant 0 : i32
    return %c0_i32, %c0_i32_0 : i32, i32
  }
  func.func @transform_8(%arg0: i32, %arg1: i32) -> (i32, i32, i32) {
    %c0_i32 = arith.constant 0 : i32
    %c0_i32_0 = arith.constant 0 : i32
    %c0_i32_1 = arith.constant 0 : i32
    %c0_i32_2 = arith.constant 0 : i32
    return %c0_i32, %c0_i32_0, %c0_i32_1 : i32, i32, i32
  }
  func.func @transform_9(%arg0: i32, %arg1: i32) -> (i32, i32, i32) {
    %c0_i32 = arith.constant 0 : i32
    %c0_i32_0 = arith.constant 0 : i32
    %c0_i32_1 = arith.constant 0 : i32
    %c0_i32_2 = arith.constant 0 : i32
    return %c0_i32, %c0_i32_0, %c0_i32_1 : i32, i32, i32
  }
  func.func @transform_10(%arg0: i32, %arg1: i32) -> (i32, i32, i32) {
    %c0_i32 = arith.constant 0 : i32
    %c0_i32_0 = arith.constant 0 : i32
    %c0_i32_1 = arith.constant 0 : i32
    %c0_i32_2 = arith.constant 0 : i32
    return %c0_i32, %c0_i32_0, %c0_i32_1 : i32, i32, i32
  }
  func.func @transform_11(%arg0: i32, %arg1: i32) -> (i32, i32) {
    %c0_i32 = arith.constant 0 : i32
    %c0_i32_0 = arith.constant 0 : i32
    %c0_i32_1 = arith.constant 0 : i32
    return %c0_i32, %c0_i32_0 : i32, i32
  }
  func.func @transform_12(%arg0: i32, %arg1: i32) -> (i32, i32, i32) {
    %c0_i32 = arith.constant 0 : i32
    %c0_i32_0 = arith.constant 0 : i32
    return %arg0, %arg1, %c0_i32 : i32, i32, i32
  }
}

</mosaic_0001>

<llo_original>
// kernel: tpu_custom_call.1
$region0: #{tpu_custom_call.1}
  #allocation0 [shape = 'u32[]', space=smem, size = 0x4, offset = 0x4, fixed_abs, tag = 'smem constant byte address 0x4 - core index']
  #allocation1 [shape = 'u32[144,128]{1,0:T(1,128)}', space=vmem, size = 0x12000, scoped, tag = 'internal scratch']
  #allocation2 [shape = 'bf16[2,4,8,16]{3,2,1,0:T(8,128)(2,1)}', space=vmem, size = 0x4000, scoped, tag = 'scratch operand']
  #allocation3 [shape = 'bf16[2,4,8,16]{3,2,1,0:T(8,128)(2,1)}', space=vmem, size = 0x4000, scoped, tag = 'scratch operand']
  #allocation4 [shape = 'f32[4,8,1]{2,1,0:T(8,128)}', space=vmem, size = 0x4000, scoped, tag = 'scratch operand']
  #allocation5 [shape = 'f32[4,8,1]{2,1,0:T(8,128)}', space=vmem, size = 0x4000, scoped, tag = 'scratch operand']
  #allocation6 [shape = 'f32[4,8,16]{2,1,0:T(8,128)}', space=vmem, size = 0x4000, scoped, tag = 'scratch operand']
  %s0 = inlined_call_operand.vmem [shape: f32[2,16,64], index: 0, kind: input, shape index: {}]
  %s1 = inlined_call_operand.vmem [shape: bf16[64,64], index: 1, kind: input, shape index: {}]
  %s2 = inlined_call_operand.vmem [shape: bf16[64,64], index: 2, kind: input, shape index: {}]
  %s3 = inlined_call_operand.vmem [shape: bf16[64,64], index: 3, kind: input, shape index: {}]
  %s4 = inlined_call_operand.vmem [shape: f32[1,64], index: 4, kind: input, shape index: {}]
  %s5 = inlined_call_operand.vmem [shape: f32[1,64], index: 5, kind: input, shape index: {}]
  %s6 = inlined_call_operand.vmem [shape: f32[1,64], index: 6, kind: input, shape index: {}]
  %s7 = inlined_call_operand.vmem [shape: f32[1,64], index: 7, kind: input, shape index: {}]
  %s8 = inlined_call_operand.vmem [shape: bf16[2,64,128], index: 8, kind: input, shape index: {}]
  %s9 = inlined_call_operand.vmem [shape: f32[2,1,128], index: 9, kind: input, shape index: {}]
  %s10 = inlined_call_operand.vmem [shape: bf16[2,128,64], index: 10, kind: input, shape index: {}]
  %s11 = inlined_call_operand.vmem [shape: f32[1,64], index: 11, kind: input, shape index: {}]
  %s12 = inlined_call_operand.hbm [shape: f32[2,16,64], index: 12, kind: output, shape index: {}]
  %s13 = sld [smem:[#allocation0]]
  $region88: #{tpu_custom_call.1} parent=0
    _
  %s15 = ssub.s32 1, %s13
  %s16 = scalar_select 0, %s15, %s13
  $region1: #{tpu_custom_call.1} parent=0
    #allocation7 [shape = 'u8[8192]{0}', space=vmem, size = 0x2000, scoped, tag = 'output window, operand 0']
    #allocation8 [shape = 's32[2]{0}', space=sflag, size = 0x8, scoped, tag = 'scoped memory for tpu_custom_call.1']
    %17 = vsyncpa [#allocation8], 0
    %s18 = scalar_lea.sflag [#allocation8], 1
    %19 = vsyncpa %s18, 0
    loop: start=0, step=1, limit=6
    $region2: #{tpu_custom_call.1} parent=1 // loop_pre_header
      _
    $region3: #{tpu_custom_call.1} parent=1 // loop_header
      %s21 = sphi 0, %s25
      %p22 = scmp.ge.s32.totalorder %s21, 6
      %s28 = sphi 0, %s40
      %s29 = sphi 0, %s36
      %s30 = sphi 0, %s28
      %s31 = sphi 0, %s29
      %s32 = sphi 0, %s30
      %s33 = sphi 0, %s31
      %s45 = sphi 0, %s47
      %s48 = sphi 0, %s45
      %s49 = sphi 0, %s48
      %s65 = sphi 0, %s49
      %s69 = sphi 0, %s69
      %s71 = sphi 0, %s69
      %s72 = sphi 0, %s71
      %s86 = sphi 0, %s72
      %s90 = sphi 0, %s90
      %s92 = sphi 0, %s90
      %s93 = sphi 0, %s92
      %s107 = sphi 0, %s93
      %s111 = sphi 0, %s111
      %s113 = sphi 0, %s111
      %s114 = sphi 0, %s113
      %s128 = sphi 0, %s114
      %s132 = sphi 0, %s132
      %s134 = sphi 0, %s132
      %s135 = sphi 0, %s134
      %s149 = sphi 0, %s135
      %s153 = sphi 0, %s153
      %s155 = sphi 0, %s153
      %s156 = sphi 0, %s155
      %s170 = sphi 0, %s156
      %s174 = sphi 0, %s174
      %s176 = sphi 0, %s174
      %s177 = sphi 0, %s176
      %s191 = sphi 0, %s177
      %s195 = sphi 0, %s195
      %s197 = sphi 0, %s195
      %s198 = sphi 0, %s197
      %s212 = sphi 0, %s198
      %s216 = sphi 0, %s216
      %s218 = sphi 0, %s216
      %s219 = sphi 0, %s218
      %s233 = sphi 0, %s219
      %s237 = sphi 0, %s237
      %s239 = sphi 0, %s237
      %s240 = sphi 0, %s239
      %s254 = sphi 0, %s240
      %s258 = sphi 0, %s258
      %s260 = sphi 0, %s258
      %s261 = sphi 0, %s260
      %s275 = sphi 0, %s261
      %s279 = sphi 0, %s279
      %s281 = sphi 0, %s279
      %s282 = sphi 0, %s281
      %s296 = sphi 0, %s282
      %s304 = sphi 0, %s306
      %s307 = sphi 0, %s304
      %s308 = sphi 0, %s307
      %s324 = sphi 0, %s308
    $region4: #{tpu_custom_call.1} parent=1 // loop_header_branch
      %24 = sbr.rel (%p22) target = $region8
    $region5: #{tpu_custom_call.1} parent=1 // loop_body
      %s26 = ssub.s32 %s21, 1
      %s27 = ssub.s32 %s21, 2
      %s34 = sadd.s32 1, %s29
      %p35 = scmp.ge.s32.totalorder %s34, 2
      %s36 = scalar_select %p35, 0, %s34
      %s37 = sadd.s32 1, %s28
      %s38 = scalar_select %p35, %s37, %s28
      %p39 = scmp.ge.s32.totalorder %s38, 2
      %s40 = scalar_select %p39, 0, %s38
      %s41 = ssub.s32 %s28, %s40
      %s42 = ssub.s32 %s29, %s36
      %s43 = sor.u32 %s41, %s42
      %p44 = scmp.eq.s32.totalorder %s43, 0
      %s46 = sadd.s32 %s45, 1
      %s47 = scalar_select %p44, %s45, %s46
      %p50 = pneg %p44
      %p51 = scmp.eq.s32.totalorder %s21, 3
      %p52 = por %p50, %p51
      %p53 = scmp.ne.s32.totalorder %s45, %s48
      %p54 = scmp.eq.s32.totalorder %s21, 0
      %p55 = por %p53, %p54
      %p56 = scmp.ne.s32.totalorder %s45, %s48
      %p57 = scmp.eq.s32.totalorder %s26, 3
      %p58 = por %p56, %p57
      %p59 = scmp.ne.s32.totalorder %s48, %s49
      %p60 = scmp.eq.s32.totalorder %s26, 0
      %p61 = por %p59, %p60
      %p62 = scmp.ne.s32.totalorder %s48, %s49
      %p63 = scmp.eq.s32.totalorder %s27, 3
      %p64 = por %p62, %p63
      %p66 = scmp.ne.s32.totalorder %s49, %s65
      %p67 = scmp.eq.s32.totalorder %s27, 0
      %p68 = por %p66, %p67
      %s70 = sadd.s32 %s69, 1
      %p73 = scmp.eq.s32.totalorder %s21, 3
      %p74 = scmp.ne.s32.totalorder %s69, %s71
      %p75 = scmp.eq.s32.totalorder %s21, 0
      %p76 = por %p74, %p75
      %p77 = scmp.ne.s32.totalorder %s69, %s71
      %p78 = scmp.eq.s32.totalorder %s26, 3
      %p79 = por %p77, %p78
      %p80 = scmp.ne.s32.totalorder %s71, %s72
      %p81 = scmp.eq.s32.totalorder %s26, 0
      %p82 = por %p80, %p81
      %p83 = scmp.ne.s32.totalorder %s71, %s72
      %p84 = scmp.eq.s32.totalorder %s27, 3
      %p85 = por %p83, %p84
      %p87 = scmp.ne.s32.totalorder %s72, %s86
      %p88 = scmp.eq.s32.totalorder %s27, 0
      %p89 = por %p87, %p88
      %s91 = sadd.s32 %s90, 1
      %p94 = scmp.eq.s32.totalorder %s21, 3
      %p95 = scmp.ne.s32.totalorder %s90, %s92
      %p96 = scmp.eq.s32.totalorder %s21, 0
      %p97 = por %p95, %p96
      %p98 = scmp.ne.s32.totalorder %s90, %s92
      %p99 = scmp.eq.s32.totalorder %s26, 3
      %p100 = por %p98, %p99
      %p101 = scmp.ne.s32.totalorder %s92, %s93
      %p102 = scmp.eq.s32.totalorder %s26, 0
      %p103 = por %p101, %p102
      %p104 = scmp.ne.s32.totalorder %s92, %s93
      %p105 = scmp.eq.s32.totalorder %s27, 3
      %p106 = por %p104, %p105
      %p108 = scmp.ne.s32.totalorder %s93, %s107
      %p109 = scmp.eq.s32.totalorder %s27, 0
      %p110 = por %p108, %p109
      %s112 = sadd.s32 %s111, 1
      %p115 = scmp.eq.s32.totalorder %s21, 3
      %p116 = scmp.ne.s32.totalorder %s111, %s113
      %p117 = scmp.eq.s32.totalorder %s21, 0
      %p118 = por %p116, %p117
      %p119 = scmp.ne.s32.totalorder %s111, %s113
      %p120 = scmp.eq.s32.totalorder %s26, 3
      %p121 = por %p119, %p120
      %p122 = scmp.ne.s32.totalorder %s113, %s114
      %p123 = scmp.eq.s32.totalorder %s26, 0
      %p124 = por %p122, %p123
      %p125 = scmp.ne.s32.totalorder %s113, %s114
      %p126 = scmp.eq.s32.totalorder %s27, 3
      %p127 = por %p125, %p126
      %p129 = scmp.ne.s32.totalorder %s114, %s128
      %p130 = scmp.eq.s32.totalorder %s27, 0
      %p131 = por %p129, %p130
      %s133 = sadd.s32 %s132, 1
      %p136 = scmp.eq.s32.totalorder %s21, 3
      %p137 = scmp.ne.s32.totalorder %s132, %s134
      %p138 = scmp.eq.s32.totalorder %s21, 0
      %p139 = por %p137, %p138
      %p140 = scmp.ne.s32.totalorder %s132, %s134
      %p141 = scmp.eq.s32.totalorder %s26, 3
      %p142 = por %p140, %p141
      %p143 = scmp.ne.s32.totalorder %s134, %s135
      %p144 = scmp.eq.s32.totalorder %s26, 0
      %p145 = por %p143, %p144
      %p146 = scmp.ne.s32.totalorder %s134, %s135
      %p147 = scmp.eq.s32.totalorder %s27, 3
      %p148 = por %p146, %p147
      %p150 = scmp.ne.s32.totalorder %s135, %s149
      %p151 = scmp.eq.s32.totalorder %s27, 0
      %p152 = por %p150, %p151
      %s154 = sadd.s32 %s153, 1
      %p157 = scmp.eq.s32.totalorder %s21, 3
      %p158 = scmp.ne.s32.totalorder %s153, %s155
      %p159 = scmp.eq.s32.totalorder %s21, 0
      %p160 = por %p158, %p159
      %p161 = scmp.ne.s32.totalorder %s153, %s155
      %p162 = scmp.eq.s32.totalorder %s26, 3
      %p163 = por %p161, %p162
      %p164 = scmp.ne.s32.totalorder %s155, %s156
      %p165 = scmp.eq.s32.totalorder %s26, 0
      %p166 = por %p164, %p165
      %p167 = scmp.ne.s32.totalorder %s155, %s156
      %p168 = scmp.eq.s32.totalorder %s27, 3
      %p169 = por %p167, %p168
      %p171 = scmp.ne.s32.totalorder %s156, %s170
      %p172 = scmp.eq.s32.totalorder %s27, 0
      %p173 = por %p171, %p172
      %s175 = sadd.s32 %s174, 1
      %p178 = scmp.eq.s32.totalorder %s21, 3
      %p179 = scmp.ne.s32.totalorder %s174, %s176
      %p180 = scmp.eq.s32.totalorder %s21, 0
      %p181 = por %p179, %p180
      %p182 = scmp.ne.s32.totalorder %s174, %s176
      %p183 = scmp.eq.s32.totalorder %s26, 3
      %p184 = por %p182, %p183
      %p185 = scmp.ne.s32.totalorder %s176, %s177
      %p186 = scmp.eq.s32.totalorder %s26, 0
      %p187 = por %p185, %p186
      %p188 = scmp.ne.s32.totalorder %s176, %s177
      %p189 = scmp.eq.s32.totalorder %s27, 3
      %p190 = por %p188, %p189
      %p192 = scmp.ne.s32.totalorder %s177, %s191
      %p193 = scmp.eq.s32.totalorder %s27, 0
      %p194 = por %p192, %p193
      %s196 = sadd.s32 %s195, 1
      %p199 = scmp.eq.s32.totalorder %s21, 3
      %p200 = scmp.ne.s32.totalorder %s195, %s197
      %p201 = scmp.eq.s32.totalorder %s21, 0
      %p202 = por %p200, %p201
      %p203 = scmp.ne.s32.totalorder %s195, %s197
      %p204 = scmp.eq.s32.totalorder %s26, 3
      %p205 = por %p203, %p204
      %p206 = scmp.ne.s32.totalorder %s197, %s198
      %p207 = scmp.eq.s32.totalorder %s26, 0
      %p208 = por %p206, %p207
      %p209 = scmp.ne.s32.totalorder %s197, %s198
      %p210 = scmp.eq.s32.totalorder %s27, 3
      %p211 = por %p209, %p210
      %p213 = scmp.ne.s32.totalorder %s198, %s212
      %p214 = scmp.eq.s32.totalorder %s27, 0
      %p215 = por %p213, %p214
      %s217 = sadd.s32 %s216, 1
      %p220 = scmp.eq.s32.totalorder %s21, 3
      %p221 = scmp.ne.s32.totalorder %s216, %s218
      %p222 = scmp.eq.s32.totalorder %s21, 0
      %p223 = por %p221, %p222
      %p224 = scmp.ne.s32.totalorder %s216, %s218
      %p225 = scmp.eq.s32.totalorder %s26, 3
      %p226 = por %p224, %p225
      %p227 = scmp.ne.s32.totalorder %s218, %s219
      %p228 = scmp.eq.s32.totalorder %s26, 0
      %p229 = por %p227, %p228
      %p230 = scmp.ne.s32.totalorder %s218, %s219
      %p231 = scmp.eq.s32.totalorder %s27, 3
      %p232 = por %p230, %p231
      %p234 = scmp.ne.s32.totalorder %s219, %s233
      %p235 = scmp.eq.s32.totalorder %s27, 0
      %p236 = por %p234, %p235
      %s238 = sadd.s32 %s237, 1
      %p241 = scmp.eq.s32.totalorder %s21, 3
      %p242 = scmp.ne.s32.totalorder %s237, %s239
      %p243 = scmp.eq.s32.totalorder %s21, 0
      %p244 = por %p242, %p243
      %p245 = scmp.ne.s32.totalorder %s237, %s239
      %p246 = scmp.eq.s32.totalorder %s26, 3
      %p247 = por %p245, %p246
      %p248 = scmp.ne.s32.totalorder %s239, %s240
      %p249 = scmp.eq.s32.totalorder %s26, 0
      %p250 = por %p248, %p249
      %p251 = scmp.ne.s32.totalorder %s239, %s240
      %p252 = scmp.eq.s32.totalorder %s27, 3
      %p253 = por %p251, %p252
      %p255 = scmp.ne.s32.totalorder %s240, %s254
      %p256 = scmp.eq.s32.totalorder %s27, 0
      %p257 = por %p255, %p256
      %s259 = sadd.s32 %s258, 1
      %p262 = scmp.eq.s32.totalorder %s21, 3
      %p263 = scmp.ne.s32.totalorder %s258, %s260
      %p264 = scmp.eq.s32.totalorder %s21, 0
      %p265 = por %p263, %p264
      %p266 = scmp.ne.s32.totalorder %s258, %s260
      %p267 = scmp.eq.s32.totalorder %s26, 3
      %p268 = por %p266, %p267
      %p269 = scmp.ne.s32.totalorder %s260, %s261
      %p270 = scmp.eq.s32.totalorder %s26, 0
      %p271 = por %p269, %p270
      %p272 = scmp.ne.s32.totalorder %s260, %s261
      %p273 = scmp.eq.s32.totalorder %s27, 3
      %p274 = por %p272, %p273
      %p276 = scmp.ne.s32.totalorder %s261, %s275
      %p277 = scmp.eq.s32.totalorder %s27, 0
      %p278 = por %p276, %p277
      %s280 = sadd.s32 %s279, 1
      %p283 = scmp.eq.s32.totalorder %s21, 3
      %p284 = scmp.ne.s32.totalorder %s279, %s281
      %p285 = scmp.eq.s32.totalorder %s21, 0
      %p286 = por %p284, %p285
      %p287 = scmp.ne.s32.totalorder %s279, %s281
      %p288 = scmp.eq.s32.totalorder %s26, 3
      %p289 = por %p287, %p288
      %p290 = scmp.ne.s32.totalorder %s281, %s282
      %p291 = scmp.eq.s32.totalorder %s26, 0
      %p292 = por %p290, %p291
      %p293 = scmp.ne.s32.totalorder %s281, %s282
      %p294 = scmp.eq.s32.totalorder %s27, 3
      %p295 = por %p293, %p294
      %p297 = scmp.ne.s32.totalorder %s282, %s296
      %p298 = scmp.eq.s32.totalorder %s27, 0
      %p299 = por %p297, %p298
      %s300 = ssub.s32 %s28, %s40
      %s301 = ssub.s32 %s29, %s36
      %s302 = sor.u32 %s300, %s301
      %p303 = scmp.eq.s32.totalorder %s302, 0
      %s305 = sadd.s32 %s304, 1
      %s306 = scalar_select %p303, %s304, %s305
      %p309 = pneg %p303
      %p310 = scmp.eq.s32.totalorder %s21, 3
      %p311 = por %p309, %p310
      %p312 = scmp.ne.s32.totalorder %s304, %s307
      %p313 = scmp.eq.s32.totalorder %s21, 0
      %p314 = por %p312, %p313
      %p315 = scmp.ne.s32.totalorder %s304, %s307
      %p316 = scmp.eq.s32.totalorder %s26, 3
      %p317 = por %p315, %p316
      %p318 = scmp.ne.s32.totalorder %s307, %s308
      %p319 = scmp.eq.s32.totalorder %s26, 0
      %p320 = por %p318, %p319
      %p321 = scmp.ne.s32.totalorder %s307, %s308
      %p322 = scmp.eq.s32.totalorder %s27, 3
      %p323 = por %p321, %p322
      %p325 = scmp.ne.s32.totalorder %s308, %s324
      %p326 = scmp.eq.s32.totalorder %s27, 0
      %p327 = por %p325, %p326
      %p328 = scmp.le.s32.totalorder 1, %s21
      %p329 = scmp.lt.s32.totalorder %s21, 5
      %p330 = pnand %p328, %p329
      %p331 = pneg %p330
      // Predicated region
      $region9: #{tpu_custom_call.1} parent=5 // pred_check
        _
      $region10: #{tpu_custom_call.1} parent=5 // pred_check_branch
        %333 = sbr.rel (%p330) target = $region12
      $region11: #{tpu_custom_call.1} parent=5 // pred_region
        %s334 = ssub.s32 %s21, 1
        // Predicated region
        $region13: #{tpu_custom_call.1} parent=11 // pred_check
          %p335 = pneg %p82
        $region14: #{tpu_custom_call.1} parent=11 // pred_check_branch
          %337 = sbr.rel (%p335) target = $region16
        $region15: #{tpu_custom_call.1} parent=11 // pred_region
          _
        $region16: #{tpu_custom_call.1} parent=11 // pred_fallthru
          _
        // Predicated region
        $region17: #{tpu_custom_call.1} parent=11 // pred_check
          %p338 = pneg %p103
        $region18: #{tpu_custom_call.1} parent=11 // pred_check_branch
          %340 = sbr.rel (%p338) target = $region20
        $region19: #{tpu_custom_call.1} parent=11 // pred_region
          _
        $region20: #{tpu_custom_call.1} parent=11 // pred_fallthru
          _
        // Predicated region
        $region21: #{tpu_custom_call.1} parent=11 // pred_check
          %p341 = pneg %p124
        $region22: #{tpu_custom_call.1} parent=11 // pred_check_branch
          %343 = sbr.rel (%p341) target = $region24
        $region23: #{tpu_custom_call.1} parent=11 // pred_region
          _
        $region24: #{tpu_custom_call.1} parent=11 // pred_fallthru
          _
        // Predicated region
        $region25: #{tpu_custom_call.1} parent=11 // pred_check
          %p344 = pneg %p145
        $region26: #{tpu_custom_call.1} parent=11 // pred_check_branch
          %346 = sbr.rel (%p344) target = $region28
        $region27: #{tpu_custom_call.1} parent=11 // pred_region
          _
        $region28: #{tpu_custom_call.1} parent=11 // pred_fallthru
          _
        // Predicated region
        $region29: #{tpu_custom_call.1} parent=11 // pred_check
          %p347 = pneg %p166
        $region30: #{tpu_custom_call.1} parent=11 // pred_check_branch
          %349 = sbr.rel (%p347) target = $region32
        $region31: #{tpu_custom_call.1} parent=11 // pred_region
          _
        $region32: #{tpu_custom_call.1} parent=11 // pred_fallthru
          _
        // Predicated region
        $region33: #{tpu_custom_call.1} parent=11 // pred_check
          %p350 = pneg %p187
        $region34: #{tpu_custom_call.1} parent=11 // pred_check_branch
          %352 = sbr.rel (%p350) target = $region36
        $region35: #{tpu_custom_call.1} parent=11 // pred_region
          _
        $region36: #{tpu_custom_call.1} parent=11 // pred_fallthru
          _
        // Predicated region
        $region37: #{tpu_custom_call.1} parent=11 // pred_check
          %p353 = pneg %p208
        $region38: #{tpu_custom_call.1} parent=11 // pred_check_branch
          %355 = sbr.rel (%p353) target = $region40
        $region39: #{tpu_custom_call.1} parent=11 // pred_region
          _
        $region40: #{tpu_custom_call.1} parent=11 // pred_fallthru
          _
        // Predicated region
        $region41: #{tpu_custom_call.1} parent=11 // pred_check
          %p356 = pneg %p229
        $region42: #{tpu_custom_call.1} parent=11 // pred_check_branch
          %358 = sbr.rel (%p356) target = $region44
        $region43: #{tpu_custom_call.1} parent=11 // pred_region
          _
        $region44: #{tpu_custom_call.1} parent=11 // pred_fallthru
          _
        // Predicated region
        $region45: #{tpu_custom_call.1} parent=11 // pred_check
          %p359 = pneg %p250
        $region46: #{tpu_custom_call.1} parent=11 // pred_check_branch
          %361 = sbr.rel (%p359) target = $region48
        $region47: #{tpu_custom_call.1} parent=11 // pred_region
          _
        $region48: #{tpu_custom_call.1} parent=11 // pred_fallthru
          _
        // Predicated region
        $region49: #{tpu_custom_call.1} parent=11 // pred_check
          %p362 = pneg %p271
        $region50: #{tpu_custom_call.1} parent=11 // pred_check_branch
          %364 = sbr.rel (%p362) target = $region52
        $region51: #{tpu_custom_call.1} parent=11 // pred_region
          _
        $region52: #{tpu_custom_call.1} parent=11 // pred_fallthru
          _
        // Predicated region
        $region53: #{tpu_custom_call.1} parent=11 // pred_check
          %p365 = pneg %p292
        $region54: #{tpu_custom_call.1} parent=11 // pred_check_branch
          %367 = sbr.rel (%p365) target = $region56
        $region55: #{tpu_custom_call.1} parent=11 // pred_region
          _
        $region56: #{tpu_custom_call.1} parent=11 // pred_fallthru
          _
      $region12: #{tpu_custom_call.1} parent=5 // pred_fallthru
        _
      %p368 = scmp.lt.s32.totalorder %s21, 4
      // Predicated region
      $region57: #{tpu_custom_call.1} parent=5 // pred_check
        %p369 = pneg %p368
      $region58: #{tpu_custom_call.1} parent=5 // pred_check_branch
        %371 = sbr.rel (%p369) target = $region60
      $region59: #{tpu_custom_call.1} parent=5 // pred_region
        // Predicated region
        $region61: #{tpu_custom_call.1} parent=59 // pred_check
          %p372 = pneg %p55
        $region62: #{tpu_custom_call.1} parent=59 // pred_check_branch
          %374 = sbr.rel (%p372) target = $region64
        $region63: #{tpu_custom_call.1} parent=59 // pred_region
          %p375 = scmp.lt.s32.totalorder %s28, 1
          %s376 = scalar_select %p375, %s28, 1
          %p377 = scmp.lt.s32.totalorder %s29, 1
          %s378 = scalar_select %p377, %s29, 1
          %s379 = smul.addr %s376, 2
          %s380 = sadd.s32 %s378, %s379
          %s381 = smul.addr %s380, 8
          %s382 = scalar_lea.vmem %s0, %s381
        $region64: #{tpu_custom_call.1} parent=59 // pred_fallthru
          _
      $region60: #{tpu_custom_call.1} parent=5 // pred_fallthru
        _
      %p383 = scmp.le.s32.totalorder 1, %s21
      %p384 = scmp.lt.s32.totalorder %s21, 5
      %p385 = pnand %p383, %p384
      %p386 = pneg %p385
      // Predicated region
      $region65: #{tpu_custom_call.1} parent=5 // pred_check
        _
      $region66: #{tpu_custom_call.1} parent=5 // pred_check_branch
        %388 = sbr.rel (%p385) target = $region68
      $region67: #{tpu_custom_call.1} parent=5 // pred_region
        %s389 = ssub.s32 %s21, 1
        %p390 = scmp.lt.s32.totalorder %s30, 1
        %s391 = scalar_select %p390, %s30, 1
        %p392 = scmp.lt.s32.totalorder %s31, 1
        %s393 = scalar_select %p392, %s31, 1
        %s394 = smul.addr %s391, 2
        %s395 = sadd.s32 %s393, %s394
        %s396 = smul.addr %s395, 8
        %s397 = scalar_lea.vmem %s0, %s396
        %p398 = pneg %p61
        %p399 = pneg %p58
        %p400 = pneg %p82
        %p401 = pneg %p79
        %p402 = pneg %p103
        %p403 = pneg %p100
        %p404 = pneg %p124
        %p405 = pneg %p121
        %p406 = pneg %p145
        %p407 = pneg %p142
        %p408 = pneg %p166
        %p409 = pneg %p163
        %p410 = pneg %p187
        %p411 = pneg %p184
        %p412 = pneg %p208
        %p413 = pneg %p205
        %p414 = pneg %p229
        %p415 = pneg %p226
        %p416 = pneg %p250
        %p417 = pneg %p247
        %p418 = pneg %p271
        %p419 = pneg %p268
        %p420 = pneg %p292
        %p421 = pneg %p289
        %p422 = pneg %p320
        %p423 = pneg %p317
        %s424 = sand.u32 %s307, 1
        %s425 = scalar_lea.sflag [#allocation8], %s424
        %s426 = sand.u32 %s307, 1
        %s427 = smul.addr %s426, 8
        %s428 = scalar_lea.vmem [#allocation7], %s427
        %p429 = scmp.lt.s32.totalorder %s30, 1
        %s430 = scalar_select %p429, %s30, 1
        %p431 = scmp.lt.s32.totalorder %s31, 1
        %s432 = scalar_select %p431, %s31, 1
        %s433 = smul.addr %s430, 2
        %s434 = sadd.s32 %s432, %s433
        %s435 = smul.addr %s434, 8
        %s436 = scalar_lea.vmem %s0, %s435
        %v438 = vld [vmem:[%s436] sm:$0xff]
        %v439 = vld [vmem:[%s4] sm:$0x1]
        %v440 = vld [vmem:[%s5] sm:$0x1]
        %vm441 = vcmask 523264
        %v442 = vsel %vm441, %v438, 0.0
        %443 = vadd.xlane.f32.xlu0 %v442
        %v444 = vpop.xlane.xlu0 %443
        %v445 = vrcp.pop 64.0
        %v446 = vmul.f32 %v444, %v445
        %v447 = vsub.f32 %v438, %v446
        %v448 = vmul.f32 %v447, %v447
        %v449 = vsel %vm441, %v448, 0.0
        %450 = vadd.xlane.f32.xlu0 %v449
        %v451 = vpop.xlane.xlu0 %450
        %v452 = vmul.f32 %v451, %v445
        %v453 = vadd.f32 %v452, 1e-05
        %v454 = vrsqrt.pop %v453
        %v455 = vmul.f32 %v447, %v454
        %v457 = vlaneseq
        %v458 = vshrl.u32 %v457, 7
        %v459 = vsub.s32 0, %v458
        %v460 = vrot.slane %v439, %v459
        %v462 = vmul.f32 %v455, %v460
        %v464 = vlaneseq
        %v465 = vshrl.u32 %v464, 7
        %v466 = vsub.s32 0, %v465
        %v467 = vrot.slane %v440, %v466
        %v469 = vadd.f32 %v462, %v467
        %v470 = vpack.c.bf16 %v469, %v469
        %v471 = vld [vmem:[%s1] sm:$0xf]
        %v472 = vld [vmem:[%s1 + $0x4] sm:$0xf]
        %v473 = vld [vmem:[%s1 + $0x8] sm:$0xf]
        %v474 = vld [vmem:[%s1 + $0xc] sm:$0xf]
        %v475 = vld [vmem:[%s1 + $0x10] sm:$0xf]
        %v476 = vld [vmem:[%s1 + $0x14] sm:$0xf]
        %v477 = vld [vmem:[%s1 + $0x18] sm:$0xf]
        %v478 = vld [vmem:[%s1 + $0x1c] sm:$0xf]
        %v487 = vunpack.c.l.b16 %v471
        %v488 = vunpack.c.l.b16 %v472
        %v489 = vunpack.c.l.b16 %v473
        %v490 = vunpack.c.l.b16 %v474
        %v491 = vunpack.c.l.b16 %v475
        %v492 = vunpack.c.l.b16 %v476
        %v493 = vunpack.c.l.b16 %v477
        %v494 = vunpack.c.l.b16 %v478
        %v495 = vpack.c.b16 %v488, %v487
        %v496 = vpack.c.b16 %v490, %v489
        %v497 = vpack.c.b16 %v492, %v491
        %v498 = vpack.c.b16 %v494, %v493
        %v504 = vsel %vm441, %v470, 0
        %506 = vmatprep.subr.bf16.mxu0 0
        %507 = vmatpush1.bf16.msra.mxu0 0
        %508 = vmatprep.subr.bf16.mxu0 0
        %509 = vmatpush1.bf16.msra.mxu0 0
        %510 = vmatprep.subr.bf16.mxu0 0
        %511 = vmatpush1.bf16.msra.mxu0 0
        %512 = vmatprep.subr.bf16.mxu0 0
        %513 = vmatpush1.bf16.msra.mxu0 0
        %514 = vmatprep.subr.bf16.mxu0 0
        %515 = vmatpush1.bf16.msra.mxu0 %v498
        %516 = vmatprep.subr.bf16.mxu0 0
        %517 = vmatpush1.bf16.msra.mxu0 %v497
        %518 = vmatprep.subr.bf16.mxu0 0
        %519 = vmatpush1.bf16.msra.mxu0 %v496
        %520 = vmatprep.subr.bf16.mxu0 0
        %521 = vmatpush1.bf16.msra.mxu0 %v495
        %522 = vmatprep.subr.bf16.mxu0 0
        %523 = vmatpush2.bf16.msra.mxu0 0
        %524 = vmatprep.subr.bf16.mxu0 0
        %525 = vmatpush2.bf16.msra.mxu0 0
        %526 = vmatprep.subr.bf16.mxu0 0
        %527 = vmatpush2.bf16.msra.mxu0 0
        %528 = vmatprep.subr.bf16.mxu0 0
        %529 = vmatpush2.bf16.msra.mxu0 0
        %530 = vmatprep.subr.bf16.mxu0 0
        %531 = vmatpush2.bf16.msra.mxu0 0
        %532 = vmatprep.subr.bf16.mxu0 0
        %533 = vmatpush2.bf16.msra.mxu0 0
        %534 = vmatprep.subr.bf16.mxu0 0
        %535 = vmatpush2.bf16.msra.mxu0 0
        %536 = vmatprep.subr.bf16.mxu0 0
        %537 = vmatpush2.bf16.msra.mxu0 0
        %538 = vmatprep.mubr.bf16.mxu0 0
        %539 = vmatmul.mubr.bf16.gmra.mxu0 %v504
        %v540 = vpop.f32.mrf.mxu0
        %v541 = vadd.f32 0.0, %v540
        %v542 = vpop.f32.mrf.mxu0
        %v543 = vpop.f32.mrf.mxu0
        %v544 = vpop.f32.mrf.mxu0
        %545 = vdwg.mxu0
        %v546 = vmul.f32 %v541, 0.25
        %v547 = vld [vmem:[%s2] sm:$0xf]
        %v548 = vld [vmem:[%s2 + $0x4] sm:$0xf]
        %v549 = vld [vmem:[%s2 + $0x8] sm:$0xf]
        %v550 = vld [vmem:[%s2 + $0xc] sm:$0xf]
        %v551 = vld [vmem:[%s2 + $0x10] sm:$0xf]
        %v552 = vld [vmem:[%s2 + $0x14] sm:$0xf]
        %v553 = vld [vmem:[%s2 + $0x18] sm:$0xf]
        %v554 = vld [vmem:[%s2 + $0x1c] sm:$0xf]
        %v563 = vunpack.c.l.b16 %v547
        %v564 = vunpack.c.l.b16 %v548
        %v565 = vunpack.c.l.b16 %v549
        %v566 = vunpack.c.l.b16 %v550
        %v567 = vunpack.c.l.b16 %v551
        %v568 = vunpack.c.l.b16 %v552
        %v569 = vunpack.c.l.b16 %v553
        %v570 = vunpack.c.l.b16 %v554
        %v571 = vpack.c.b16 %v564, %v563
        %v572 = vpack.c.b16 %v566, %v565
        %v573 = vpack.c.b16 %v568, %v567
        %v574 = vpack.c.b16 %v570, %v569
        %579 = vmatprep.subr.bf16.mxu0 0
        %580 = vmatpush1.bf16.msra.mxu0 0
        %581 = vmatprep.subr.bf16.mxu0 0
        %582 = vmatpush1.bf16.msra.mxu0 0
        %583 = vmatprep.subr.bf16.mxu0 0
        %584 = vmatpush1.bf16.msra.mxu0 0
        %585 = vmatprep.subr.bf16.mxu0 0
        %586 = vmatpush1.bf16.msra.mxu0 0
        %587 = vmatprep.subr.bf16.mxu0 0
        %588 = vmatpush1.bf16.msra.mxu0 %v574
        %589 = vmatprep.subr.bf16.mxu0 0
        %590 = vmatpush1.bf16.msra.mxu0 %v573
        %591 = vmatprep.subr.bf16.mxu0 0
        %592 = vmatpush1.bf16.msra.mxu0 %v572
        %593 = vmatprep.subr.bf16.mxu0 0
        %594 = vmatpush1.bf16.msra.mxu0 %v571
        %595 = vmatprep.subr.bf16.mxu0 0
        %596 = vmatpush2.bf16.msra.mxu0 0
        %597 = vmatprep.subr.bf16.mxu0 0
        %598 = vmatpush2.bf16.msra.mxu0 0
        %599 = vmatprep.subr.bf16.mxu0 0
        %600 = vmatpush2.bf16.msra.mxu0 0
        %601 = vmatprep.subr.bf16.mxu0 0
        %602 = vmatpush2.bf16.msra.mxu0 0
        %603 = vmatprep.subr.bf16.mxu0 0
        %604 = vmatpush2.bf16.msra.mxu0 0
        %605 = vmatprep.subr.bf16.mxu0 0
        %606 = vmatpush2.bf16.msra.mxu0 0
        %607 = vmatprep.subr.bf16.mxu0 0
        %608 = vmatpush2.bf16.msra.mxu0 0
        %609 = vmatprep.subr.bf16.mxu0 0
        %610 = vmatpush2.bf16.msra.mxu0 0
        %611 = vmatprep.mubr.bf16.mxu0 0
        %612 = vmatmul.mubr.bf16.gmra.mxu0 %v504
        %v613 = vpop.f32.mrf.mxu0
        %v614 = vadd.f32 0.0, %v613
        %v615 = vpop.f32.mrf.mxu0
        %v616 = vpop.f32.mrf.mxu0
        %v617 = vpop.f32.mrf.mxu0
        %618 = vdwg.mxu0
        %v619 = vld [vmem:[%s3] sm:$0xf]
        %v620 = vld [vmem:[%s3 + $0x4] sm:$0xf]
        %v621 = vld [vmem:[%s3 + $0x8] sm:$0xf]
        %v622 = vld [vmem:[%s3 + $0xc] sm:$0xf]
        %v623 = vld [vmem:[%s3 + $0x10] sm:$0xf]
        %v624 = vld [vmem:[%s3 + $0x14] sm:$0xf]
        %v625 = vld [vmem:[%s3 + $0x18] sm:$0xf]
        %v626 = vld [vmem:[%s3 + $0x1c] sm:$0xf]
        %v635 = vunpack.c.l.b16 %v619
        %v636 = vunpack.c.l.b16 %v620
        %v637 = vunpack.c.l.b16 %v621
        %v638 = vunpack.c.l.b16 %v622
        %v639 = vunpack.c.l.b16 %v623
        %v640 = vunpack.c.l.b16 %v624
        %v641 = vunpack.c.l.b16 %v625
        %v642 = vunpack.c.l.b16 %v626
        %v643 = vpack.c.b16 %v636, %v635
        %v644 = vpack.c.b16 %v638, %v637
        %v645 = vpack.c.b16 %v640, %v639
        %v646 = vpack.c.b16 %v642, %v641
        %651 = vmatprep.subr.bf16.mxu0 0
        %652 = vmatpush1.bf16.msra.mxu0 0
        %653 = vmatprep.subr.bf16.mxu0 0
        %654 = vmatpush1.bf16.msra.mxu0 0
        %655 = vmatprep.subr.bf16.mxu0 0
        %656 = vmatpush1.bf16.msra.mxu0 0
        %657 = vmatprep.subr.bf16.mxu0 0
        %658 = vmatpush1.bf16.msra.mxu0 0
        %659 = vmatprep.subr.bf16.mxu0 0
        %660 = vmatpush1.bf16.msra.mxu0 %v646
        %661 = vmatprep.subr.bf16.mxu0 0
        %662 = vmatpush1.bf16.msra.mxu0 %v645
        %663 = vmatprep.subr.bf16.mxu0 0
        %664 = vmatpush1.bf16.msra.mxu0 %v644
        %665 = vmatprep.subr.bf16.mxu0 0
        %666 = vmatpush1.bf16.msra.mxu0 %v643
        %667 = vmatprep.subr.bf16.mxu0 0
        %668 = vmatpush2.bf16.msra.mxu0 0
        %669 = vmatprep.subr.bf16.mxu0 0
        %670 = vmatpush2.bf16.msra.mxu0 0
        %671 = vmatprep.subr.bf16.mxu0 0
        %672 = vmatpush2.bf16.msra.mxu0 0
        %673 = vmatprep.subr.bf16.mxu0 0
        %674 = vmatpush2.bf16.msra.mxu0 0
        %675 = vmatprep.subr.bf16.mxu0 0
        %676 = vmatpush2.bf16.msra.mxu0 0
        %677 = vmatprep.subr.bf16.mxu0 0
        %678 = vmatpush2.bf16.msra.mxu0 0
        %679 = vmatprep.subr.bf16.mxu0 0
        %680 = vmatpush2.bf16.msra.mxu0 0
        %681 = vmatprep.subr.bf16.mxu0 0
        %682 = vmatpush2.bf16.msra.mxu0 0
        %683 = vmatprep.mubr.bf16.mxu0 0
        %684 = vmatmul.mubr.bf16.gmra.mxu0 %v504
        %v685 = vpop.f32.mrf.mxu0
        %v686 = vadd.f32 0.0, %v685
        %v687 = vpop.f32.mrf.mxu0
        %v688 = vpop.f32.mrf.mxu0
        %v689 = vpop.f32.mrf.mxu0
        %690 = vdwg.mxu0
        %692 = vrot.lane.b32.xlu0 %v546, 112
        %v693 = vpop.permute.xlu0 %692
        %695 = vrot.lane.b32.xlu0 %v546, 96
        %v696 = vpop.permute.xlu0 %695
        %698 = vrot.lane.b32.xlu0 %v546, 80
        %v699 = vpop.permute.xlu0 %698
        %v701 = vcombine.low %v546, %v696
        %v702 = vcombine.high %v546, %v696
        %v704 = vunpack.c.l.s4 1983009808
        %v705 = vunpack.c.0.s8 %v704
        %v706 = vlaneseq
        %v707 = vshrl.u32 %v706, 7
        %v708 = vsub.s32 %v705, %v707
        %v709 = vrot.slane %v701, %v708
        %v711 = vunpack.c.l.s4 1983009808
        %v712 = vunpack.c.0.s8 %v711
        %v713 = vlaneseq
        %v714 = vshrl.u32 %v713, 7
        %v715 = vsub.s32 %v712, %v714
        %v716 = vrot.slane %v702, %v715
        %v717 = vcombine.low %v693, %v699
        %v718 = vcombine.high %v693, %v699
        %v720 = vunpack.c.l.s4 1983009808
        %v721 = vunpack.c.0.s8 %v720
        %v722 = vlaneseq
        %v723 = vshrl.u32 %v722, 7
        %v724 = vsub.s32 %v721, %v723
        %v725 = vrot.slane %v717, %v724
        %v727 = vunpack.c.l.s4 1983009808
        %v728 = vunpack.c.0.s8 %v727
        %v729 = vlaneseq
        %v730 = vshrl.u32 %v729, 7
        %v731 = vsub.s32 %v728, %v730
        %v732 = vrot.slane %v718, %v731
        %v733 = vcombine.low %v709, %v725
        %v734 = vcombine.high %v709, %v725
        %v736 = vunpack.c.l.s4 1934713408
        %v737 = vunpack.c.0.s8 %v736
        %v738 = vlaneseq
        %v739 = vshrl.u32 %v738, 7
        %v740 = vsub.s32 %v737, %v739
        %v741 = vrot.slane %v733, %v740
        %v743 = vunpack.c.l.s4 1934713408
        %v744 = vunpack.c.0.s8 %v743
        %v745 = vlaneseq
        %v746 = vshrl.u32 %v745, 7
        %v747 = vsub.s32 %v744, %v746
        %v748 = vrot.slane %v734, %v747
        %v749 = vcombine.low %v716, %v732
        %v750 = vcombine.high %v716, %v732
        %v752 = vunpack.c.l.s4 1934713408
        %v753 = vunpack.c.0.s8 %v752
        %v754 = vlaneseq
        %v755 = vshrl.u32 %v754, 7
        %v756 = vsub.s32 %v753, %v755
        %v757 = vrot.slane %v749, %v756
        %v759 = vunpack.c.l.s4 1934713408
        %v760 = vunpack.c.0.s8 %v759
        %v761 = vlaneseq
        %v762 = vshrl.u32 %v761, 7
        %v763 = vsub.s32 %v760, %v762
        %v764 = vrot.slane %v750, %v763
        %v765 = vcombine.high %v741, 0.0
        %v766 = vcombine.high %v748, 0.0
        %v767 = vcombine.high %v757, 0.0
        %v768 = vcombine.high %v764, 0.0
        %v769 = vcombine.low %v741, %v748
        %v771 = vunpack.c.l.s4 1983009808
        %v772 = vunpack.c.0.s8 %v771
        %v773 = vlaneseq
        %v774 = vshrl.u32 %v773, 7
        %v775 = vsub.s32 %v772, %v774
        %v776 = vrot.slane %v769, %v775
        %v777 = vcombine.low %v765, %v766
        %v779 = vunpack.c.l.s4 1983009808
        %v780 = vunpack.c.0.s8 %v779
        %v781 = vlaneseq
        %v782 = vshrl.u32 %v781, 7
        %v783 = vsub.s32 %v780, %v782
        %v784 = vrot.slane %v777, %v783
        %v785 = vcombine.low %v757, %v764
        %v787 = vunpack.c.l.s4 1983009808
        %v788 = vunpack.c.0.s8 %v787
        %v789 = vlaneseq
        %v790 = vshrl.u32 %v789, 7
        %v791 = vsub.s32 %v788, %v790
        %v792 = vrot.slane %v785, %v791
        %v793 = vcombine.low %v767, %v768
        %v795 = vunpack.c.l.s4 1983009808
        %v796 = vunpack.c.0.s8 %v795
        %v797 = vlaneseq
        %v798 = vshrl.u32 %v797, 7
        %v799 = vsub.s32 %v796, %v798
        %v800 = vrot.slane %v793, %v799
        %v801 = vcombine.low %v776, %v784
        %v802 = vcombine.high %v776, %v784
        %v804 = vunpack.c.l.s4 1934713408
        %v805 = vunpack.c.0.s8 %v804
        %v806 = vlaneseq
        %v807 = vshrl.u32 %v806, 7
        %v808 = vsub.s32 %v805, %v807
        %v809 = vrot.slane %v801, %v808
        %v811 = vunpack.c.l.s4 1934713408
        %v812 = vunpack.c.0.s8 %v811
        %v813 = vlaneseq
        %v814 = vshrl.u32 %v813, 7
        %v815 = vsub.s32 %v812, %v814
        %v816 = vrot.slane %v802, %v815
        %v817 = vcombine.low %v792, %v800
        %v818 = vcombine.high %v792, %v800
        %v820 = vunpack.c.l.s4 1934713408
        %v821 = vunpack.c.0.s8 %v820
        %v822 = vlaneseq
        %v823 = vshrl.u32 %v822, 7
        %v824 = vsub.s32 %v821, %v823
        %v825 = vrot.slane %v817, %v824
        %v827 = vunpack.c.l.s4 1934713408
        %v828 = vunpack.c.0.s8 %v827
        %v829 = vlaneseq
        %v830 = vshrl.u32 %v829, 7
        %v831 = vsub.s32 %v828, %v830
        %v832 = vrot.slane %v818, %v831
        %v833 = vcombine.low %v809, %v825
        %v834 = vcombine.high %v809, %v825
        %v835 = vcombine.low %v816, %v832
        %v836 = vcombine.high %v816, %v832
        %v837 = vpack.c.bf16 %v833, %v833
        %v838 = vpack.c.bf16 %v834, %v834
        %v839 = vpack.c.bf16 %v835, %v835
        %v840 = vpack.c.bf16 %v836, %v836
        %842 = vrot.lane.b32.xlu0 %v614, 112
        %v843 = vpop.permute.xlu0 %842
        %845 = vrot.lane.b32.xlu0 %v614, 96
        %v846 = vpop.permute.xlu0 %845
        %848 = vrot.lane.b32.xlu0 %v614, 80
        %v849 = vpop.permute.xlu0 %848
        %v851 = vcombine.low %v614, %v846
        %v852 = vcombine.high %v614, %v846
        %v854 = vunpack.c.l.s4 1983009808
        %v855 = vunpack.c.0.s8 %v854
        %v856 = vlaneseq
        %v857 = vshrl.u32 %v856, 7
        %v858 = vsub.s32 %v855, %v857
        %v859 = vrot.slane %v851, %v858
        %v861 = vunpack.c.l.s4 1983009808
        %v862 = vunpack.c.0.s8 %v861
        %v863 = vlaneseq
        %v864 = vshrl.u32 %v863, 7
        %v865 = vsub.s32 %v862, %v864
        %v866 = vrot.slane %v852, %v865
        %v867 = vcombine.low %v843, %v849
        %v868 = vcombine.high %v843, %v849
        %v870 = vunpack.c.l.s4 1983009808
        %v871 = vunpack.c.0.s8 %v870
        %v872 = vlaneseq
        %v873 = vshrl.u32 %v872, 7
        %v874 = vsub.s32 %v871, %v873
        %v875 = vrot.slane %v867, %v874
        %v877 = vunpack.c.l.s4 1983009808
        %v878 = vunpack.c.0.s8 %v877
        %v879 = vlaneseq
        %v880 = vshrl.u32 %v879, 7
        %v881 = vsub.s32 %v878, %v880
        %v882 = vrot.slane %v868, %v881
        %v883 = vcombine.low %v859, %v875
        %v884 = vcombine.high %v859, %v875
        %v886 = vunpack.c.l.s4 1934713408
        %v887 = vunpack.c.0.s8 %v886
        %v888 = vlaneseq
        %v889 = vshrl.u32 %v888, 7
        %v890 = vsub.s32 %v887, %v889
        %v891 = vrot.slane %v883, %v890
        %v893 = vunpack.c.l.s4 1934713408
        %v894 = vunpack.c.0.s8 %v893
        %v895 = vlaneseq
        %v896 = vshrl.u32 %v895, 7
        %v897 = vsub.s32 %v894, %v896
        %v898 = vrot.slane %v884, %v897
        %v899 = vcombine.low %v866, %v882
        %v900 = vcombine.high %v866, %v882
        %v902 = vunpack.c.l.s4 1934713408
        %v903 = vunpack.c.0.s8 %v902
        %v904 = vlaneseq
        %v905 = vshrl.u32 %v904, 7
        %v906 = vsub.s32 %v903, %v905
        %v907 = vrot.slane %v899, %v906
        %v909 = vunpack.c.l.s4 1934713408
        %v910 = vunpack.c.0.s8 %v909
        %v911 = vlaneseq
        %v912 = vshrl.u32 %v911, 7
        %v913 = vsub.s32 %v910, %v912
        %v914 = vrot.slane %v900, %v913
        %v915 = vcombine.high %v891, 0.0
        %v916 = vcombine.high %v898, 0.0
        %v917 = vcombine.high %v907, 0.0
        %v918 = vcombine.high %v914, 0.0
        %v919 = vcombine.low %v891, %v898
        %v921 = vunpack.c.l.s4 1983009808
        %v922 = vunpack.c.0.s8 %v921
        %v923 = vlaneseq
        %v924 = vshrl.u32 %v923, 7
        %v925 = vsub.s32 %v922, %v924
        %v926 = vrot.slane %v919, %v925
        %v927 = vcombine.low %v915, %v916
        %v929 = vunpack.c.l.s4 1983009808
        %v930 = vunpack.c.0.s8 %v929
        %v931 = vlaneseq
        %v932 = vshrl.u32 %v931, 7
        %v933 = vsub.s32 %v930, %v932
        %v934 = vrot.slane %v927, %v933
        %v935 = vcombine.low %v907, %v914
        %v937 = vunpack.c.l.s4 1983009808
        %v938 = vunpack.c.0.s8 %v937
        %v939 = vlaneseq
        %v940 = vshrl.u32 %v939, 7
        %v941 = vsub.s32 %v938, %v940
        %v942 = vrot.slane %v935, %v941
        %v943 = vcombine.low %v917, %v918
        %v945 = vunpack.c.l.s4 1983009808
        %v946 = vunpack.c.0.s8 %v945
        %v947 = vlaneseq
        %v948 = vshrl.u32 %v947, 7
        %v949 = vsub.s32 %v946, %v948
        %v950 = vrot.slane %v943, %v949
        %v951 = vcombine.low %v926, %v934
        %v952 = vcombine.high %v926, %v934
        %v954 = vunpack.c.l.s4 1934713408
        %v955 = vunpack.c.0.s8 %v954
        %v956 = vlaneseq
        %v957 = vshrl.u32 %v956, 7
        %v958 = vsub.s32 %v955, %v957
        %v959 = vrot.slane %v951, %v958
        %v961 = vunpack.c.l.s4 1934713408
        %v962 = vunpack.c.0.s8 %v961
        %v963 = vlaneseq
        %v964 = vshrl.u32 %v963, 7
        %v965 = vsub.s32 %v962, %v964
        %v966 = vrot.slane %v952, %v965
        %v967 = vcombine.low %v942, %v950
        %v968 = vcombine.high %v942, %v950
        %v970 = vunpack.c.l.s4 1934713408
        %v971 = vunpack.c.0.s8 %v970
        %v972 = vlaneseq
        %v973 = vshrl.u32 %v972, 7
        %v974 = vsub.s32 %v971, %v973
        %v975 = vrot.slane %v967, %v974
        %v977 = vunpack.c.l.s4 1934713408
        %v978 = vunpack.c.0.s8 %v977
        %v979 = vlaneseq
        %v980 = vshrl.u32 %v979, 7
        %v981 = vsub.s32 %v978, %v980
        %v982 = vrot.slane %v968, %v981
        %v983 = vcombine.low %v959, %v975
        %v984 = vcombine.high %v959, %v975
        %v985 = vcombine.low %v966, %v982
        %v986 = vcombine.high %v966, %v982
        %v987 = vpack.c.bf16 %v983, %v983
        %v988 = vpack.c.bf16 %v984, %v984
        %v989 = vpack.c.bf16 %v985, %v985
        %v990 = vpack.c.bf16 %v986, %v986
        %992 = vrot.lane.b32.xlu0 %v686, 112
        %v993 = vpop.permute.xlu0 %992
        %995 = vrot.lane.b32.xlu0 %v686, 96
        %v996 = vpop.permute.xlu0 %995
        %998 = vrot.lane.b32.xlu0 %v686, 80
        %v999 = vpop.permute.xlu0 %998
        %v1001 = vcombine.low %v686, %v996
        %v1002 = vcombine.high %v686, %v996
        %v1004 = vunpack.c.l.s4 1983009808
        %v1005 = vunpack.c.0.s8 %v1004
        %v1006 = vlaneseq
        %v1007 = vshrl.u32 %v1006, 7
        %v1008 = vsub.s32 %v1005, %v1007
        %v1009 = vrot.slane %v1001, %v1008
        %v1011 = vunpack.c.l.s4 1983009808
        %v1012 = vunpack.c.0.s8 %v1011
        %v1013 = vlaneseq
        %v1014 = vshrl.u32 %v1013, 7
        %v1015 = vsub.s32 %v1012, %v1014
        %v1016 = vrot.slane %v1002, %v1015
        %v1017 = vcombine.low %v993, %v999
        %v1018 = vcombine.high %v993, %v999
        %v1020 = vunpack.c.l.s4 1983009808
        %v1021 = vunpack.c.0.s8 %v1020
        %v1022 = vlaneseq
        %v1023 = vshrl.u32 %v1022, 7
        %v1024 = vsub.s32 %v1021, %v1023
        %v1025 = vrot.slane %v1017, %v1024
        %v1027 = vunpack.c.l.s4 1983009808
        %v1028 = vunpack.c.0.s8 %v1027
        %v1029 = vlaneseq
        %v1030 = vshrl.u32 %v1029, 7
        %v1031 = vsub.s32 %v1028, %v1030
        %v1032 = vrot.slane %v1018, %v1031
        %v1033 = vcombine.low %v1009, %v1025
        %v1034 = vcombine.high %v1009, %v1025
        %v1036 = vunpack.c.l.s4 1934713408
        %v1037 = vunpack.c.0.s8 %v1036
        %v1038 = vlaneseq
        %v1039 = vshrl.u32 %v1038, 7
        %v1040 = vsub.s32 %v1037, %v1039
        %v1041 = vrot.slane %v1033, %v1040
        %v1043 = vunpack.c.l.s4 1934713408
        %v1044 = vunpack.c.0.s8 %v1043
        %v1045 = vlaneseq
        %v1046 = vshrl.u32 %v1045, 7
        %v1047 = vsub.s32 %v1044, %v1046
        %v1048 = vrot.slane %v1034, %v1047
        %v1049 = vcombine.low %v1016, %v1032
        %v1050 = vcombine.high %v1016, %v1032
        %v1052 = vunpack.c.l.s4 1934713408
        %v1053 = vunpack.c.0.s8 %v1052
        %v1054 = vlaneseq
        %v1055 = vshrl.u32 %v1054, 7
        %v1056 = vsub.s32 %v1053, %v1055
        %v1057 = vrot.slane %v1049, %v1056
        %v1059 = vunpack.c.l.s4 1934713408
        %v1060 = vunpack.c.0.s8 %v1059
        %v1061 = vlaneseq
        %v1062 = vshrl.u32 %v1061, 7
        %v1063 = vsub.s32 %v1060, %v1062
        %v1064 = vrot.slane %v1050, %v1063
        %v1065 = vcombine.high %v1041, 0.0
        %v1066 = vcombine.high %v1048, 0.0
        %v1067 = vcombine.high %v1057, 0.0
        %v1068 = vcombine.high %v1064, 0.0
        %v1069 = vcombine.low %v1041, %v1048
        %v1071 = vunpack.c.l.s4 1983009808
        %v1072 = vunpack.c.0.s8 %v1071
        %v1073 = vlaneseq
        %v1074 = vshrl.u32 %v1073, 7
        %v1075 = vsub.s32 %v1072, %v1074
        %v1076 = vrot.slane %v1069, %v1075
        %v1077 = vcombine.low %v1065, %v1066
        %v1079 = vunpack.c.l.s4 1983009808
        %v1080 = vunpack.c.0.s8 %v1079
        %v1081 = vlaneseq
        %v1082 = vshrl.u32 %v1081, 7
        %v1083 = vsub.s32 %v1080, %v1082
        %v1084 = vrot.slane %v1077, %v1083
        %v1085 = vcombine.low %v1057, %v1064
        %v1087 = vunpack.c.l.s4 1983009808
        %v1088 = vunpack.c.0.s8 %v1087
        %v1089 = vlaneseq
        %v1090 = vshrl.u32 %v1089, 7
        %v1091 = vsub.s32 %v1088, %v1090
        %v1092 = vrot.slane %v1085, %v1091
        %v1093 = vcombine.low %v1067, %v1068
        %v1095 = vunpack.c.l.s4 1983009808
        %v1096 = vunpack.c.0.s8 %v1095
        %v1097 = vlaneseq
        %v1098 = vshrl.u32 %v1097, 7
        %v1099 = vsub.s32 %v1096, %v1098
        %v1100 = vrot.slane %v1093, %v1099
        %v1101 = vcombine.low %v1076, %v1084
        %v1102 = vcombine.high %v1076, %v1084
        %v1104 = vunpack.c.l.s4 1934713408
        %v1105 = vunpack.c.0.s8 %v1104
        %v1106 = vlaneseq
        %v1107 = vshrl.u32 %v1106, 7
        %v1108 = vsub.s32 %v1105, %v1107
        %v1109 = vrot.slane %v1101, %v1108
        %v1111 = vunpack.c.l.s4 1934713408
        %v1112 = vunpack.c.0.s8 %v1111
        %v1113 = vlaneseq
        %v1114 = vshrl.u32 %v1113, 7
        %v1115 = vsub.s32 %v1112, %v1114
        %v1116 = vrot.slane %v1102, %v1115
        %v1117 = vcombine.low %v1092, %v1100
        %v1118 = vcombine.high %v1092, %v1100
        %v1120 = vunpack.c.l.s4 1934713408
        %v1121 = vunpack.c.0.s8 %v1120
        %v1122 = vlaneseq
        %v1123 = vshrl.u32 %v1122, 7
        %v1124 = vsub.s32 %v1121, %v1123
        %v1125 = vrot.slane %v1117, %v1124
        %v1127 = vunpack.c.l.s4 1934713408
        %v1128 = vunpack.c.0.s8 %v1127
        %v1129 = vlaneseq
        %v1130 = vshrl.u32 %v1129, 7
        %v1131 = vsub.s32 %v1128, %v1130
        %v1132 = vrot.slane %v1118, %v1131
        %v1133 = vcombine.low %v1109, %v1125
        %v1134 = vcombine.high %v1109, %v1125
        %v1135 = vcombine.low %v1116, %v1132
        %v1136 = vcombine.high %v1116, %v1132
        %v1137 = vpack.c.bf16 %v1133, %v1133
        %v1138 = vpack.c.bf16 %v1134, %v1134
        %v1139 = vpack.c.bf16 %v1135, %v1135
        %v1140 = vpack.c.bf16 %v1136, %v1136
        %s1141 = smul.u32 %s31, 4
        %s1142 = smul.addr %s1141, 4
        %s1143 = scalar_lea.vmem [#allocation2], %s1142
        %vm1144 = vcmask 125952
        %1145 = vst.msk [vmem:[%s1143] sm:$0xf] %vm1144, %v987
        %1146 = vst.msk [vmem:[%s1143 + $0x4] sm:$0xf] %vm1144, %v988
        %1147 = vst.msk [vmem:[%s1143 + $0x8] sm:$0xf] %vm1144, %v989
        %1148 = vst.msk [vmem:[%s1143 + $0xc] sm:$0xf] %vm1144, %v990
        %s1149 = smul.addr %s1141, 4
        %s1150 = scalar_lea.vmem [#allocation3], %s1149
        %1151 = vst.msk [vmem:[%s1150] sm:$0xf] %vm1144, %v1137
        %1152 = vst.msk [vmem:[%s1150 + $0x4] sm:$0xf] %vm1144, %v1138
        %1153 = vst.msk [vmem:[%s1150 + $0x8] sm:$0xf] %vm1144, %v1139
        %1154 = vst.msk [vmem:[%s1150 + $0xc] sm:$0xf] %vm1144, %v1140
        %vm1155 = vcmask 7168
        %1156 = vst.msk [vmem:[#allocation4] sm:$0xff] %vm1155, -1e+30
        %1157 = vst.msk [vmem:[#allocation4 + $0x8] sm:$0xff] %vm1155, -1e+30
        %1158 = vst.msk [vmem:[#allocation4 + $0x10] sm:$0xff] %vm1155, -1e+30
        %1159 = vst.msk [vmem:[#allocation4 + $0x18] sm:$0xff] %vm1155, -1e+30
        %1160 = vst.msk [vmem:[#allocation5] sm:$0xff] %vm1155, 0.0
        %1161 = vst.msk [vmem:[#allocation5 + $0x8] sm:$0xff] %vm1155, 0.0
        %1162 = vst.msk [vmem:[#allocation5 + $0x10] sm:$0xff] %vm1155, 0.0
        %1163 = vst.msk [vmem:[#allocation5 + $0x18] sm:$0xff] %vm1155, 0.0
        %vm1164 = vcmask 130048
        %1165 = vst.msk [vmem:[#allocation6] sm:$0xff] %vm1164, 0.0
        %1166 = vst.msk [vmem:[#allocation6 + $0x8] sm:$0xff] %vm1164, 0.0
        %1167 = vst.msk [vmem:[#allocation6 + $0x10] sm:$0xff] %vm1164, 0.0
        %1168 = vst.msk [vmem:[#allocation6 + $0x18] sm:$0xff] %vm1164, 0.0
        // While loop
        $region69: #{tpu_custom_call.1} parent=67 // loop_pre_header
          _
        $region70: #{tpu_custom_call.1} parent=67 // loop_header
          %s1170 = sphi 0, %s1172
          %p1171 = scmp.ge.s32.totalorder %s1170, %s31
        $region71: #{tpu_custom_call.1} parent=67 // loop_header_branch
          %1174 = sbr.rel (%p1171) target = $region75
        $region72: #{tpu_custom_call.1} parent=67 // loop_body
          %s1175 = smul.u32 %s1170, 4
          %s1176 = smul.addr %s1175, 4
          %s1177 = scalar_lea.vmem [#allocation2], %s1176
          %v1178 = vld [vmem:[%s1177] sm:$0xf]
          %v1179 = vld [vmem:[%s1177 + $0x4] sm:$0xf]
          %v1180 = vld [vmem:[%s1177 + $0x8] sm:$0xf]
          %v1181 = vld [vmem:[%s1177 + $0xc] sm:$0xf]
          %s1182 = smul.addr %s1175, 4
          %s1183 = scalar_lea.vmem [#allocation3], %s1182
          %v1184 = vld [vmem:[%s1183] sm:$0xf]
          %v1185 = vld [vmem:[%s1183 + $0x4] sm:$0xf]
          %v1186 = vld [vmem:[%s1183 + $0x8] sm:$0xf]
          %v1187 = vld [vmem:[%s1183 + $0xc] sm:$0xf]
          %v1189 = vsel %vm1164, %v837, 0
          %v1192 = vsel %vm1164, %v1178, 0
          %1194 = vmatprep.subr.bf16.mxu0 0
          %1195 = vmatpush1.bf16.xpose.msra.mxu0 0
          %1196 = vmatprep.subr.bf16.mxu0 0
          %1197 = vmatpush1.bf16.xpose.msra.mxu0 0
          %1198 = vmatprep.subr.bf16.mxu0 0
          %1199 = vmatpush1.bf16.xpose.msra.mxu0 0
          %1200 = vmatprep.subr.bf16.mxu0 0
          %1201 = vmatpush1.bf16.xpose.msra.mxu0 0
          %1202 = vmatprep.subr.bf16.mxu0 0
          %1203 = vmatpush1.bf16.xpose.msra.mxu0 0
          %1204 = vmatprep.subr.bf16.mxu0 0
          %1205 = vmatpush1.bf16.xpose.msra.mxu0 0
          %1206 = vmatprep.subr.bf16.mxu0 0
          %1207 = vmatpush1.bf16.xpose.msra.mxu0 0
          %1208 = vmatprep.subr.bf16.mxu0 0
          %1209 = vmatpush1.bf16.xpose.msra.mxu0 %v1192
          %1210 = vmatprep.subr.bf16.mxu0 0
          %1211 = vmatpush2.bf16.xpose.msra.mxu0 0
          %1212 = vmatprep.subr.bf16.mxu0 0
          %1213 = vmatpush2.bf16.xpose.msra.mxu0 0
          %1214 = vmatprep.subr.bf16.mxu0 0
          %1215 = vmatpush2.bf16.xpose.msra.mxu0 0
          %1216 = vmatprep.subr.bf16.mxu0 0
          %1217 = vmatpush2.bf16.xpose.msra.mxu0 0
          %1218 = vmatprep.subr.bf16.mxu0 0
          %1219 = vmatpush2.bf16.xpose.msra.mxu0 0
          %1220 = vmatprep.subr.bf16.mxu0 0
          %1221 = vmatpush2.bf16.xpose.msra.mxu0 0
          %1222 = vmatprep.subr.bf16.mxu0 0
          %1223 = vmatpush2.bf16.xpose.msra.mxu0 0
          %1224 = vmatprep.subr.bf16.mxu0 0
          %1225 = vmatpush2.bf16.xpose.msra.mxu0 0
          %1226 = vmatprep.mubr.bf16.mxu0 0
          %1227 = vmatmul.mubr.bf16.gmra.mxu0 %v1189
          %v1228 = vpop.f32.mrf.mxu0
          %v1229 = vadd.f32 0.0, %v1228
          %v1230 = vpop.f32.mrf.mxu0
          %v1231 = vpop.f32.mrf.mxu0
          %v1232 = vpop.f32.mrf.mxu0
          %1233 = vdwg.mxu0
          %v1235 = vsel %vm1164, %v838, 0
          %v1238 = vsel %vm1164, %v1179, 0
          %1240 = vmatprep.subr.bf16.mxu0 0
          %1241 = vmatpush1.bf16.xpose.msra.mxu0 0
          %1242 = vmatprep.subr.bf16.mxu0 0
          %1243 = vmatpush1.bf16.xpose.msra.mxu0 0
          %1244 = vmatprep.subr.bf16.mxu0 0
          %1245 = vmatpush1.bf16.xpose.msra.mxu0 0
          %1246 = vmatprep.subr.bf16.mxu0 0
          %1247 = vmatpush1.bf16.xpose.msra.mxu0 0
          %1248 = vmatprep.subr.bf16.mxu0 0
          %1249 = vmatpush1.bf16.xpose.msra.mxu0 0
          %1250 = vmatprep.subr.bf16.mxu0 0
          %1251 = vmatpush1.bf16.xpose.msra.mxu0 0
          %1252 = vmatprep.subr.bf16.mxu0 0
          %1253 = vmatpush1.bf16.xpose.msra.mxu0 0
          %1254 = vmatprep.subr.bf16.mxu0 0
          %1255 = vmatpush1.bf16.xpose.msra.mxu0 %v1238
          %1256 = vmatprep.subr.bf16.mxu0 0
          %1257 = vmatpush2.bf16.xpose.msra.mxu0 0
          %1258 = vmatprep.subr.bf16.mxu0 0
          %1259 = vmatpush2.bf16.xpose.msra.mxu0 0
          %1260 = vmatprep.subr.bf16.mxu0 0
          %1261 = vmatpush2.bf16.xpose.msra.mxu0 0
          %1262 = vmatprep.subr.bf16.mxu0 0
          %1263 = vmatpush2.bf16.xpose.msra.mxu0 0
          %1264 = vmatprep.subr.bf16.mxu0 0
          %1265 = vmatpush2.bf16.xpose.msra.mxu0 0
          %1266 = vmatprep.subr.bf16.mxu0 0
          %1267 = vmatpush2.bf16.xpose.msra.mxu0 0
          %1268 = vmatprep.subr.bf16.mxu0 0
          %1269 = vmatpush2.bf16.xpose.msra.mxu0 0
          %1270 = vmatprep.subr.bf16.mxu0 0
          %1271 = vmatpush2.bf16.xpose.msra.mxu0 0
          %1272 = vmatprep.mubr.bf16.mxu0 0
          %1273 = vmatmul.mubr.bf16.gmra.mxu0 %v1235
          %v1274 = vpop.f32.mrf.mxu0
          %v1275 = vadd.f32 0.0, %v1274
          %v1276 = vpop.f32.mrf.mxu0
          %v1277 = vpop.f32.mrf.mxu0
          %v1278 = vpop.f32.mrf.mxu0
          %1279 = vdwg.mxu0
          %v1281 = vsel %vm1164, %v839, 0
          %v1284 = vsel %vm1164, %v1180, 0
          %1286 = vmatprep.subr.bf16.mxu0 0
          %1287 = vmatpush1.bf16.xpose.msra.mxu0 0
          %1288 = vmatprep.subr.bf16.mxu0 0
          %1289 = vmatpush1.bf16.xpose.msra.mxu0 0
          %1290 = vmatprep.subr.bf16.mxu0 0
          %1291 = vmatpush1.bf16.xpose.msra.mxu0 0
          %1292 = vmatprep.subr.bf16.mxu0 0
          %1293 = vmatpush1.bf16.xpose.msra.mxu0 0
          %1294 = vmatprep.subr.bf16.mxu0 0
          %1295 = vmatpush1.bf16.xpose.msra.mxu0 0
          %1296 = vmatprep.subr.bf16.mxu0 0
          %1297 = vmatpush1.bf16.xpose.msra.mxu0 0
          %1298 = vmatprep.subr.bf16.mxu0 0
          %1299 = vmatpush1.bf16.xpose.msra.mxu0 0
          %1300 = vmatprep.subr.bf16.mxu0 0
          %1301 = vmatpush1.bf16.xpose.msra.mxu0 %v1284
          %1302 = vmatprep.subr.bf16.mxu0 0
          %1303 = vmatpush2.bf16.xpose.msra.mxu0 0
          %1304 = vmatprep.subr.bf16.mxu0 0
          %1305 = vmatpush2.bf16.xpose.msra.mxu0 0
          %1306 = vmatprep.subr.bf16.mxu0 0
          %1307 = vmatpush2.bf16.xpose.msra.mxu0 0
          %1308 = vmatprep.subr.bf16.mxu0 0
          %1309 = vmatpush2.bf16.xpose.msra.mxu0 0
          %1310 = vmatprep.subr.bf16.mxu0 0
          %1311 = vmatpush2.bf16.xpose.msra.mxu0 0
          %1312 = vmatprep.subr.bf16.mxu0 0
          %1313 = vmatpush2.bf16.xpose.msra.mxu0 0
          %1314 = vmatprep.subr.bf16.mxu0 0
          %1315 = vmatpush2.bf16.xpose.msra.mxu0 0
          %1316 = vmatprep.subr.bf16.mxu0 0
          %1317 = vmatpush2.bf16.xpose.msra.mxu0 0
          %1318 = vmatprep.mubr.bf16.mxu0 0
          %1319 = vmatmul.mubr.bf16.gmra.mxu0 %v1281
          %v1320 = vpop.f32.mrf.mxu0
          %v1321 = vadd.f32 0.0, %v1320
          %v1322 = vpop.f32.mrf.mxu0
          %v1323 = vpop.f32.mrf.mxu0
          %v1324 = vpop.f32.mrf.mxu0
          %1325 = vdwg.mxu0
          %v1327 = vsel %vm1164, %v840, 0
          %v1330 = vsel %vm1164, %v1181, 0
          %1332 = vmatprep.subr.bf16.mxu0 0
          %1333 = vmatpush1.bf16.xpose.msra.mxu0 0
          %1334 = vmatprep.subr.bf16.mxu0 0
          %1335 = vmatpush1.bf16.xpose.msra.mxu0 0
          %1336 = vmatprep.subr.bf16.mxu0 0
          %1337 = vmatpush1.bf16.xpose.msra.mxu0 0
          %1338 = vmatprep.subr.bf16.mxu0 0
          %1339 = vmatpush1.bf16.xpose.msra.mxu0 0
          %1340 = vmatprep.subr.bf16.mxu0 0
          %1341 = vmatpush1.bf16.xpose.msra.mxu0 0
          %1342 = vmatprep.subr.bf16.mxu0 0
          %1343 = vmatpush1.bf16.xpose.msra.mxu0 0
          %1344 = vmatprep.subr.bf16.mxu0 0
          %1345 = vmatpush1.bf16.xpose.msra.mxu0 0
          %1346 = vmatprep.subr.bf16.mxu0 0
          %1347 = vmatpush1.bf16.xpose.msra.mxu0 %v1330
          %1348 = vmatprep.subr.bf16.mxu0 0
          %1349 = vmatpush2.bf16.xpose.msra.mxu0 0
          %1350 = vmatprep.subr.bf16.mxu0 0
          %1351 = vmatpush2.bf16.xpose.msra.mxu0 0
          %1352 = vmatprep.subr.bf16.mxu0 0
          %1353 = vmatpush2.bf16.xpose.msra.mxu0 0
          %1354 = vmatprep.subr.bf16.mxu0 0
          %1355 = vmatpush2.bf16.xpose.msra.mxu0 0
          %1356 = vmatprep.subr.bf16.mxu0 0
          %1357 = vmatpush2.bf16.xpose.msra.mxu0 0
          %1358 = vmatprep.subr.bf16.mxu0 0
          %1359 = vmatpush2.bf16.xpose.msra.mxu0 0
          %1360 = vmatprep.subr.bf16.mxu0 0
          %1361 = vmatpush2.bf16.xpose.msra.mxu0 0
          %1362 = vmatprep.subr.bf16.mxu0 0
          %1363 = vmatpush2.bf16.xpose.msra.mxu0 0
          %1364 = vmatprep.mubr.bf16.mxu0 0
          %1365 = vmatmul.mubr.bf16.gmra.mxu0 %v1327
          %v1366 = vpop.f32.mrf.mxu0
          %v1367 = vadd.f32 0.0, %v1366
          %v1368 = vpop.f32.mrf.mxu0
          %v1369 = vpop.f32.mrf.mxu0
          %v1370 = vpop.f32.mrf.mxu0
          %1371 = vdwg.mxu0
          %v1372 = vld [vmem:[#allocation4] sm:$0xff]
          %v1373 = vld [vmem:[#allocation4 + $0x8] sm:$0xff]
          %v1374 = vld [vmem:[#allocation4 + $0x10] sm:$0xff]
          %v1375 = vld [vmem:[#allocation4 + $0x18] sm:$0xff]
          %vm1376 = vcmask 64512
          %v1377 = vsel %vm1376, %v1229, -inf
          %1378 = vmax.xlane.f32.xlu0 %v1377
          %v1379 = vpop.xlane.xlu0 %1378
          %v1380 = vsel %vm1376, %v1275, -inf
          %1381 = vmax.xlane.f32.xlu0 %v1380
          %v1382 = vpop.xlane.xlu0 %1381
          %v1383 = vsel %vm1376, %v1321, -inf
          %1384 = vmax.xlane.f32.xlu0 %v1383
          %v1385 = vpop.xlane.xlu0 %1384
          %v1386 = vsel %vm1376, %v1367, -inf
          %1387 = vmax.xlane.f32.xlu0 %v1386
          %v1388 = vpop.xlane.xlu0 %1387
          %v1389 = vmax.f32 %v1372, %v1379
          %v1390 = vmax.f32 %v1373, %v1382
          %v1391 = vmax.f32 %v1374, %v1385
          %v1392 = vmax.f32 %v1375, %v1388
          %v1393 = vsub.f32 %v1372, %v1389
          %v1394 = vsub.f32 %v1373, %v1390
          %v1395 = vsub.f32 %v1374, %v1391
          %v1396 = vsub.f32 %v1375, %v1392
          %v1397 = vmul.f32 %v1393, 1.442695
          %v1398 = vpow.pop %v1397
          %v1399 = vmul.f32 %v1394, 1.442695
          %v1400 = vpow.pop %v1399
          %v1401 = vmul.f32 %v1395, 1.442695
          %v1402 = vpow.pop %v1401
          %v1403 = vmul.f32 %v1396, 1.442695
          %v1404 = vpow.pop %v1403
          %1406 = vset.pattern.permute.xlu0 0
          %1407 = vperm.xlu0 %1406, %v1389
          %v1408 = vpop.permute.xlu0 %1407
          %1411 = vset.pattern.permute.xlu0 0
          %1412 = vperm.xlu0 %1411, %v1390
          %v1413 = vpop.permute.xlu0 %1412
          %1416 = vset.pattern.permute.xlu0 0
          %1417 = vperm.xlu0 %1416, %v1391
          %v1418 = vpop.permute.xlu0 %1417
          %1421 = vset.pattern.permute.xlu0 0
          %1422 = vperm.xlu0 %1421, %v1392
          %v1423 = vpop.permute.xlu0 %1422
          %v1425 = vsub.f32 %v1229, %v1408
          %v1426 = vsub.f32 %v1275, %v1413
          %v1427 = vsub.f32 %v1321, %v1418
          %v1428 = vsub.f32 %v1367, %v1423
          %v1429 = vmul.f32 %v1425, 1.442695
          %v1430 = vpow.pop %v1429
          %v1431 = vmul.f32 %v1426, 1.442695
          %v1432 = vpow.pop %v1431
          %v1433 = vmul.f32 %v1427, 1.442695
          %v1434 = vpow.pop %v1433
          %v1435 = vmul.f32 %v1428, 1.442695
          %v1436 = vpow.pop %v1435
          %v1437 = vld [vmem:[#allocation5] sm:$0xff]
          %v1438 = vld [vmem:[#allocation5 + $0x8] sm:$0xff]
          %v1439 = vld [vmem:[#allocation5 + $0x10] sm:$0xff]
          %v1440 = vld [vmem:[#allocation5 + $0x18] sm:$0xff]
          %v1441 = vmul.f32 %v1398, %v1437
          %v1442 = vmul.f32 %v1400, %v1438
          %v1443 = vmul.f32 %v1402, %v1439
          %v1444 = vmul.f32 %v1404, %v1440
          %v1445 = vsel %vm1376, %v1430, 0.0
          %1446 = vadd.xlane.f32.xlu0 %v1445
          %v1447 = vpop.xlane.xlu0 %1446
          %v1448 = vsel %vm1376, %v1432, 0.0
          %1449 = vadd.xlane.f32.xlu0 %v1448
          %v1450 = vpop.xlane.xlu0 %1449
          %v1451 = vsel %vm1376, %v1434, 0.0
          %1452 = vadd.xlane.f32.xlu0 %v1451
          %v1453 = vpop.xlane.xlu0 %1452
          %v1454 = vsel %vm1376, %v1436, 0.0
          %1455 = vadd.xlane.f32.xlu0 %v1454
          %v1456 = vpop.xlane.xlu0 %1455
          %v1457 = vadd.f32 %v1441, %v1447
          %v1458 = vadd.f32 %v1442, %v1450
          %v1459 = vadd.f32 %v1443, %v1453
          %v1460 = vadd.f32 %v1444, %v1456
          %1461 = vst.msk [vmem:[#allocation5] sm:$0xff] %vm1155, %v1457
          %1462 = vst.msk [vmem:[#allocation5 + $0x8] sm:$0xff] %vm1155, %v1458
          %1463 = vst.msk [vmem:[#allocation5 + $0x10] sm:$0xff] %vm1155, %v1459
          %1464 = vst.msk [vmem:[#allocation5 + $0x18] sm:$0xff] %vm1155, %v1460
          %v1465 = vld [vmem:[#allocation6] sm:$0xff]
          %v1466 = vld [vmem:[#allocation6 + $0x8] sm:$0xff]
          %v1467 = vld [vmem:[#allocation6 + $0x10] sm:$0xff]
          %v1468 = vld [vmem:[#allocation6 + $0x18] sm:$0xff]
          %1470 = vset.pattern.permute.xlu0 0
          %1471 = vperm.xlu0 %1470, %v1398
          %v1472 = vpop.permute.xlu0 %1471
          %1475 = vset.pattern.permute.xlu0 0
          %1476 = vperm.xlu0 %1475, %v1400
          %v1477 = vpop.permute.xlu0 %1476
          %1480 = vset.pattern.permute.xlu0 0
          %1481 = vperm.xlu0 %1480, %v1402
          %v1482 = vpop.permute.xlu0 %1481
          %1485 = vset.pattern.permute.xlu0 0
          %1486 = vperm.xlu0 %1485, %v1404
          %v1487 = vpop.permute.xlu0 %1486
          %v1489 = vmul.f32 %v1472, %v1465
          %v1490 = vmul.f32 %v1477, %v1466
          %v1491 = vmul.f32 %v1482, %v1467
          %v1492 = vmul.f32 %v1487, %v1468
          %v1493 = vpack.c.bf16 %v1430, %v1430
          %v1494 = vpack.c.bf16 %v1432, %v1432
          %v1495 = vpack.c.bf16 %v1434, %v1434
          %v1496 = vpack.c.bf16 %v1436, %v1436
          %v1498 = vsel %vm1376, %v1493, 0
          %vm1500 = vcmask 1043456
          %v1502 = vsel %vm1500, %v1184, 0
          %1504 = vmatprep.subr.bf16.mxu0 0
          %1505 = vmatpush1.bf16.msra.mxu0 0
          %1506 = vmatprep.subr.bf16.mxu0 0
          %1507 = vmatpush1.bf16.msra.mxu0 0
          %1508 = vmatprep.subr.bf16.mxu0 0
          %1509 = vmatpush1.bf16.msra.mxu0 0
          %1510 = vmatprep.subr.bf16.mxu0 0
          %1511 = vmatpush1.bf16.msra.mxu0 0
          %1512 = vmatprep.subr.bf16.mxu0 0
          %1513 = vmatpush1.bf16.msra.mxu0 0
          %1514 = vmatprep.subr.bf16.mxu0 0
          %1515 = vmatpush1.bf16.msra.mxu0 0
          %1516 = vmatprep.subr.bf16.mxu0 0
          %1517 = vmatpush1.bf16.msra.mxu0 0
          %1518 = vmatprep.subr.bf16.mxu0 0
          %1519 = vmatpush1.bf16.msra.mxu0 %v1502
          %1520 = vmatprep.subr.bf16.mxu0 0
          %1521 = vmatpush2.bf16.msra.mxu0 0
          %1522 = vmatprep.subr.bf16.mxu0 0
          %1523 = vmatpush2.bf16.msra.mxu0 0
          %1524 = vmatprep.subr.bf16.mxu0 0
          %1525 = vmatpush2.bf16.msra.mxu0 0
          %1526 = vmatprep.subr.bf16.mxu0 0
          %1527 = vmatpush2.bf16.msra.mxu0 0
          %1528 = vmatprep.subr.bf16.mxu0 0
          %1529 = vmatpush2.bf16.msra.mxu0 0
          %1530 = vmatprep.subr.bf16.mxu0 0
          %1531 = vmatpush2.bf16.msra.mxu0 0
          %1532 = vmatprep.subr.bf16.mxu0 0
          %1533 = vmatpush2.bf16.msra.mxu0 0
          %1534 = vmatprep.subr.bf16.mxu0 0
          %1535 = vmatpush2.bf16.msra.mxu0 0
          %1536 = vmatprep.mubr.bf16.mxu0 0
          %1537 = vmatmul.mubr.bf16.gmra.mxu0 %v1498
          %v1538 = vpop.f32.mrf.mxu0
          %v1539 = vadd.f32 0.0, %v1538
          %v1540 = vpop.f32.mrf.mxu0
          %v1541 = vpop.f32.mrf.mxu0
          %v1542 = vpop.f32.mrf.mxu0
          %1543 = vdwg.mxu0
          %v1545 = vsel %vm1376, %v1494, 0
          %v1548 = vsel %vm1500, %v1185, 0
          %1550 = vmatprep.subr.bf16.mxu0 0
          %1551 = vmatpush1.bf16.msra.mxu0 0
          %1552 = vmatprep.subr.bf16.mxu0 0
          %1553 = vmatpush1.bf16.msra.mxu0 0
          %1554 = vmatprep.subr.bf16.mxu0 0
          %1555 = vmatpush1.bf16.msra.mxu0 0
          %1556 = vmatprep.subr.bf16.mxu0 0
          %1557 = vmatpush1.bf16.msra.mxu0 0
          %1558 = vmatprep.subr.bf16.mxu0 0
          %1559 = vmatpush1.bf16.msra.mxu0 0
          %1560 = vmatprep.subr.bf16.mxu0 0
          %1561 = vmatpush1.bf16.msra.mxu0 0
          %1562 = vmatprep.subr.bf16.mxu0 0
          %1563 = vmatpush1.bf16.msra.mxu0 0
          %1564 = vmatprep.subr.bf16.mxu0 0
          %1565 = vmatpush1.bf16.msra.mxu0 %v1548
          %1566 = vmatprep.subr.bf16.mxu0 0
          %1567 = vmatpush2.bf16.msra.mxu0 0
          %1568 = vmatprep.subr.bf16.mxu0 0
          %1569 = vmatpush2.bf16.msra.mxu0 0
          %1570 = vmatprep.subr.bf16.mxu0 0
          %1571 = vmatpush2.bf16.msra.mxu0 0
          %1572 = vmatprep.subr.bf16.mxu0 0
          %1573 = vmatpush2.bf16.msra.mxu0 0
          %1574 = vmatprep.subr.bf16.mxu0 0
          %1575 = vmatpush2.bf16.msra.mxu0 0
          %1576 = vmatprep.subr.bf16.mxu0 0
          %1577 = vmatpush2.bf16.msra.mxu0 0
          %1578 = vmatprep.subr.bf16.mxu0 0
          %1579 = vmatpush2.bf16.msra.mxu0 0
          %1580 = vmatprep.subr.bf16.mxu0 0
          %1581 = vmatpush2.bf16.msra.mxu0 0
          %1582 = vmatprep.mubr.bf16.mxu0 0
          %1583 = vmatmul.mubr.bf16.gmra.mxu0 %v1545
          %v1584 = vpop.f32.mrf.mxu0
          %v1585 = vadd.f32 0.0, %v1584
          %v1586 = vpop.f32.mrf.mxu0
          %v1587 = vpop.f32.mrf.mxu0
          %v1588 = vpop.f32.mrf.mxu0
          %1589 = vdwg.mxu0
          %v1591 = vsel %vm1376, %v1495, 0
          %v1594 = vsel %vm1500, %v1186, 0
          %1596 = vmatprep.subr.bf16.mxu0 0
          %1597 = vmatpush1.bf16.msra.mxu0 0
          %1598 = vmatprep.subr.bf16.mxu0 0
          %1599 = vmatpush1.bf16.msra.mxu0 0
          %1600 = vmatprep.subr.bf16.mxu0 0
          %1601 = vmatpush1.bf16.msra.mxu0 0
          %1602 = vmatprep.subr.bf16.mxu0 0
          %1603 = vmatpush1.bf16.msra.mxu0 0
          %1604 = vmatprep.subr.bf16.mxu0 0
          %1605 = vmatpush1.bf16.msra.mxu0 0
          %1606 = vmatprep.subr.bf16.mxu0 0
          %1607 = vmatpush1.bf16.msra.mxu0 0
          %1608 = vmatprep.subr.bf16.mxu0 0
          %1609 = vmatpush1.bf16.msra.mxu0 0
          %1610 = vmatprep.subr.bf16.mxu0 0
          %1611 = vmatpush1.bf16.msra.mxu0 %v1594
          %1612 = vmatprep.subr.bf16.mxu0 0
          %1613 = vmatpush2.bf16.msra.mxu0 0
          %1614 = vmatprep.subr.bf16.mxu0 0
          %1615 = vmatpush2.bf16.msra.mxu0 0
          %1616 = vmatprep.subr.bf16.mxu0 0
          %1617 = vmatpush2.bf16.msra.mxu0 0
          %1618 = vmatprep.subr.bf16.mxu0 0
          %1619 = vmatpush2.bf16.msra.mxu0 0
          %1620 = vmatprep.subr.bf16.mxu0 0
          %1621 = vmatpush2.bf16.msra.mxu0 0
          %1622 = vmatprep.subr.bf16.mxu0 0
          %1623 = vmatpush2.bf16.msra.mxu0 0
          %1624 = vmatprep.subr.bf16.mxu0 0
          %1625 = vmatpush2.bf16.msra.mxu0 0
          %1626 = vmatprep.subr.bf16.mxu0 0
          %1627 = vmatpush2.bf16.msra.mxu0 0
          %1628 = vmatprep.mubr.bf16.mxu0 0
          %1629 = vmatmul.mubr.bf16.gmra.mxu0 %v1591
          %v1630 = vpop.f32.mrf.mxu0
          %v1631 = vadd.f32 0.0, %v1630
          %v1632 = vpop.f32.mrf.mxu0
          %v1633 = vpop.f32.mrf.mxu0
          %v1634 = vpop.f32.mrf.mxu0
          %1635 = vdwg.mxu0
          %v1637 = vsel %vm1376, %v1496, 0
          %v1640 = vsel %vm1500, %v1187, 0
          %1642 = vmatprep.subr.bf16.mxu0 0
          %1643 = vmatpush1.bf16.msra.mxu0 0
          %1644 = vmatprep.subr.bf16.mxu0 0
          %1645 = vmatpush1.bf16.msra.mxu0 0
          %1646 = vmatprep.subr.bf16.mxu0 0
          %1647 = vmatpush1.bf16.msra.mxu0 0
          %1648 = vmatprep.subr.bf16.mxu0 0
          %1649 = vmatpush1.bf16.msra.mxu0 0
          %1650 = vmatprep.subr.bf16.mxu0 0
          %1651 = vmatpush1.bf16.msra.mxu0 0
          %1652 = vmatprep.subr.bf16.mxu0 0
          %1653 = vmatpush1.bf16.msra.mxu0 0
          %1654 = vmatprep.subr.bf16.mxu0 0
          %1655 = vmatpush1.bf16.msra.mxu0 0
          %1656 = vmatprep.subr.bf16.mxu0 0
          %1657 = vmatpush1.bf16.msra.mxu0 %v1640
          %1658 = vmatprep.subr.bf16.mxu0 0
          %1659 = vmatpush2.bf16.msra.mxu0 0
          %1660 = vmatprep.subr.bf16.mxu0 0
          %1661 = vmatpush2.bf16.msra.mxu0 0
          %1662 = vmatprep.subr.bf16.mxu0 0
          %1663 = vmatpush2.bf16.msra.mxu0 0
          %1664 = vmatprep.subr.bf16.mxu0 0
          %1665 = vmatpush2.bf16.msra.mxu0 0
          %1666 = vmatprep.subr.bf16.mxu0 0
          %1667 = vmatpush2.bf16.msra.mxu0 0
          %1668 = vmatprep.subr.bf16.mxu0 0
          %1669 = vmatpush2.bf16.msra.mxu0 0
          %1670 = vmatprep.subr.bf16.mxu0 0
          %1671 = vmatpush2.bf16.msra.mxu0 0
          %1672 = vmatprep.subr.bf16.mxu0 0
          %1673 = vmatpush2.bf16.msra.mxu0 0
          %1674 = vmatprep.mubr.bf16.mxu0 0
          %1675 = vmatmul.mubr.bf16.gmra.mxu0 %v1637
          %v1676 = vpop.f32.mrf.mxu0
          %v1677 = vadd.f32 0.0, %v1676
          %v1678 = vpop.f32.mrf.mxu0
          %v1679 = vpop.f32.mrf.mxu0
          %v1680 = vpop.f32.mrf.mxu0
          %1681 = vdwg.mxu0
          %v1682 = vadd.f32 %v1489, %v1539
          %v1683 = vadd.f32 %v1490, %v1585
          %v1684 = vadd.f32 %v1491, %v1631
          %v1685 = vadd.f32 %v1492, %v1677
          %1686 = vst.msk [vmem:[#allocation6] sm:$0xff] %vm1164, %v1682
          %1687 = vst.msk [vmem:[#allocation6 + $0x8] sm:$0xff] %vm1164, %v1683
          %1688 = vst.msk [vmem:[#allocation6 + $0x10] sm:$0xff] %vm1164, %v1684
          %1689 = vst.msk [vmem:[#allocation6 + $0x18] sm:$0xff] %vm1164, %v1685
          %1690 = vst.msk [vmem:[#allocation4] sm:$0xff] %vm1155, %v1389
          %1691 = vst.msk [vmem:[#allocation4 + $0x8] sm:$0xff] %vm1155, %v1390
          %1692 = vst.msk [vmem:[#allocation4 + $0x10] sm:$0xff] %vm1155, %v1391
          %1693 = vst.msk [vmem:[#allocation4 + $0x18] sm:$0xff] %vm1155, %v1392
        $region73: #{tpu_custom_call.1} parent=67 // loop_footer
          %s1172 = sadd.s32 %s1170, 1
        $region74: #{tpu_custom_call.1} parent=67 // loop_footer_branch
          %1169 = sbr.rel target = $region70
        $region75: #{tpu_custom_call.1} parent=67 // loop_exit
          _
        %v1695 = vsel %vm1164, %v837, 0
        %v1698 = vsel %vm1164, %v987, 0
        %1700 = vmatprep.subr.bf16.mxu0 0
        %1701 = vmatpush1.bf16.xpose.msra.mxu0 0
        %1702 = vmatprep.subr.bf16.mxu0 0
        %1703 = vmatpush1.bf16.xpose.msra.mxu0 0
        %1704 = vmatprep.subr.bf16.mxu0 0
        %1705 = vmatpush1.bf16.xpose.msra.mxu0 0
        %1706 = vmatprep.subr.bf16.mxu0 0
        %1707 = vmatpush1.bf16.xpose.msra.mxu0 0
        %1708 = vmatprep.subr.bf16.mxu0 0
        %1709 = vmatpush1.bf16.xpose.msra.mxu0 0
        %1710 = vmatprep.subr.bf16.mxu0 0
        %1711 = vmatpush1.bf16.xpose.msra.mxu0 0
        %1712 = vmatprep.subr.bf16.mxu0 0
        %1713 = vmatpush1.bf16.xpose.msra.mxu0 0
        %1714 = vmatprep.subr.bf16.mxu0 0
        %1715 = vmatpush1.bf16.xpose.msra.mxu0 %v1698
        %1716 = vmatprep.subr.bf16.mxu0 0
        %1717 = vmatpush2.bf16.xpose.msra.mxu0 0
        %1718 = vmatprep.subr.bf16.mxu0 0
        %1719 = vmatpush2.bf16.xpose.msra.mxu0 0
        %1720 = vmatprep.subr.bf16.mxu0 0
        %1721 = vmatpush2.bf16.xpose.msra.mxu0 0
        %1722 = vmatprep.subr.bf16.mxu0 0
        %1723 = vmatpush2.bf16.xpose.msra.mxu0 0
        %1724 = vmatprep.subr.bf16.mxu0 0
        %1725 = vmatpush2.bf16.xpose.msra.mxu0 0
        %1726 = vmatprep.subr.bf16.mxu0 0
        %1727 = vmatpush2.bf16.xpose.msra.mxu0 0
        %1728 = vmatprep.subr.bf16.mxu0 0
        %1729 = vmatpush2.bf16.xpose.msra.mxu0 0
        %1730 = vmatprep.subr.bf16.mxu0 0
        %1731 = vmatpush2.bf16.xpose.msra.mxu0 0
        %1732 = vmatprep.mubr.bf16.mxu0 0
        %1733 = vmatmul.mubr.bf16.gmra.mxu0 %v1695
        %v1734 = vpop.f32.mrf.mxu0
        %v1735 = vadd.f32 0.0, %v1734
        %v1736 = vpop.f32.mrf.mxu0
        %v1737 = vpop.f32.mrf.mxu0
        %v1738 = vpop.f32.mrf.mxu0
        %1739 = vdwg.mxu0
        %v1741 = vsel %vm1164, %v838, 0
        %v1744 = vsel %vm1164, %v988, 0
        %1746 = vmatprep.subr.bf16.mxu0 0
        %1747 = vmatpush1.bf16.xpose.msra.mxu0 0
        %1748 = vmatprep.subr.bf16.mxu0 0
        %1749 = vmatpush1.bf16.xpose.msra.mxu0 0
        %1750 = vmatprep.subr.bf16.mxu0 0
        %1751 = vmatpush1.bf16.xpose.msra.mxu0 0
        %1752 = vmatprep.subr.bf16.mxu0 0
        %1753 = vmatpush1.bf16.xpose.msra.mxu0 0
        %1754 = vmatprep.subr.bf16.mxu0 0
        %1755 = vmatpush1.bf16.xpose.msra.mxu0 0
        %1756 = vmatprep.subr.bf16.mxu0 0
        %1757 = vmatpush1.bf16.xpose.msra.mxu0 0
        %1758 = vmatprep.subr.bf16.mxu0 0
        %1759 = vmatpush1.bf16.xpose.msra.mxu0 0
        %1760 = vmatprep.subr.bf16.mxu0 0
        %1761 = vmatpush1.bf16.xpose.msra.mxu0 %v1744
        %1762 = vmatprep.subr.bf16.mxu0 0
        %1763 = vmatpush2.bf16.xpose.msra.mxu0 0
        %1764 = vmatprep.subr.bf16.mxu0 0
        %1765 = vmatpush2.bf16.xpose.msra.mxu0 0
        %1766 = vmatprep.subr.bf16.mxu0 0
        %1767 = vmatpush2.bf16.xpose.msra.mxu0 0
        %1768 = vmatprep.subr.bf16.mxu0 0
        %1769 = vmatpush2.bf16.xpose.msra.mxu0 0
        %1770 = vmatprep.subr.bf16.mxu0 0
        %1771 = vmatpush2.bf16.xpose.msra.mxu0 0
        %1772 = vmatprep.subr.bf16.mxu0 0
        %1773 = vmatpush2.bf16.xpose.msra.mxu0 0
        %1774 = vmatprep.subr.bf16.mxu0 0
        %1775 = vmatpush2.bf16.xpose.msra.mxu0 0
        %1776 = vmatprep.subr.bf16.mxu0 0
        %1777 = vmatpush2.bf16.xpose.msra.mxu0 0
        %1778 = vmatprep.mubr.bf16.mxu0 0
        %1779 = vmatmul.mubr.bf16.gmra.mxu0 %v1741
        %v1780 = vpop.f32.mrf.mxu0
        %v1781 = vadd.f32 0.0, %v1780
        %v1782 = vpop.f32.mrf.mxu0
        %v1783 = vpop.f32.mrf.mxu0
        %v1784 = vpop.f32.mrf.mxu0
        %1785 = vdwg.mxu0
        %v1787 = vsel %vm1164, %v839, 0
        %v1790 = vsel %vm1164, %v989, 0
        %1792 = vmatprep.subr.bf16.mxu0 0
        %1793 = vmatpush1.bf16.xpose.msra.mxu0 0
        %1794 = vmatprep.subr.bf16.mxu0 0
        %1795 = vmatpush1.bf16.xpose.msra.mxu0 0
        %1796 = vmatprep.subr.bf16.mxu0 0
        %1797 = vmatpush1.bf16.xpose.msra.mxu0 0
        %1798 = vmatprep.subr.bf16.mxu0 0
        %1799 = vmatpush1.bf16.xpose.msra.mxu0 0
        %1800 = vmatprep.subr.bf16.mxu0 0
        %1801 = vmatpush1.bf16.xpose.msra.mxu0 0
        %1802 = vmatprep.subr.bf16.mxu0 0
        %1803 = vmatpush1.bf16.xpose.msra.mxu0 0
        %1804 = vmatprep.subr.bf16.mxu0 0
        %1805 = vmatpush1.bf16.xpose.msra.mxu0 0
        %1806 = vmatprep.subr.bf16.mxu0 0
        %1807 = vmatpush1.bf16.xpose.msra.mxu0 %v1790
        %1808 = vmatprep.subr.bf16.mxu0 0
        %1809 = vmatpush2.bf16.xpose.msra.mxu0 0
        %1810 = vmatprep.subr.bf16.mxu0 0
        %1811 = vmatpush2.bf16.xpose.msra.mxu0 0
        %1812 = vmatprep.subr.bf16.mxu0 0
        %1813 = vmatpush2.bf16.xpose.msra.mxu0 0
        %1814 = vmatprep.subr.bf16.mxu0 0
        %1815 = vmatpush2.bf16.xpose.msra.mxu0 0
        %1816 = vmatprep.subr.bf16.mxu0 0
        %1817 = vmatpush2.bf16.xpose.msra.mxu0 0
        %1818 = vmatprep.subr.bf16.mxu0 0
        %1819 = vmatpush2.bf16.xpose.msra.mxu0 0
        %1820 = vmatprep.subr.bf16.mxu0 0
        %1821 = vmatpush2.bf16.xpose.msra.mxu0 0
        %1822 = vmatprep.subr.bf16.mxu0 0
        %1823 = vmatpush2.bf16.xpose.msra.mxu0 0
        %1824 = vmatprep.mubr.bf16.mxu0 0
        %1825 = vmatmul.mubr.bf16.gmra.mxu0 %v1787
        %v1826 = vpop.f32.mrf.mxu0
        %v1827 = vadd.f32 0.0, %v1826
        %v1828 = vpop.f32.mrf.mxu0
        %v1829 = vpop.f32.mrf.mxu0
        %v1830 = vpop.f32.mrf.mxu0
        %1831 = vdwg.mxu0
        %v1833 = vsel %vm1164, %v840, 0
        %v1836 = vsel %vm1164, %v990, 0
        %1838 = vmatprep.subr.bf16.mxu0 0
        %1839 = vmatpush1.bf16.xpose.msra.mxu0 0
        %1840 = vmatprep.subr.bf16.mxu0 0
        %1841 = vmatpush1.bf16.xpose.msra.mxu0 0
        %1842 = vmatprep.subr.bf16.mxu0 0
        %1843 = vmatpush1.bf16.xpose.msra.mxu0 0
        %1844 = vmatprep.subr.bf16.mxu0 0
        %1845 = vmatpush1.bf16.xpose.msra.mxu0 0
        %1846 = vmatprep.subr.bf16.mxu0 0
        %1847 = vmatpush1.bf16.xpose.msra.mxu0 0
        %1848 = vmatprep.subr.bf16.mxu0 0
        %1849 = vmatpush1.bf16.xpose.msra.mxu0 0
        %1850 = vmatprep.subr.bf16.mxu0 0
        %1851 = vmatpush1.bf16.xpose.msra.mxu0 0
        %1852 = vmatprep.subr.bf16.mxu0 0
        %1853 = vmatpush1.bf16.xpose.msra.mxu0 %v1836
        %1854 = vmatprep.subr.bf16.mxu0 0
        %1855 = vmatpush2.bf16.xpose.msra.mxu0 0
        %1856 = vmatprep.subr.bf16.mxu0 0
        %1857 = vmatpush2.bf16.xpose.msra.mxu0 0
        %1858 = vmatprep.subr.bf16.mxu0 0
        %1859 = vmatpush2.bf16.xpose.msra.mxu0 0
        %1860 = vmatprep.subr.bf16.mxu0 0
        %1861 = vmatpush2.bf16.xpose.msra.mxu0 0
        %1862 = vmatprep.subr.bf16.mxu0 0
        %1863 = vmatpush2.bf16.xpose.msra.mxu0 0
        %1864 = vmatprep.subr.bf16.mxu0 0
        %1865 = vmatpush2.bf16.xpose.msra.mxu0 0
        %1866 = vmatprep.subr.bf16.mxu0 0
        %1867 = vmatpush2.bf16.xpose.msra.mxu0 0
        %1868 = vmatprep.subr.bf16.mxu0 0
        %1869 = vmatpush2.bf16.xpose.msra.mxu0 0
        %1870 = vmatprep.mubr.bf16.mxu0 0
        %1871 = vmatmul.mubr.bf16.gmra.mxu0 %v1833
        %v1872 = vpop.f32.mrf.mxu0
        %v1873 = vadd.f32 0.0, %v1872
        %v1874 = vpop.f32.mrf.mxu0
        %v1875 = vpop.f32.mrf.mxu0
        %v1876 = vpop.f32.mrf.mxu0
        %1877 = vdwg.mxu0
        %v1878 = vlaneseq
        %v1879 = vshrl.u32 %v1878, 7
        %v1880 = vlaneseq
        %v1881 = vand.u32 %v1880, 127
        %vm1882 = vcmp.ge.s32.totalorder %v1879, %v1881
        %v1883 = vsel %vm1882, 1, 0
        %vm1884 = vcmp.eq.s32.totalorder %v1883, 1
        %v1885 = vsel %vm1884, %v1735, -1e+30
        %v1886 = vsel %vm1884, %v1781, -1e+30
        %v1887 = vsel %vm1884, %v1827, -1e+30
        %v1888 = vsel %vm1884, %v1873, -1e+30
        %v1889 = vld [vmem:[#allocation4] sm:$0xff]
        %v1890 = vld [vmem:[#allocation4 + $0x8] sm:$0xff]
        %v1891 = vld [vmem:[#allocation4 + $0x10] sm:$0xff]
        %v1892 = vld [vmem:[#allocation4 + $0x18] sm:$0xff]
        %vm1893 = vcmask 64512
        %v1894 = vsel %vm1893, %v1885, -inf
        %1895 = vmax.xlane.f32.xlu0 %v1894
        %v1896 = vpop.xlane.xlu0 %1895
        %v1897 = vsel %vm1893, %v1886, -inf
        %1898 = vmax.xlane.f32.xlu0 %v1897
        %v1899 = vpop.xlane.xlu0 %1898
        %v1900 = vsel %vm1893, %v1887, -inf
        %1901 = vmax.xlane.f32.xlu0 %v1900
        %v1902 = vpop.xlane.xlu0 %1901
        %v1903 = vsel %vm1893, %v1888, -inf
        %1904 = vmax.xlane.f32.xlu0 %v1903
        %v1905 = vpop.xlane.xlu0 %1904
        %v1906 = vmax.f32 %v1889, %v1896
        %v1907 = vmax.f32 %v1890, %v1899
        %v1908 = vmax.f32 %v1891, %v1902
        %v1909 = vmax.f32 %v1892, %v1905
        %v1910 = vsub.f32 %v1889, %v1906
        %v1911 = vsub.f32 %v1890, %v1907
        %v1912 = vsub.f32 %v1891, %v1908
        %v1913 = vsub.f32 %v1892, %v1909
        %v1914 = vmul.f32 %v1910, 1.442695
        %v1915 = vpow.pop %v1914
        %v1916 = vmul.f32 %v1911, 1.442695
        %v1917 = vpow.pop %v1916
        %v1918 = vmul.f32 %v1912, 1.442695
        %v1919 = vpow.pop %v1918
        %v1920 = vmul.f32 %v1913, 1.442695
        %v1921 = vpow.pop %v1920
        %1923 = vset.pattern.permute.xlu0 0
        %1924 = vperm.xlu0 %1923, %v1906
        %v1925 = vpop.permute.xlu0 %1924
        %1928 = vset.pattern.permute.xlu0 0
        %1929 = vperm.xlu0 %1928, %v1907
        %v1930 = vpop.permute.xlu0 %1929
        %1933 = vset.pattern.permute.xlu0 0
        %1934 = vperm.xlu0 %1933, %v1908
        %v1935 = vpop.permute.xlu0 %1934
        %1938 = vset.pattern.permute.xlu0 0
        %1939 = vperm.xlu0 %1938, %v1909
        %v1940 = vpop.permute.xlu0 %1939
        %v1942 = vsub.f32 %v1885, %v1925
        %v1943 = vsub.f32 %v1886, %v1930
        %v1944 = vsub.f32 %v1887, %v1935
        %v1945 = vsub.f32 %v1888, %v1940
        %v1946 = vmul.f32 %v1942, 1.442695
        %v1947 = vpow.pop %v1946
        %v1948 = vmul.f32 %v1943, 1.442695
        %v1949 = vpow.pop %v1948
        %v1950 = vmul.f32 %v1944, 1.442695
        %v1951 = vpow.pop %v1950
        %v1952 = vmul.f32 %v1945, 1.442695
        %v1953 = vpow.pop %v1952
        %v1954 = vld [vmem:[#allocation5] sm:$0xff]
        %v1955 = vld [vmem:[#allocation5 + $0x8] sm:$0xff]
        %v1956 = vld [vmem:[#allocation5 + $0x10] sm:$0xff]
        %v1957 = vld [vmem:[#allocation5 + $0x18] sm:$0xff]
        %v1958 = vmul.f32 %v1915, %v1954
        %v1959 = vmul.f32 %v1917, %v1955
        %v1960 = vmul.f32 %v1919, %v1956
        %v1961 = vmul.f32 %v1921, %v1957
        %v1962 = vsel %vm1893, %v1947, 0.0
        %1963 = vadd.xlane.f32.xlu0 %v1962
        %v1964 = vpop.xlane.xlu0 %1963
        %v1965 = vsel %vm1893, %v1949, 0.0
        %1966 = vadd.xlane.f32.xlu0 %v1965
        %v1967 = vpop.xlane.xlu0 %1966
        %v1968 = vsel %vm1893, %v1951, 0.0
        %1969 = vadd.xlane.f32.xlu0 %v1968
        %v1970 = vpop.xlane.xlu0 %1969
        %v1971 = vsel %vm1893, %v1953, 0.0
        %1972 = vadd.xlane.f32.xlu0 %v1971
        %v1973 = vpop.xlane.xlu0 %1972
        %v1974 = vadd.f32 %v1958, %v1964
        %v1975 = vadd.f32 %v1959, %v1967
        %v1976 = vadd.f32 %v1960, %v1970
        %v1977 = vadd.f32 %v1961, %v1973
        %v1978 = vld [vmem:[#allocation6] sm:$0xff]
        %v1979 = vld [vmem:[#allocation6 + $0x8] sm:$0xff]
        %v1980 = vld [vmem:[#allocation6 + $0x10] sm:$0xff]
        %v1981 = vld [vmem:[#allocation6 + $0x18] sm:$0xff]
        %1983 = vset.pattern.permute.xlu0 0
        %1984 = vperm.xlu0 %1983, %v1915
        %v1985 = vpop.permute.xlu0 %1984
        %1988 = vset.pattern.permute.xlu0 0
        %1989 = vperm.xlu0 %1988, %v1917
        %v1990 = vpop.permute.xlu0 %1989
        %1993 = vset.pattern.permute.xlu0 0
        %1994 = vperm.xlu0 %1993, %v1919
        %v1995 = vpop.permute.xlu0 %1994
        %1998 = vset.pattern.permute.xlu0 0
        %1999 = vperm.xlu0 %1998, %v1921
        %v2000 = vpop.permute.xlu0 %1999
        %v2002 = vmul.f32 %v1985, %v1978
        %v2003 = vmul.f32 %v1990, %v1979
        %v2004 = vmul.f32 %v1995, %v1980
        %v2005 = vmul.f32 %v2000, %v1981
        %v2006 = vpack.c.bf16 %v1947, %v1947
        %v2007 = vpack.c.bf16 %v1949, %v1949
        %v2008 = vpack.c.bf16 %v1951, %v1951
        %v2009 = vpack.c.bf16 %v1953, %v1953
        %v2011 = vsel %vm1893, %v2006, 0
        %vm2013 = vcmask 1043456
        %v2015 = vsel %vm2013, %v1137, 0
        %2017 = vmatprep.subr.bf16.mxu0 0
        %2018 = vmatpush1.bf16.msra.mxu0 0
        %2019 = vmatprep.subr.bf16.mxu0 0
        %2020 = vmatpush1.bf16.msra.mxu0 0
        %2021 = vmatprep.subr.bf16.mxu0 0
        %2022 = vmatpush1.bf16.msra.mxu0 0
        %2023 = vmatprep.subr.bf16.mxu0 0
        %2024 = vmatpush1.bf16.msra.mxu0 0
        %2025 = vmatprep.subr.bf16.mxu0 0
        %2026 = vmatpush1.bf16.msra.mxu0 0
        %2027 = vmatprep.subr.bf16.mxu0 0
        %2028 = vmatpush1.bf16.msra.mxu0 0
        %2029 = vmatprep.subr.bf16.mxu0 0
        %2030 = vmatpush1.bf16.msra.mxu0 0
        %2031 = vmatprep.subr.bf16.mxu0 0
        %2032 = vmatpush1.bf16.msra.mxu0 %v2015
        %2033 = vmatprep.subr.bf16.mxu0 0
        %2034 = vmatpush2.bf16.msra.mxu0 0
        %2035 = vmatprep.subr.bf16.mxu0 0
        %2036 = vmatpush2.bf16.msra.mxu0 0
        %2037 = vmatprep.subr.bf16.mxu0 0
        %2038 = vmatpush2.bf16.msra.mxu0 0
        %2039 = vmatprep.subr.bf16.mxu0 0
        %2040 = vmatpush2.bf16.msra.mxu0 0
        %2041 = vmatprep.subr.bf16.mxu0 0
        %2042 = vmatpush2.bf16.msra.mxu0 0
        %2043 = vmatprep.subr.bf16.mxu0 0
        %2044 = vmatpush2.bf16.msra.mxu0 0
        %2045 = vmatprep.subr.bf16.mxu0 0
        %2046 = vmatpush2.bf16.msra.mxu0 0
        %2047 = vmatprep.subr.bf16.mxu0 0
        %2048 = vmatpush2.bf16.msra.mxu0 0
        %2049 = vmatprep.mubr.bf16.mxu0 0
        %2050 = vmatmul.mubr.bf16.gmra.mxu0 %v2011
        %v2051 = vpop.f32.mrf.mxu0
        %v2052 = vadd.f32 0.0, %v2051
        %v2053 = vpop.f32.mrf.mxu0
        %v2054 = vpop.f32.mrf.mxu0
        %v2055 = vpop.f32.mrf.mxu0
        %2056 = vdwg.mxu0
        %v2058 = vsel %vm1893, %v2007, 0
        %v2061 = vsel %vm2013, %v1138, 0
        %2063 = vmatprep.subr.bf16.mxu0 0
        %2064 = vmatpush1.bf16.msra.mxu0 0
        %2065 = vmatprep.subr.bf16.mxu0 0
        %2066 = vmatpush1.bf16.msra.mxu0 0
        %2067 = vmatprep.subr.bf16.mxu0 0
        %2068 = vmatpush1.bf16.msra.mxu0 0
        %2069 = vmatprep.subr.bf16.mxu0 0
        %2070 = vmatpush1.bf16.msra.mxu0 0
        %2071 = vmatprep.subr.bf16.mxu0 0
        %2072 = vmatpush1.bf16.msra.mxu0 0
        %2073 = vmatprep.subr.bf16.mxu0 0
        %2074 = vmatpush1.bf16.msra.mxu0 0
        %2075 = vmatprep.subr.bf16.mxu0 0
        %2076 = vmatpush1.bf16.msra.mxu0 0
        %2077 = vmatprep.subr.bf16.mxu0 0
        %2078 = vmatpush1.bf16.msra.mxu0 %v2061
        %2079 = vmatprep.subr.bf16.mxu0 0
        %2080 = vmatpush2.bf16.msra.mxu0 0
        %2081 = vmatprep.subr.bf16.mxu0 0
        %2082 = vmatpush2.bf16.msra.mxu0 0
        %2083 = vmatprep.subr.bf16.mxu0 0
        %2084 = vmatpush2.bf16.msra.mxu0 0
        %2085 = vmatprep.subr.bf16.mxu0 0
        %2086 = vmatpush2.bf16.msra.mxu0 0
        %2087 = vmatprep.subr.bf16.mxu0 0
        %2088 = vmatpush2.bf16.msra.mxu0 0
        %2089 = vmatprep.subr.bf16.mxu0 0
        %2090 = vmatpush2.bf16.msra.mxu0 0
        %2091 = vmatprep.subr.bf16.mxu0 0
        %2092 = vmatpush2.bf16.msra.mxu0 0
        %2093 = vmatprep.subr.bf16.mxu0 0
        %2094 = vmatpush2.bf16.msra.mxu0 0
        %2095 = vmatprep.mubr.bf16.mxu0 0
        %2096 = vmatmul.mubr.bf16.gmra.mxu0 %v2058
        %v2097 = vpop.f32.mrf.mxu0
        %v2098 = vadd.f32 0.0, %v2097
        %v2099 = vpop.f32.mrf.mxu0
        %v2100 = vpop.f32.mrf.mxu0
        %v2101 = vpop.f32.mrf.mxu0
        %2102 = vdwg.mxu0
        %v2104 = vsel %vm1893, %v2008, 0
        %v2107 = vsel %vm2013, %v1139, 0
        %2109 = vmatprep.subr.bf16.mxu0 0
        %2110 = vmatpush1.bf16.msra.mxu0 0
        %2111 = vmatprep.subr.bf16.mxu0 0
        %2112 = vmatpush1.bf16.msra.mxu0 0
        %2113 = vmatprep.subr.bf16.mxu0 0
        %2114 = vmatpush1.bf16.msra.mxu0 0
        %2115 = vmatprep.subr.bf16.mxu0 0
        %2116 = vmatpush1.bf16.msra.mxu0 0
        %2117 = vmatprep.subr.bf16.mxu0 0
        %2118 = vmatpush1.bf16.msra.mxu0 0
        %2119 = vmatprep.subr.bf16.mxu0 0
        %2120 = vmatpush1.bf16.msra.mxu0 0
        %2121 = vmatprep.subr.bf16.mxu0 0
        %2122 = vmatpush1.bf16.msra.mxu0 0
        %2123 = vmatprep.subr.bf16.mxu0 0
        %2124 = vmatpush1.bf16.msra.mxu0 %v2107
        %2125 = vmatprep.subr.bf16.mxu0 0
        %2126 = vmatpush2.bf16.msra.mxu0 0
        %2127 = vmatprep.subr.bf16.mxu0 0
        %2128 = vmatpush2.bf16.msra.mxu0 0
        %2129 = vmatprep.subr.bf16.mxu0 0
        %2130 = vmatpush2.bf16.msra.mxu0 0
        %2131 = vmatprep.subr.bf16.mxu0 0
        %2132 = vmatpush2.bf16.msra.mxu0 0
        %2133 = vmatprep.subr.bf16.mxu0 0
        %2134 = vmatpush2.bf16.msra.mxu0 0
        %2135 = vmatprep.subr.bf16.mxu0 0
        %2136 = vmatpush2.bf16.msra.mxu0 0
        %2137 = vmatprep.subr.bf16.mxu0 0
        %2138 = vmatpush2.bf16.msra.mxu0 0
        %2139 = vmatprep.subr.bf16.mxu0 0
        %2140 = vmatpush2.bf16.msra.mxu0 0
        %2141 = vmatprep.mubr.bf16.mxu0 0
        %2142 = vmatmul.mubr.bf16.gmra.mxu0 %v2104
        %v2143 = vpop.f32.mrf.mxu0
        %v2144 = vadd.f32 0.0, %v2143
        %v2145 = vpop.f32.mrf.mxu0
        %v2146 = vpop.f32.mrf.mxu0
        %v2147 = vpop.f32.mrf.mxu0
        %2148 = vdwg.mxu0
        %v2150 = vsel %vm1893, %v2009, 0
        %v2153 = vsel %vm2013, %v1140, 0
        %2155 = vmatprep.subr.bf16.mxu0 0
        %2156 = vmatpush1.bf16.msra.mxu0 0
        %2157 = vmatprep.subr.bf16.mxu0 0
        %2158 = vmatpush1.bf16.msra.mxu0 0
        %2159 = vmatprep.subr.bf16.mxu0 0
        %2160 = vmatpush1.bf16.msra.mxu0 0
        %2161 = vmatprep.subr.bf16.mxu0 0
        %2162 = vmatpush1.bf16.msra.mxu0 0
        %2163 = vmatprep.subr.bf16.mxu0 0
        %2164 = vmatpush1.bf16.msra.mxu0 0
        %2165 = vmatprep.subr.bf16.mxu0 0
        %2166 = vmatpush1.bf16.msra.mxu0 0
        %2167 = vmatprep.subr.bf16.mxu0 0
        %2168 = vmatpush1.bf16.msra.mxu0 0
        %2169 = vmatprep.subr.bf16.mxu0 0
        %2170 = vmatpush1.bf16.msra.mxu0 %v2153
        %2171 = vmatprep.subr.bf16.mxu0 0
        %2172 = vmatpush2.bf16.msra.mxu0 0
        %2173 = vmatprep.subr.bf16.mxu0 0
        %2174 = vmatpush2.bf16.msra.mxu0 0
        %2175 = vmatprep.subr.bf16.mxu0 0
        %2176 = vmatpush2.bf16.msra.mxu0 0
        %2177 = vmatprep.subr.bf16.mxu0 0
        %2178 = vmatpush2.bf16.msra.mxu0 0
        %2179 = vmatprep.subr.bf16.mxu0 0
        %2180 = vmatpush2.bf16.msra.mxu0 0
        %2181 = vmatprep.subr.bf16.mxu0 0
        %2182 = vmatpush2.bf16.msra.mxu0 0
        %2183 = vmatprep.subr.bf16.mxu0 0
        %2184 = vmatpush2.bf16.msra.mxu0 0
        %2185 = vmatprep.subr.bf16.mxu0 0
        %2186 = vmatpush2.bf16.msra.mxu0 0
        %2187 = vmatprep.mubr.bf16.mxu0 0
        %2188 = vmatmul.mubr.bf16.gmra.mxu0 %v2150
        %v2189 = vpop.f32.mrf.mxu0
        %v2190 = vadd.f32 0.0, %v2189
        %v2191 = vpop.f32.mrf.mxu0
        %v2192 = vpop.f32.mrf.mxu0
        %v2193 = vpop.f32.mrf.mxu0
        %2194 = vdwg.mxu0
        %v2195 = vadd.f32 %v2002, %v2052
        %v2196 = vadd.f32 %v2003, %v2098
        %v2197 = vadd.f32 %v2004, %v2144
        %v2198 = vadd.f32 %v2005, %v2190
        %v2199 = vrcp.pop %v1974
        %v2200 = vrcp.pop %v1975
        %v2201 = vrcp.pop %v1976
        %v2202 = vrcp.pop %v1977
        %2204 = vset.pattern.permute.xlu0 0
        %2205 = vperm.xlu0 %2204, %v2199
        %v2206 = vpop.permute.xlu0 %2205
        %2209 = vset.pattern.permute.xlu0 0
        %2210 = vperm.xlu0 %2209, %v2200
        %v2211 = vpop.permute.xlu0 %2210
        %2214 = vset.pattern.permute.xlu0 0
        %2215 = vperm.xlu0 %2214, %v2201
        %v2216 = vpop.permute.xlu0 %2215
        %2219 = vset.pattern.permute.xlu0 0
        %2220 = vperm.xlu0 %2219, %v2202
        %v2221 = vpop.permute.xlu0 %2220
        %v2223 = vmul.f32 %v2195, %v2206
        %v2224 = vmul.f32 %v2196, %v2211
        %v2225 = vmul.f32 %v2197, %v2216
        %v2226 = vmul.f32 %v2198, %v2221
        %v2227 = vcombine.low %v2223, %v2225
        %v2228 = vcombine.high %v2223, %v2225
        %v2230 = vunpack.c.l.s4 1983009808
        %v2231 = vunpack.c.0.s8 %v2230
        %v2232 = vlaneseq
        %v2233 = vshrl.u32 %v2232, 7
        %v2234 = vsub.s32 %v2231, %v2233
        %v2235 = vrot.slane %v2227, %v2234
        %v2237 = vunpack.c.l.s4 1983009808
        %v2238 = vunpack.c.0.s8 %v2237
        %v2239 = vlaneseq
        %v2240 = vshrl.u32 %v2239, 7
        %v2241 = vsub.s32 %v2238, %v2240
        %v2242 = vrot.slane %v2228, %v2241
        %v2243 = vcombine.low %v2224, %v2226
        %v2244 = vcombine.high %v2224, %v2226
        %v2246 = vunpack.c.l.s4 1983009808
        %v2247 = vunpack.c.0.s8 %v2246
        %v2248 = vlaneseq
        %v2249 = vshrl.u32 %v2248, 7
        %v2250 = vsub.s32 %v2247, %v2249
        %v2251 = vrot.slane %v2243, %v2250
        %v2253 = vunpack.c.l.s4 1983009808
        %v2254 = vunpack.c.0.s8 %v2253
        %v2255 = vlaneseq
        %v2256 = vshrl.u32 %v2255, 7
        %v2257 = vsub.s32 %v2254, %v2256
        %v2258 = vrot.slane %v2244, %v2257
        %v2259 = vcombine.low %v2235, %v2251
        %v2260 = vcombine.high %v2235, %v2251
        %v2262 = vunpack.c.l.s4 1934713408
        %v2263 = vunpack.c.0.s8 %v2262
        %v2264 = vlaneseq
        %v2265 = vshrl.u32 %v2264, 7
        %v2266 = vsub.s32 %v2263, %v2265
        %v2267 = vrot.slane %v2259, %v2266
        %v2269 = vunpack.c.l.s4 1934713408
        %v2270 = vunpack.c.0.s8 %v2269
        %v2271 = vlaneseq
        %v2272 = vshrl.u32 %v2271, 7
        %v2273 = vsub.s32 %v2270, %v2272
        %v2274 = vrot.slane %v2260, %v2273
        %v2275 = vcombine.low %v2242, %v2258
        %v2276 = vcombine.high %v2242, %v2258
        %v2278 = vunpack.c.l.s4 1934713408
        %v2279 = vunpack.c.0.s8 %v2278
        %v2280 = vlaneseq
        %v2281 = vshrl.u32 %v2280, 7
        %v2282 = vsub.s32 %v2279, %v2281
        %v2283 = vrot.slane %v2275, %v2282
        %v2285 = vunpack.c.l.s4 1934713408
        %v2286 = vunpack.c.0.s8 %v2285
        %v2287 = vlaneseq
        %v2288 = vshrl.u32 %v2287, 7
        %v2289 = vsub.s32 %v2286, %v2288
        %v2290 = vrot.slane %v2276, %v2289
        %v2291 = vcombine.high %v2267, 0.0
        %v2292 = vcombine.high %v2274, 0.0
        %v2293 = vcombine.high %v2283, 0.0
        %v2294 = vcombine.high %v2290, 0.0
        %v2295 = vcombine.low %v2267, %v2274
        %v2297 = vunpack.c.l.s4 1983009808
        %v2298 = vunpack.c.0.s8 %v2297
        %v2299 = vlaneseq
        %v2300 = vshrl.u32 %v2299, 7
        %v2301 = vsub.s32 %v2298, %v2300
        %v2302 = vrot.slane %v2295, %v2301
        %v2303 = vcombine.low %v2291, %v2292
        %v2305 = vunpack.c.l.s4 1983009808
        %v2306 = vunpack.c.0.s8 %v2305
        %v2307 = vlaneseq
        %v2308 = vshrl.u32 %v2307, 7
        %v2309 = vsub.s32 %v2306, %v2308
        %v2310 = vrot.slane %v2303, %v2309
        %v2311 = vcombine.low %v2283, %v2290
        %v2313 = vunpack.c.l.s4 1983009808
        %v2314 = vunpack.c.0.s8 %v2313
        %v2315 = vlaneseq
        %v2316 = vshrl.u32 %v2315, 7
        %v2317 = vsub.s32 %v2314, %v2316
        %v2318 = vrot.slane %v2311, %v2317
        %v2319 = vcombine.low %v2293, %v2294
        %v2321 = vunpack.c.l.s4 1983009808
        %v2322 = vunpack.c.0.s8 %v2321
        %v2323 = vlaneseq
        %v2324 = vshrl.u32 %v2323, 7
        %v2325 = vsub.s32 %v2322, %v2324
        %v2326 = vrot.slane %v2319, %v2325
        %v2327 = vcombine.low %v2302, %v2310
        %v2328 = vcombine.high %v2302, %v2310
        %v2330 = vunpack.c.l.s4 1934713408
        %v2331 = vunpack.c.0.s8 %v2330
        %v2332 = vlaneseq
        %v2333 = vshrl.u32 %v2332, 7
        %v2334 = vsub.s32 %v2331, %v2333
        %v2335 = vrot.slane %v2327, %v2334
        %v2337 = vunpack.c.l.s4 1934713408
        %v2338 = vunpack.c.0.s8 %v2337
        %v2339 = vlaneseq
        %v2340 = vshrl.u32 %v2339, 7
        %v2341 = vsub.s32 %v2338, %v2340
        %v2342 = vrot.slane %v2328, %v2341
        %v2343 = vcombine.low %v2318, %v2326
        %v2344 = vcombine.high %v2318, %v2326
        %v2346 = vunpack.c.l.s4 1934713408
        %v2347 = vunpack.c.0.s8 %v2346
        %v2348 = vlaneseq
        %v2349 = vshrl.u32 %v2348, 7
        %v2350 = vsub.s32 %v2347, %v2349
        %v2351 = vrot.slane %v2343, %v2350
        %v2353 = vunpack.c.l.s4 1934713408
        %v2354 = vunpack.c.0.s8 %v2353
        %v2355 = vlaneseq
        %v2356 = vshrl.u32 %v2355, 7
        %v2357 = vsub.s32 %v2354, %v2356
        %v2358 = vrot.slane %v2344, %v2357
        %v2359 = vcombine.low %v2335, %v2351
        %v2360 = vcombine.high %v2335, %v2351
        %v2361 = vcombine.low %v2342, %v2358
        %v2362 = vcombine.high %v2342, %v2358
        %2364 = vrot.lane.b32.xlu0 %v2360, 16
        %v2365 = vpop.permute.xlu0 %2364
        %2368 = vrot.lane.b32.xlu0 %v2361, 32
        %v2369 = vpop.permute.xlu0 %2368
        %2372 = vrot.lane.b32.xlu0 %v2362, 48
        %v2373 = vpop.permute.xlu0 %2372
        %v2375 = vsel %vm1164, %v2359, %v2365
        %vm2376 = vcmask 261120
        %v2377 = vsel %vm2376, %v2375, %v2369
        %vm2378 = vcmask 392192
        %v2379 = vsel %vm2378, %v2377, %v2373
        %v2380 = vadd.f32 %v2379, %v438
        %v2381 = vld [vmem:[%s6] sm:$0x1]
        %v2382 = vld [vmem:[%s7] sm:$0x1]
        %v2383 = vsel %vm441, %v2380, 0.0
        %2384 = vadd.xlane.f32.xlu0 %v2383
        %v2385 = vpop.xlane.xlu0 %2384
        %v2386 = vmul.f32 %v2385, %v445
        %v2387 = vsub.f32 %v2380, %v2386
        %v2388 = vmul.f32 %v2387, %v2387
        %v2389 = vsel %vm441, %v2388, 0.0
        %2390 = vadd.xlane.f32.xlu0 %v2389
        %v2391 = vpop.xlane.xlu0 %2390
        %v2392 = vmul.f32 %v2391, %v445
        %v2393 = vadd.f32 %v2392, 1e-05
        %v2394 = vrsqrt.pop %v2393
        %v2395 = vmul.f32 %v2387, %v2394
        %v2397 = vlaneseq
        %v2398 = vshrl.u32 %v2397, 7
        %v2399 = vsub.s32 0, %v2398
        %v2400 = vrot.slane %v2381, %v2399
        %v2402 = vmul.f32 %v2395, %v2400
        %v2404 = vlaneseq
        %v2405 = vshrl.u32 %v2404, 7
        %v2406 = vsub.s32 0, %v2405
        %v2407 = vrot.slane %v2382, %v2406
        %v2409 = vadd.f32 %v2402, %v2407
        %v2410 = vpack.c.bf16 %v2409, %v2409
        %v2411 = vld [vmem:[%s8] sm:$0xf]
        %v2412 = vld [vmem:[%s8 + $0x4] sm:$0xf]
        %v2413 = vld [vmem:[%s8 + $0x8] sm:$0xf]
        %v2414 = vld [vmem:[%s8 + $0xc] sm:$0xf]
        %v2415 = vld [vmem:[%s8 + $0x10] sm:$0xf]
        %v2416 = vld [vmem:[%s8 + $0x14] sm:$0xf]
        %v2417 = vld [vmem:[%s8 + $0x18] sm:$0xf]
        %v2418 = vld [vmem:[%s8 + $0x1c] sm:$0xf]
        %v2419 = vld [vmem:[%s9] sm:$0x1]
        %v2421 = vlaneseq
        %v2422 = vshrl.u32 %v2421, 7
        %v2423 = vsub.s32 0, %v2422
        %v2424 = vrot.slane %v2419, %v2423
        %v2434 = vunpack.c.l.b16 %v2411
        %v2435 = vunpack.c.l.b16 %v2412
        %v2436 = vunpack.c.l.b16 %v2413
        %v2437 = vunpack.c.l.b16 %v2414
        %v2438 = vunpack.c.l.b16 %v2415
        %v2439 = vunpack.c.l.b16 %v2416
        %v2440 = vunpack.c.l.b16 %v2417
        %v2441 = vunpack.c.l.b16 %v2418
        %v2442 = vpack.c.b16 %v2435, %v2434
        %v2443 = vpack.c.b16 %v2437, %v2436
        %v2444 = vpack.c.b16 %v2439, %v2438
        %v2445 = vpack.c.b16 %v2441, %v2440
        %v2451 = vsel %vm441, %v2410, 0
        %2453 = vmatprep.subr.bf16.mxu0 0
        %2454 = vmatpush1.bf16.msra.mxu0 0
        %2455 = vmatprep.subr.bf16.mxu0 0
        %2456 = vmatpush1.bf16.msra.mxu0 0
        %2457 = vmatprep.subr.bf16.mxu0 0
        %2458 = vmatpush1.bf16.msra.mxu0 0
        %2459 = vmatprep.subr.bf16.mxu0 0
        %2460 = vmatpush1.bf16.msra.mxu0 0
        %2461 = vmatprep.subr.bf16.mxu0 0
        %2462 = vmatpush1.bf16.msra.mxu0 %v2445
        %2463 = vmatprep.subr.bf16.mxu0 0
        %2464 = vmatpush1.bf16.msra.mxu0 %v2444
        %2465 = vmatprep.subr.bf16.mxu0 0
        %2466 = vmatpush1.bf16.msra.mxu0 %v2443
        %2467 = vmatprep.subr.bf16.mxu0 0
        %2468 = vmatpush1.bf16.msra.mxu0 %v2442
        %2469 = vmatprep.subr.bf16.mxu0 0
        %2470 = vmatpush2.bf16.msra.mxu0 0
        %2471 = vmatprep.subr.bf16.mxu0 0
        %2472 = vmatpush2.bf16.msra.mxu0 0
        %2473 = vmatprep.subr.bf16.mxu0 0
        %2474 = vmatpush2.bf16.msra.mxu0 0
        %2475 = vmatprep.subr.bf16.mxu0 0
        %2476 = vmatpush2.bf16.msra.mxu0 0
        %2477 = vmatprep.subr.bf16.mxu0 0
        %2478 = vmatpush2.bf16.msra.mxu0 0
        %2479 = vmatprep.subr.bf16.mxu0 0
        %2480 = vmatpush2.bf16.msra.mxu0 0
        %2481 = vmatprep.subr.bf16.mxu0 0
        %2482 = vmatpush2.bf16.msra.mxu0 0
        %2483 = vmatprep.subr.bf16.mxu0 0
        %2484 = vmatpush2.bf16.msra.mxu0 0
        %2485 = vmatprep.mubr.bf16.mxu0 0
        %2486 = vmatmul.mubr.bf16.gmra.mxu0 %v2451
        %v2487 = vpop.f32.mrf.mxu0
        %v2488 = vadd.f32 %v2424, %v2487
        %v2489 = vpop.f32.mrf.mxu0
        %v2490 = vpop.f32.mrf.mxu0
        %v2491 = vpop.f32.mrf.mxu0
        %2492 = vdwg.mxu0
        %v2493 = vmax.f32 %v2488, 0.0
        %v2494 = vpack.c.bf16 %v2493, %v2493
        %v2495 = vld [vmem:[%s10] sm:$0xf]
        %v2496 = vld [vmem:[%s10 + $0x4] sm:$0xf]
        %v2497 = vld [vmem:[%s10 + $0x8] sm:$0xf]
        %v2498 = vld [vmem:[%s10 + $0xc] sm:$0xf]
        %v2499 = vld [vmem:[%s10 + $0x10] sm:$0xf]
        %v2500 = vld [vmem:[%s10 + $0x14] sm:$0xf]
        %v2501 = vld [vmem:[%s10 + $0x18] sm:$0xf]
        %v2502 = vld [vmem:[%s10 + $0x1c] sm:$0xf]
        %v2503 = vld [vmem:[%s10 + $0x20] sm:$0xf]
        %v2504 = vld [vmem:[%s10 + $0x24] sm:$0xf]
        %v2505 = vld [vmem:[%s10 + $0x28] sm:$0xf]
        %v2506 = vld [vmem:[%s10 + $0x2c] sm:$0xf]
        %v2507 = vld [vmem:[%s10 + $0x30] sm:$0xf]
        %v2508 = vld [vmem:[%s10 + $0x34] sm:$0xf]
        %v2509 = vld [vmem:[%s10 + $0x38] sm:$0xf]
        %v2510 = vld [vmem:[%s10 + $0x3c] sm:$0xf]
        %s2511 = scalar_lea.vmem %s8, 32
        %v2512 = vld [vmem:[%s2511] sm:$0xf]
        %v2513 = vld [vmem:[%s2511 + $0x4] sm:$0xf]
        %v2514 = vld [vmem:[%s2511 + $0x8] sm:$0xf]
        %v2515 = vld [vmem:[%s2511 + $0xc] sm:$0xf]
        %v2516 = vld [vmem:[%s2511 + $0x10] sm:$0xf]
        %v2517 = vld [vmem:[%s2511 + $0x14] sm:$0xf]
        %v2518 = vld [vmem:[%s2511 + $0x18] sm:$0xf]
        %v2519 = vld [vmem:[%s2511 + $0x1c] sm:$0xf]
        %s2520 = scalar_lea.vmem %s9, 1
        %v2521 = vld [vmem:[%s2520] sm:$0x1]
        %v2523 = vlaneseq
        %v2524 = vshrl.u32 %v2523, 7
        %v2525 = vsub.s32 0, %v2524
        %v2526 = vrot.slane %v2521, %v2525
        %v2536 = vunpack.c.l.b16 %v2512
        %v2537 = vunpack.c.l.b16 %v2513
        %v2538 = vunpack.c.l.b16 %v2514
        %v2539 = vunpack.c.l.b16 %v2515
        %v2540 = vunpack.c.l.b16 %v2516
        %v2541 = vunpack.c.l.b16 %v2517
        %v2542 = vunpack.c.l.b16 %v2518
        %v2543 = vunpack.c.l.b16 %v2519
        %v2544 = vpack.c.b16 %v2537, %v2536
        %v2545 = vpack.c.b16 %v2539, %v2538
        %v2546 = vpack.c.b16 %v2541, %v2540
        %v2547 = vpack.c.b16 %v2543, %v2542
        %2552 = vmatprep.subr.bf16.mxu0 0
        %2553 = vmatpush1.bf16.msra.mxu0 0
        %2554 = vmatprep.subr.bf16.mxu0 0
        %2555 = vmatpush1.bf16.msra.mxu0 0
        %2556 = vmatprep.subr.bf16.mxu0 0
        %2557 = vmatpush1.bf16.msra.mxu0 0
        %2558 = vmatprep.subr.bf16.mxu0 0
        %2559 = vmatpush1.bf16.msra.mxu0 0
        %2560 = vmatprep.subr.bf16.mxu0 0
        %2561 = vmatpush1.bf16.msra.mxu0 %v2547
        %2562 = vmatprep.subr.bf16.mxu0 0
        %2563 = vmatpush1.bf16.msra.mxu0 %v2546
        %2564 = vmatprep.subr.bf16.mxu0 0
        %2565 = vmatpush1.bf16.msra.mxu0 %v2545
        %2566 = vmatprep.subr.bf16.mxu0 0
        %2567 = vmatpush1.bf16.msra.mxu0 %v2544
        %2568 = vmatprep.subr.bf16.mxu0 0
        %2569 = vmatpush2.bf16.msra.mxu0 0
        %2570 = vmatprep.subr.bf16.mxu0 0
        %2571 = vmatpush2.bf16.msra.mxu0 0
        %2572 = vmatprep.subr.bf16.mxu0 0
        %2573 = vmatpush2.bf16.msra.mxu0 0
        %2574 = vmatprep.subr.bf16.mxu0 0
        %2575 = vmatpush2.bf16.msra.mxu0 0
        %2576 = vmatprep.subr.bf16.mxu0 0
        %2577 = vmatpush2.bf16.msra.mxu0 0
        %2578 = vmatprep.subr.bf16.mxu0 0
        %2579 = vmatpush2.bf16.msra.mxu0 0
        %2580 = vmatprep.subr.bf16.mxu0 0
        %2581 = vmatpush2.bf16.msra.mxu0 0
        %2582 = vmatprep.subr.bf16.mxu0 0
        %2583 = vmatpush2.bf16.msra.mxu0 0
        %2584 = vmatprep.mubr.bf16.mxu0 0
        %2585 = vmatmul.mubr.bf16.gmra.mxu0 %v2451
        %v2586 = vpop.f32.mrf.mxu0
        %v2587 = vadd.f32 %v2526, %v2586
        %v2588 = vpop.f32.mrf.mxu0
        %v2589 = vpop.f32.mrf.mxu0
        %v2590 = vpop.f32.mrf.mxu0
        %2591 = vdwg.mxu0
        %v2592 = vmax.f32 %v2587, 0.0
        %v2593 = vpack.c.bf16 %v2592, %v2592
        %s2594 = scalar_lea.vmem %s10, 64
        %v2595 = vld [vmem:[%s2594] sm:$0xf]
        %v2596 = vld [vmem:[%s2594 + $0x4] sm:$0xf]
        %v2597 = vld [vmem:[%s2594 + $0x8] sm:$0xf]
        %v2598 = vld [vmem:[%s2594 + $0xc] sm:$0xf]
        %v2599 = vld [vmem:[%s2594 + $0x10] sm:$0xf]
        %v2600 = vld [vmem:[%s2594 + $0x14] sm:$0xf]
        %v2601 = vld [vmem:[%s2594 + $0x18] sm:$0xf]
        %v2602 = vld [vmem:[%s2594 + $0x1c] sm:$0xf]
        %v2603 = vld [vmem:[%s2594 + $0x20] sm:$0xf]
        %v2604 = vld [vmem:[%s2594 + $0x24] sm:$0xf]
        %v2605 = vld [vmem:[%s2594 + $0x28] sm:$0xf]
        %v2606 = vld [vmem:[%s2594 + $0x2c] sm:$0xf]
        %v2607 = vld [vmem:[%s2594 + $0x30] sm:$0xf]
        %v2608 = vld [vmem:[%s2594 + $0x34] sm:$0xf]
        %v2609 = vld [vmem:[%s2594 + $0x38] sm:$0xf]
        %v2610 = vld [vmem:[%s2594 + $0x3c] sm:$0xf]
        %v2627 = vunpack.c.l.b16 %v2595
        %v2628 = vunpack.c.l.b16 %v2596
        %v2629 = vunpack.c.l.b16 %v2597
        %v2630 = vunpack.c.l.b16 %v2598
        %v2631 = vunpack.c.l.b16 %v2599
        %v2632 = vunpack.c.l.b16 %v2600
        %v2633 = vunpack.c.l.b16 %v2601
        %v2634 = vunpack.c.l.b16 %v2602
        %v2635 = vunpack.c.l.b16 %v2603
        %v2636 = vunpack.c.l.b16 %v2604
        %v2637 = vunpack.c.l.b16 %v2605
        %v2638 = vunpack.c.l.b16 %v2606
        %v2639 = vunpack.c.l.b16 %v2607
        %v2640 = vunpack.c.l.b16 %v2608
        %v2641 = vunpack.c.l.b16 %v2609
        %v2642 = vunpack.c.l.b16 %v2610
        %v2643 = vpack.c.b16 %v2628, %v2627
        %v2644 = vpack.c.b16 %v2630, %v2629
        %v2645 = vpack.c.b16 %v2632, %v2631
        %v2646 = vpack.c.b16 %v2634, %v2633
        %v2647 = vpack.c.b16 %v2636, %v2635
        %v2648 = vpack.c.b16 %v2638, %v2637
        %v2649 = vpack.c.b16 %v2640, %v2639
        %v2650 = vpack.c.b16 %v2642, %v2641
        %2659 = vmatprep.subr.bf16.mxu0 0
        %2660 = vmatpush1.bf16.msra.mxu0 %v2650
        %2661 = vmatprep.subr.bf16.mxu0 0
        %2662 = vmatpush1.bf16.msra.mxu0 %v2649
        %2663 = vmatprep.subr.bf16.mxu0 0
        %2664 = vmatpush1.bf16.msra.mxu0 %v2648
        %2665 = vmatprep.subr.bf16.mxu0 0
        %2666 = vmatpush1.bf16.msra.mxu0 %v2647
        %2667 = vmatprep.subr.bf16.mxu0 0
        %2668 = vmatpush1.bf16.msra.mxu0 %v2646
        %2669 = vmatprep.subr.bf16.mxu0 0
        %2670 = vmatpush1.bf16.msra.mxu0 %v2645
        %2671 = vmatprep.subr.bf16.mxu0 0
        %2672 = vmatpush1.bf16.msra.mxu0 %v2644
        %2673 = vmatprep.subr.bf16.mxu0 0
        %2674 = vmatpush1.bf16.msra.mxu0 %v2643
        %2675 = vmatprep.subr.bf16.mxu0 0
        %2676 = vmatpush2.bf16.msra.mxu0 0
        %2677 = vmatprep.subr.bf16.mxu0 0
        %2678 = vmatpush2.bf16.msra.mxu0 0
        %2679 = vmatprep.subr.bf16.mxu0 0
        %2680 = vmatpush2.bf16.msra.mxu0 0
        %2681 = vmatprep.subr.bf16.mxu0 0
        %2682 = vmatpush2.bf16.msra.mxu0 0
        %2683 = vmatprep.subr.bf16.mxu0 0
        %2684 = vmatpush2.bf16.msra.mxu0 0
        %2685 = vmatprep.subr.bf16.mxu0 0
        %2686 = vmatpush2.bf16.msra.mxu0 0
        %2687 = vmatprep.subr.bf16.mxu0 0
        %2688 = vmatpush2.bf16.msra.mxu0 0
        %2689 = vmatprep.subr.bf16.mxu0 0
        %2690 = vmatpush2.bf16.msra.mxu0 0
        %2691 = vmatprep.mubr.bf16.mxu0 0
        %2692 = vmatmul.mubr.bf16.gmra.mxu0 %v2593
        %v2693 = vpop.f32.mrf.mxu0
        %v2694 = vadd.f32 0.0, %v2693
        %v2695 = vpop.f32.mrf.mxu0
        %v2696 = vpop.f32.mrf.mxu0
        %v2697 = vpop.f32.mrf.mxu0
        %2698 = vdwg.mxu0
        %v2715 = vunpack.c.l.b16 %v2495
        %v2716 = vunpack.c.l.b16 %v2496
        %v2717 = vunpack.c.l.b16 %v2497
        %v2718 = vunpack.c.l.b16 %v2498
        %v2719 = vunpack.c.l.b16 %v2499
        %v2720 = vunpack.c.l.b16 %v2500
        %v2721 = vunpack.c.l.b16 %v2501
        %v2722 = vunpack.c.l.b16 %v2502
        %v2723 = vunpack.c.l.b16 %v2503
        %v2724 = vunpack.c.l.b16 %v2504
        %v2725 = vunpack.c.l.b16 %v2505
        %v2726 = vunpack.c.l.b16 %v2506
        %v2727 = vunpack.c.l.b16 %v2507
        %v2728 = vunpack.c.l.b16 %v2508
        %v2729 = vunpack.c.l.b16 %v2509
        %v2730 = vunpack.c.l.b16 %v2510
        %v2731 = vpack.c.b16 %v2716, %v2715
        %v2732 = vpack.c.b16 %v2718, %v2717
        %v2733 = vpack.c.b16 %v2720, %v2719
        %v2734 = vpack.c.b16 %v2722, %v2721
        %v2735 = vpack.c.b16 %v2724, %v2723
        %v2736 = vpack.c.b16 %v2726, %v2725
        %v2737 = vpack.c.b16 %v2728, %v2727
        %v2738 = vpack.c.b16 %v2730, %v2729
        %2747 = vmatprep.subr.bf16.mxu0 0
        %2748 = vmatpush1.bf16.msra.mxu0 %v2738
        %2749 = vmatprep.subr.bf16.mxu0 0
        %2750 = vmatpush1.bf16.msra.mxu0 %v2737
        %2751 = vmatprep.subr.bf16.mxu0 0
        %2752 = vmatpush1.bf16.msra.mxu0 %v2736
        %2753 = vmatprep.subr.bf16.mxu0 0
        %2754 = vmatpush1.bf16.msra.mxu0 %v2735
        %2755 = vmatprep.subr.bf16.mxu0 0
        %2756 = vmatpush1.bf16.msra.mxu0 %v2734
        %2757 = vmatprep.subr.bf16.mxu0 0
        %2758 = vmatpush1.bf16.msra.mxu0 %v2733
        %2759 = vmatprep.subr.bf16.mxu0 0
        %2760 = vmatpush1.bf16.msra.mxu0 %v2732
        %2761 = vmatprep.subr.bf16.mxu0 0
        %2762 = vmatpush1.bf16.msra.mxu0 %v2731
        %2763 = vmatprep.subr.bf16.mxu0 0
        %2764 = vmatpush2.bf16.msra.mxu0 0
        %2765 = vmatprep.subr.bf16.mxu0 0
        %2766 = vmatpush2.bf16.msra.mxu0 0
        %2767 = vmatprep.subr.bf16.mxu0 0
        %2768 = vmatpush2.bf16.msra.mxu0 0
        %2769 = vmatprep.subr.bf16.mxu0 0
        %2770 = vmatpush2.bf16.msra.mxu0 0
        %2771 = vmatprep.subr.bf16.mxu0 0
        %2772 = vmatpush2.bf16.msra.mxu0 0
        %2773 = vmatprep.subr.bf16.mxu0 0
        %2774 = vmatpush2.bf16.msra.mxu0 0
        %2775 = vmatprep.subr.bf16.mxu0 0
        %2776 = vmatpush2.bf16.msra.mxu0 0
        %2777 = vmatprep.subr.bf16.mxu0 0
        %2778 = vmatpush2.bf16.msra.mxu0 0
        %2779 = vmatprep.mubr.bf16.mxu0 0
        %2780 = vmatmul.mubr.bf16.gmra.mxu0 %v2494
        %v2781 = vpop.f32.mrf.mxu0
        %v2782 = vadd.f32 %v2694, %v2781
        %v2783 = vpop.f32.mrf.mxu0
        %v2784 = vpop.f32.mrf.mxu0
        %v2785 = vpop.f32.mrf.mxu0
        %2786 = vdwg.mxu0
        %v2787 = vld [vmem:[%s11] sm:$0x1]
        %v2789 = vlaneseq
        %v2790 = vshrl.u32 %v2789, 7
        %v2791 = vsub.s32 0, %v2790
        %v2792 = vrot.slane %v2787, %v2791
        %v2794 = vadd.f32 %v2782, %v2792
        %v2795 = vadd.f32 %v2794, %v2380
        %2796 = vst.msk [vmem:[%s428] sm:$0xff] %vm441, %v2795
        %s2797 = sand.u32 %s307, 1
        %s2798 = scalar_lea.sflag [#allocation8], %s2797
        %s2799 = sand.u32 %s307, 1
        %s2800 = smul.addr %s2799, 8
        %s2801 = scalar_lea.vmem [#allocation7], %s2800
        // Predicated region
        $region76: #{tpu_custom_call.1} parent=67 // pred_check
          %p2802 = pneg %p317
        $region77: #{tpu_custom_call.1} parent=67 // pred_check_branch
          %2804 = sbr.rel (%p2802) target = $region79
        $region78: #{tpu_custom_call.1} parent=67 // pred_region
          %s2806 = ssub.s32 128, 128
          %2807 = vsyncadd %s2798, %s2806
          %s2808 = smul.addr %s30, 2
          %s2809 = sadd.s32 %s31, %s2808
          %s2810 = smul.addr %s2809, 128
          %s2811 = scalar_lea.hbm %s12, %s2810
          %s2813 = sshll.u32 %s2801, 4
          %s2814 = int_to_ptr.vmem [resolvable:$true] %s2813
          %2816 = dma.vmem_to_hbm [thread:$0]  %s2814, 128, %s2811, %s2798
        $region79: #{tpu_custom_call.1} parent=67 // pred_fallthru
          _
      $region68: #{tpu_custom_call.1} parent=5 // pred_fallthru
        _
      %p2817 = scmp.le.s32.totalorder 2, %s21
      // Predicated region
      $region80: #{tpu_custom_call.1} parent=5 // pred_check
        %p2818 = pneg %p2817
      $region81: #{tpu_custom_call.1} parent=5 // pred_check_branch
        %2820 = sbr.rel (%p2818) target = $region83
      $region82: #{tpu_custom_call.1} parent=5 // pred_region
        %s2821 = ssub.s32 %s21, 2
        // Predicated region
        $region84: #{tpu_custom_call.1} parent=82 // pred_check
          %p2822 = pneg %p323
        $region85: #{tpu_custom_call.1} parent=82 // pred_check_branch
          %2824 = sbr.rel (%p2822) target = $region87
        $region86: #{tpu_custom_call.1} parent=82 // pred_region
          %s2825 = sand.u32 %s308, 1
          %s2826 = scalar_lea.sflag [#allocation8], %s2825
          %s2827 = sand.u32 %s308, 1
          %s2828 = smul.addr %s2827, 8
          %s2829 = scalar_lea.vmem [#allocation7], %s2828
          %2830 = dma.done %s2826, 128
        $region87: #{tpu_custom_call.1} parent=82 // pred_fallthru
          _
      $region83: #{tpu_custom_call.1} parent=5 // pred_fallthru
        _
    $region6: #{tpu_custom_call.1} parent=1 // loop_footer
      %s25 = sadd.s32 1, %s21
    $region7: #{tpu_custom_call.1} parent=1 // loop_footer_branch
      %20 = sbr.rel target = $region3
    $region8: #{tpu_custom_call.1} parent=1 // loop_exit
      _
    %2831 = vsyncpa [#allocation8], 1
    %s2832 = scalar_lea.sflag [#allocation8], 1
    %2833 = vsyncpa %s2832, 1

// kernel: tpu_custom_call.1
$region0: #{tpu_custom_call.1}
  #allocation0 [shape = 'u32[]', space=smem, size = 0x4, offset = 0x4, fixed_abs, tag = 'smem constant byte address 0x4 - core index']
  #allocation1 [shape = 'u32[144,128]{1,0:T(1,128)}', space=vmem, size = 0x12000, scoped, tag = 'internal scratch']
  #allocation2 [shape = 'bf16[2,4,8,16]{3,2,1,0:T(8,128)(2,1)}', space=vmem, size = 0x4000, scoped, tag = 'scratch operand']
  #allocation3 [shape = 'bf16[2,4,8,16]{3,2,1,0:T(8,128)(2,1)}', space=vmem, size = 0x4000, scoped, tag = 'scratch operand']
  #allocation4 [shape = 'f32[4,8,1]{2,1,0:T(8,128)}', space=vmem, size = 0x4000, scoped, tag = 'scratch operand']
  #allocation5 [shape = 'f32[4,8,1]{2,1,0:T(8,128)}', space=vmem, size = 0x4000, scoped, tag = 'scratch operand']
  #allocation6 [shape = 'f32[4,8,16]{2,1,0:T(8,128)}', space=vmem, size = 0x4000, scoped, tag = 'scratch operand']
  %s0 = inlined_call_operand.vmem [shape: f32[2,16,64], index: 0, kind: input, shape index: {}]
  %s1 = inlined_call_operand.vmem [shape: bf16[64,64], index: 1, kind: input, shape index: {}]
  %s2 = inlined_call_operand.vmem [shape: bf16[64,64], index: 2, kind: input, shape index: {}]
  %s3 = inlined_call_operand.vmem [shape: bf16[64,64], index: 3, kind: input, shape index: {}]
  %s4 = inlined_call_operand.vmem [shape: f32[1,64], index: 4, kind: input, shape index: {}]
  %s5 = inlined_call_operand.vmem [shape: f32[1,64], index: 5, kind: input, shape index: {}]
  %s6 = inlined_call_operand.vmem [shape: f32[1,64], index: 6, kind: input, shape index: {}]
  %s7 = inlined_call_operand.vmem [shape: f32[1,64], index: 7, kind: input, shape index: {}]
  %s8 = inlined_call_operand.vmem [shape: bf16[2,64,128], index: 8, kind: input, shape index: {}]
  %s9 = inlined_call_operand.vmem [shape: f32[2,1,128], index: 9, kind: input, shape index: {}]
  %s10 = inlined_call_operand.vmem [shape: bf16[2,128,64], index: 10, kind: input, shape index: {}]
  %s11 = inlined_call_operand.vmem [shape: f32[1,64], index: 11, kind: input, shape index: {}]
  %s12 = inlined_call_operand.hbm [shape: f32[2,16,64], index: 12, kind: output, shape index: {}]
  %s13 = sld [smem:[#allocation0]]
  $region88: #{tpu_custom_call.1} parent=0
    _
  %s15 = ssub.s32 1, %s13
  %s16 = scalar_select 0, %s15, %s13
  $region1: #{tpu_custom_call.1} parent=0
    #allocation7 [shape = 'u8[8192]{0}', space=vmem, size = 0x2000, scoped, tag = 'output window, operand 0']
    #allocation8 [shape = 's32[2]{0}', space=sflag, size = 0x8, scoped, tag = 'scoped memory for tpu_custom_call.1']
    %17 = vsyncpa [#allocation8], 0
    %s18 = scalar_lea.sflag [#allocation8], 1
    %19 = vsyncpa %s18, 0
    loop: start=0, step=1, limit=6
    $region2: #{tpu_custom_call.1} parent=1 // loop_pre_header
      _
    $region3: #{tpu_custom_call.1} parent=1 // loop_header
      %s21 = sphi 0, %s25
      %p22 = scmp.ge.s32.totalorder %s21, 6
      %s28 = sphi 0, %s40
      %s29 = sphi 0, %s36
      %s30 = sphi 0, %s28
      %s31 = sphi 0, %s29
      %s32 = sphi 0, %s30
      %s33 = sphi 0, %s31
      %s45 = sphi 0, %s47
      %s48 = sphi 0, %s45
      %s49 = sphi 0, %s48
      %s65 = sphi 0, %s49
      %s69 = sphi 0, %s69
      %s71 = sphi 0, %s69
      %s72 = sphi 0, %s71
      %s86 = sphi 0, %s72
      %s90 = sphi 0, %s90
      %s92 = sphi 0, %s90
      %s93 = sphi 0, %s92
      %s107 = sphi 0, %s93
      %s111 = sphi 0, %s111
      %s113 = sphi 0, %s111
      %s114 = sphi 0, %s113
      %s128 = sphi 0, %s114
      %s132 = sphi 0, %s132
      %s134 = sphi 0, %s132
      %s135 = sphi 0, %s134
      %s149 = sphi 0, %s135
      %s153 = sphi 0, %s153
      %s155 = sphi 0, %s153
      %s156 = sphi 0, %s155
      %s170 = sphi 0, %s156
      %s174 = sphi 0, %s174
      %s176 = sphi 0, %s174
      %s177 = sphi 0, %s176
      %s191 = sphi 0, %s177
      %s195 = sphi 0, %s195
      %s197 = sphi 0, %s195
      %s198 = sphi 0, %s197
      %s212 = sphi 0, %s198
      %s216 = sphi 0, %s216
      %s218 = sphi 0, %s216
      %s219 = sphi 0, %s218
      %s233 = sphi 0, %s219
      %s237 = sphi 0, %s237
      %s239 = sphi 0, %s237
      %s240 = sphi 0, %s239
      %s254 = sphi 0, %s240
      %s258 = sphi 0, %s258
      %s260 = sphi 0, %s258
      %s261 = sphi 0, %s260
      %s275 = sphi 0, %s261
      %s279 = sphi 0, %s279
      %s281 = sphi 0, %s279
      %s282 = sphi 0, %s281
      %s296 = sphi 0, %s282
      %s304 = sphi 0, %s306
      %s307 = sphi 0, %s304
      %s308 = sphi 0, %s307
      %s324 = sphi 0, %s308
    $region4: #{tpu_custom_call.1} parent=1 // loop_header_branch
      %24 = sbr.rel (%p22) target = $region8
    $region5: #{tpu_custom_call.1} parent=1 // loop_body
      %s26 = ssub.s32 %s21, 1
      %s27 = ssub.s32 %s21, 2
      %s34 = sadd.s32 1, %s29
      %p35 = scmp.ge.s32.totalorder %s34, 2
      %s36 = scalar_select %p35, 0, %s34
      %s37 = sadd.s32 1, %s28
      %s38 = scalar_select %p35, %s37, %s28
      %p39 = scmp.ge.s32.totalorder %s38, 2
      %s40 = scalar_select %p39, 0, %s38
      %s41 = ssub.s32 %s28, %s40
      %s42 = ssub.s32 %s29, %s36
      %s43 = sor.u32 %s41, %s42
      %p44 = scmp.eq.s32.totalorder %s43, 0
      %s46 = sadd.s32 %s45, 1
      %s47 = scalar_select %p44, %s45, %s46
      %p50 = pneg %p44
      %p51 = scmp.eq.s32.totalorder %s21, 3
      %p52 = por %p50, %p51
      %p53 = scmp.ne.s32.totalorder %s45, %s48
      %p54 = scmp.eq.s32.totalorder %s21, 0
      %p55 = por %p53, %p54
      %p56 = scmp.ne.s32.totalorder %s45, %s48
      %p57 = scmp.eq.s32.totalorder %s26, 3
      %p58 = por %p56, %p57
      %p59 = scmp.ne.s32.totalorder %s48, %s49
      %p60 = scmp.eq.s32.totalorder %s26, 0
      %p61 = por %p59, %p60
      %p62 = scmp.ne.s32.totalorder %s48, %s49
      %p63 = scmp.eq.s32.totalorder %s27, 3
      %p64 = por %p62, %p63
      %p66 = scmp.ne.s32.totalorder %s49, %s65
      %p67 = scmp.eq.s32.totalorder %s27, 0
      %p68 = por %p66, %p67
      %s70 = sadd.s32 %s69, 1
      %p73 = scmp.eq.s32.totalorder %s21, 3
      %p74 = scmp.ne.s32.totalorder %s69, %s71
      %p75 = scmp.eq.s32.totalorder %s21, 0
      %p76 = por %p74, %p75
      %p77 = scmp.ne.s32.totalorder %s69, %s71
      %p78 = scmp.eq.s32.totalorder %s26, 3
      %p79 = por %p77, %p78
      %p80 = scmp.ne.s32.totalorder %s71, %s72
      %p81 = scmp.eq.s32.totalorder %s26, 0
      %p82 = por %p80, %p81
      %p83 = scmp.ne.s32.totalorder %s71, %s72
      %p84 = scmp.eq.s32.totalorder %s27, 3
      %p85 = por %p83, %p84
      %p87 = scmp.ne.s32.totalorder %s72, %s86
      %p88 = scmp.eq.s32.totalorder %s27, 0
      %p89 = por %p87, %p88
      %s91 = sadd.s32 %s90, 1
      %p94 = scmp.eq.s32.totalorder %s21, 3
      %p95 = scmp.ne.s32.totalorder %s90, %s92
      %p96 = scmp.eq.s32.totalorder %s21, 0
      %p97 = por %p95, %p96
      %p98 = scmp.ne.s32.totalorder %s90, %s92
      %p99 = scmp.eq.s32.totalorder %s26, 3
      %p100 = por %p98, %p99
      %p101 = scmp.ne.s32.totalorder %s92, %s93
      %p102 = scmp.eq.s32.totalorder %s26, 0
      %p103 = por %p101, %p102
      %p104 = scmp.ne.s32.totalorder %s92, %s93
      %p105 = scmp.eq.s32.totalorder %s27, 3
      %p106 = por %p104, %p105
      %p108 = scmp.ne.s32.totalorder %s93, %s107
      %p109 = scmp.eq.s32.totalorder %s27, 0
      %p110 = por %p108, %p109
      %s112 = sadd.s32 %s111, 1
      %p115 = scmp.eq.s32.totalorder %s21, 3
      %p116 = scmp.ne.s32.totalorder %s111, %s113
      %p117 = scmp.eq.s32.totalorder %s21, 0
      %p118 = por %p116, %p117
      %p119 = scmp.ne.s32.totalorder %s111, %s113
      %p120 = scmp.eq.s32.totalorder %s26, 3
      %p121 = por %p119, %p120
      %p122 = scmp.ne.s32.totalorder %s113, %s114
      %p123 = scmp.eq.s32.totalorder %s26, 0
      %p124 = por %p122, %p123
      %p125 = scmp.ne.s32.totalorder %s113, %s114
      %p126 = scmp.eq.s32.totalorder %s27, 3
      %p127 = por %p125, %p126
      %p129 = scmp.ne.s32.totalorder %s114, %s128
      %p130 = scmp.eq.s32.totalorder %s27, 0
      %p131 = por %p129, %p130
      %s133 = sadd.s32 %s132, 1
      %p136 = scmp.eq.s32.totalorder %s21, 3
      %p137 = scmp.ne.s32.totalorder %s132, %s134
      %p138 = scmp.eq.s32.totalorder %s21, 0
      %p139 = por %p137, %p138
      %p140 = scmp.ne.s32.totalorder %s132, %s134
      %p141 = scmp.eq.s32.totalorder %s26, 3
      %p142 = por %p140, %p141
      %p143 = scmp.ne.s32.totalorder %s134, %s135
      %p144 = scmp.eq.s32.totalorder %s26, 0
      %p145 = por %p143, %p144
      %p146 = scmp.ne.s32.totalorder %s134, %s135
      %p147 = scmp.eq.s32.totalorder %s27, 3
      %p148 = por %p146, %p147
      %p150 = scmp.ne.s32.totalorder %s135, %s149
      %p151 = scmp.eq.s32.totalorder %s27, 0
      %p152 = por %p150, %p151
      %s154 = sadd.s32 %s153, 1
      %p157 = scmp.eq.s32.totalorder %s21, 3
      %p158 = scmp.ne.s32.totalorder %s153, %s155
      %p159 = scmp.eq.s32.totalorder %s21, 0
      %p160 = por %p158, %p159
      %p161 = scmp.ne.s32.totalorder %s153, %s155
      %p162 = scmp.eq.s32.totalorder %s26, 3
      %p163 = por %p161, %p162
      %p164 = scmp.ne.s32.totalorder %s155, %s156
      %p165 = scmp.eq.s32.totalorder %s26, 0
      %p166 = por %p164, %p165
      %p167 = scmp.ne.s32.totalorder %s155, %s156
      %p168 = scmp.eq.s32.totalorder %s27, 3
      %p169 = por %p167, %p168
      %p171 = scmp.ne.s32.totalorder %s156, %s170
      %p172 = scmp.eq.s32.totalorder %s27, 0
      %p173 = por %p171, %p172
      %s175 = sadd.s32 %s174, 1
      %p178 = scmp.eq.s32.totalorder %s21, 3
      %p179 = scmp.ne.s32.totalorder %s174, %s176
      %p180 = scmp.eq.s32.totalorder %s21, 0
      %p181 = por %p179, %p180
      %p182 = scmp.ne.s32.totalorder %s174, %s176
      %p183 = scmp.eq.s32.totalorder %s26, 3
      %p184 = por %p182, %p183
      %p185 = scmp.ne.s32.totalorder %s176, %s177
      %p186 = scmp.eq.s32.totalorder %s26, 0
      %p187 = por %p185, %p186
      %p188 = scmp.ne.s32.totalorder %s176, %s177
      %p189 = scmp.eq.s32.totalorder %s27, 3
      %p190 = por %p188, %p189
      %p192 = scmp.ne.s32.totalorder %s177, %s191
      %p193 = scmp.eq.s32.totalorder %s27, 0
      %p194 = por %p192, %p193
      %s196 = sadd.s32 %s195, 1
      %p199 = scmp.eq.s32.totalorder %s21, 3
      %p200 = scmp.ne.s32.totalorder %s195, %s197
      %p201 = scmp.eq.s32.totalorder %s21, 0
      %p202 = por %p200, %p201
      %p203 = scmp.ne.s32.totalorder %s195, %s197
      %p204 = scmp.eq.s32.totalorder %s26, 3
      %p205 = por %p203, %p204
      %p206 = scmp.ne.s32.totalorder %s197, %s198
      %p207 = scmp.eq.s32.totalorder %s26, 0
      %p208 = por %p206, %p207
      %p209 = scmp.ne.s32.totalorder %s197, %s198
      %p210 = scmp.eq.s32.totalorder %s27, 3
      %p211 = por %p209, %p210
      %p213 = scmp.ne.s32.totalorder %s198, %s212
      %p214 = scmp.eq.s32.totalorder %s27, 0
      %p215 = por %p213, %p214
      %s217 = sadd.s32 %s216, 1
      %p220 = scmp.eq.s32.totalorder %s21, 3
      %p221 = scmp.ne.s32.totalorder %s216, %s218
      %p222 = scmp.eq.s32.totalorder %s21, 0
      %p223 = por %p221, %p222
      %p224 = scmp.ne.s32.totalorder %s216, %s218
      %p225 = scmp.eq.s32.totalorder %s26, 3
      %p226 = por %p224, %p225
      %p227 = scmp.ne.s32.totalorder %s218, %s219
      %p228 = scmp.eq.s32.totalorder %s26, 0
      %p229 = por %p227, %p228
      %p230 = scmp.ne.s32.totalorder %s218, %s219
      %p231 = scmp.eq.s32.totalorder %s27, 3
      %p232 = por %p230, %p231
      %p234 = scmp.ne.s32.totalorder %s219, %s233
      %p235 = scmp.eq.s32.totalorder %s27, 0
      %p236 = por %p234, %p235
      %s238 = sadd.s32 %s237, 1
      %p241 = scmp.eq.s32.totalorder %s21, 3
      %p242 = scmp.ne.s32.totalorder %s237, %s239
      %p243 = scmp.eq.s32.totalorder %s21, 0
      %p244 = por %p242, %p243
      %p245 = scmp.ne.s32.totalorder %s237, %s239
      %p246 = scmp.eq.s32.totalorder %s26, 3
      %p247 = por %p245, %p246
      %p248 = scmp.ne.s32.totalorder %s239, %s240
      %p249 = scmp.eq.s32.totalorder %s26, 0
      %p250 = por %p248, %p249
      %p251 = scmp.ne.s32.totalorder %s239, %s240
      %p252 = scmp.eq.s32.totalorder %s27, 3
      %p253 = por %p251, %p252
      %p255 = scmp.ne.s32.totalorder %s240, %s254
      %p256 = scmp.eq.s32.totalorder %s27, 0
      %p257 = por %p255, %p256
      %s259 = sadd.s32 %s258, 1
      %p262 = scmp.eq.s32.totalorder %s21, 3
      %p263 = scmp.ne.s32.totalorder %s258, %s260
      %p264 = scmp.eq.s32.totalorder %s21, 0
      %p265 = por %p263, %p264
      %p266 = scmp.ne.s32.totalorder %s258, %s260
      %p267 = scmp.eq.s32.totalorder %s26, 3
      %p268 = por %p266, %p267
      %p269 = scmp.ne.s32.totalorder %s260, %s261
      %p270 = scmp.eq.s32.totalorder %s26, 0
      %p271 = por %p269, %p270
      %p272 = scmp.ne.s32.totalorder %s260, %s261
      %p273 = scmp.eq.s32.totalorder %s27, 3
      %p274 = por %p272, %p273
      %p276 = scmp.ne.s32.totalorder %s261, %s275
      %p277 = scmp.eq.s32.totalorder %s27, 0
      %p278 = por %p276, %p277
      %s280 = sadd.s32 %s279, 1
      %p283 = scmp.eq.s32.totalorder %s21, 3
      %p284 = scmp.ne.s32.totalorder %s279, %s281
      %p285 = scmp.eq.s32.totalorder %s21, 0
      %p286 = por %p284, %p285
      %p287 = scmp.ne.s32.totalorder %s279, %s281
      %p288 = scmp.eq.s32.totalorder %s26, 3
      %p289 = por %p287, %p288
      %p290 = scmp.ne.s32.totalorder %s281, %s282
      %p291 = scmp.eq.s32.totalorder %s26, 0
      %p292 = por %p290, %p291
      %p293 = scmp.ne.s32.totalorder %s281, %s282
      %p294 = scmp.eq.s32.totalorder %s27, 3
      %p295 = por %p293, %p294
      %p297 = scmp.ne.s32.totalorder %s282, %s296
      %p298 = scmp.eq.s32.totalorder %s27, 0
      %p299 = por %p297, %p298
      %s300 = ssub.s32 %s28, %s40
      %s301 = ssub.s32 %s29, %s36
      %s302 = sor.u32 %s300, %s301
      %p303 = scmp.eq.s32.totalorder %s302, 0
      %s305 = sadd.s32 %s304, 1
      %s306 = scalar_select %p303, %s304, %s305
      %p309 = pneg %p303
      %p310 = scmp.eq.s32.totalorder %s21, 3
      %p311 = por %p309, %p310
      %p312 = scmp.ne.s32.totalorder %s304, %s307
      %p313 = scmp.eq.s32.totalorder %s21, 0
      %p314 = por %p312, %p313
      %p315 = scmp.ne.s32.totalorder %s304, %s307
      %p316 = scmp.eq.s32.totalorder %s26, 3
      %p317 = por %p315, %p316
      %p318 = scmp.ne.s32.totalorder %s307, %s308
      %p319 = scmp.eq.s32.totalorder %s26, 0
      %p320 = por %p318, %p319
      %p321 = scmp.ne.s32.totalorder %s307, %s308
      %p322 = scmp.eq.s32.totalorder %s27, 3
      %p323 = por %p321, %p322
      %p325 = scmp.ne.s32.totalorder %s308, %s324
      %p326 = scmp.eq.s32.totalorder %s27, 0
      %p327 = por %p325, %p326
      %p328 = scmp.le.s32.totalorder 1, %s21
      %p329 = scmp.lt.s32.totalorder %s21, 5
      %p330 = pnand %p328, %p329
      %p331 = pneg %p330
      // Predicated region
      $region9: #{tpu_custom_call.1} parent=5 // pred_check
        _
      $region10: #{tpu_custom_call.1} parent=5 // pred_check_branch
        %333 = sbr.rel (%p330) target = $region12
      $region11: #{tpu_custom_call.1} parent=5 // pred_region
        %s334 = ssub.s32 %s21, 1
        // Predicated region
        $region13: #{tpu_custom_call.1} parent=11 // pred_check
          %p335 = pneg %p82
        $region14: #{tpu_custom_call.1} parent=11 // pred_check_branch
          %337 = sbr.rel (%p335) target = $region16
        $region15: #{tpu_custom_call.1} parent=11 // pred_region
          _
        $region16: #{tpu_custom_call.1} parent=11 // pred_fallthru
          _
        // Predicated region
        $region17: #{tpu_custom_call.1} parent=11 // pred_check
          %p338 = pneg %p103
        $region18: #{tpu_custom_call.1} parent=11 // pred_check_branch
          %340 = sbr.rel (%p338) target = $region20
        $region19: #{tpu_custom_call.1} parent=11 // pred_region
          _
        $region20: #{tpu_custom_call.1} parent=11 // pred_fallthru
          _
        // Predicated region
        $region21: #{tpu_custom_call.1} parent=11 // pred_check
          %p341 = pneg %p124
        $region22: #{tpu_custom_call.1} parent=11 // pred_check_branch
          %343 = sbr.rel (%p341) target = $region24
        $region23: #{tpu_custom_call.1} parent=11 // pred_region
          _
        $region24: #{tpu_custom_call.1} parent=11 // pred_fallthru
          _
        // Predicated region
        $region25: #{tpu_custom_call.1} parent=11 // pred_check
          %p344 = pneg %p145
        $region26: #{tpu_custom_call.1} parent=11 // pred_check_branch
          %346 = sbr.rel (%p344) target = $region28
        $region27: #{tpu_custom_call.1} parent=11 // pred_region
          _
        $region28: #{tpu_custom_call.1} parent=11 // pred_fallthru
          _
        // Predicated region
        $region29: #{tpu_custom_call.1} parent=11 // pred_check
          %p347 = pneg %p166
        $region30: #{tpu_custom_call.1} parent=11 // pred_check_branch
          %349 = sbr.rel (%p347) target = $region32
        $region31: #{tpu_custom_call.1} parent=11 // pred_region
          _
        $region32: #{tpu_custom_call.1} parent=11 // pred_fallthru
          _
        // Predicated region
        $region33: #{tpu_custom_call.1} parent=11 // pred_check
          %p350 = pneg %p187
        $region34: #{tpu_custom_call.1} parent=11 // pred_check_branch
          %352 = sbr.rel (%p350) target = $region36
        $region35: #{tpu_custom_call.1} parent=11 // pred_region
          _
        $region36: #{tpu_custom_call.1} parent=11 // pred_fallthru
          _
        // Predicated region
        $region37: #{tpu_custom_call.1} parent=11 // pred_check
          %p353 = pneg %p208
        $region38: #{tpu_custom_call.1} parent=11 // pred_check_branch
          %355 = sbr.rel (%p353) target = $region40
        $region39: #{tpu_custom_call.1} parent=11 // pred_region
          _
        $region40: #{tpu_custom_call.1} parent=11 // pred_fallthru
          _
        // Predicated region
        $region41: #{tpu_custom_call.1} parent=11 // pred_check
          %p356 = pneg %p229
        $region42: #{tpu_custom_call.1} parent=11 // pred_check_branch
          %358 = sbr.rel (%p356) target = $region44
        $region43: #{tpu_custom_call.1} parent=11 // pred_region
          _
        $region44: #{tpu_custom_call.1} parent=11 // pred_fallthru
          _
        // Predicated region
        $region45: #{tpu_custom_call.1} parent=11 // pred_check
          %p359 = pneg %p250
        $region46: #{tpu_custom_call.1} parent=11 // pred_check_branch
          %361 = sbr.rel (%p359) target = $region48
        $region47: #{tpu_custom_call.1} parent=11 // pred_region
          _
        $region48: #{tpu_custom_call.1} parent=11 // pred_fallthru
          _
        // Predicated region
        $region49: #{tpu_custom_call.1} parent=11 // pred_check
          %p362 = pneg %p271
        $region50: #{tpu_custom_call.1} parent=11 // pred_check_branch
          %364 = sbr.rel (%p362) target = $region52
        $region51: #{tpu_custom_call.1} parent=11 // pred_region
          _
        $region52: #{tpu_custom_call.1} parent=11 // pred_fallthru
          _
        // Predicated region
        $region53: #{tpu_custom_call.1} parent=11 // pred_check
          %p365 = pneg %p292
        $region54: #{tpu_custom_call.1} parent=11 // pred_check_branch
          %367 = sbr.rel (%p365) target = $region56
        $region55: #{tpu_custom_call.1} parent=11 // pred_region
          _
        $region56: #{tpu_custom_call.1} parent=11 // pred_fallthru
          _
      $region12: #{tpu_custom_call.1} parent=5 // pred_fallthru
        _
      %p368 = scmp.lt.s32.totalorder %s21, 4
      // Predicated region
      $region57: #{tpu_custom_call.1} parent=5 // pred_check
        %p369 = pneg %p368
      $region58: #{tpu_custom_call.1} parent=5 // pred_check_branch
        %371 = sbr.rel (%p369) target = $region60
      $region59: #{tpu_custom_call.1} parent=5 // pred_region
        // Predicated region
        $region61: #{tpu_custom_call.1} parent=59 // pred_check
          %p372 = pneg %p55
        $region62: #{tpu_custom_call.1} parent=59 // pred_check_branch
          %374 = sbr.rel (%p372) target = $region64
        $region63: #{tpu_custom_call.1} parent=59 // pred_region
          %p375 = scmp.lt.s32.totalorder %s28, 1
          %s376 = scalar_select %p375, %s28, 1
          %p377 = scmp.lt.s32.totalorder %s29, 1
          %s378 = scalar_select %p377, %s29, 1
          %s379 = smul.addr %s376, 2
          %s380 = sadd.s32 %s378, %s379
          %s381 = smul.addr %s380, 8
          %s382 = scalar_lea.vmem %s0, %s381
        $region64: #{tpu_custom_call.1} parent=59 // pred_fallthru
          _
      $region60: #{tpu_custom_call.1} parent=5 // pred_fallthru
        _
      %p383 = scmp.le.s32.totalorder 1, %s21
      %p384 = scmp.lt.s32.totalorder %s21, 5
      %p385 = pnand %p383, %p384
      %p386 = pneg %p385
      // Predicated region
      $region65: #{tpu_custom_call.1} parent=5 // pred_check
        _
      $region66: #{tpu_custom_call.1} parent=5 // pred_check_branch
        %388 = sbr.rel (%p385) target = $region68
      $region67: #{tpu_custom_call.1} parent=5 // pred_region
        %s389 = ssub.s32 %s21, 1
        %p390 = scmp.lt.s32.totalorder %s30, 1
        %s391 = scalar_select %p390, %s30, 1
        %p392 = scmp.lt.s32.totalorder %s31, 1
        %s393 = scalar_select %p392, %s31, 1
        %s394 = smul.addr %s391, 2
        %s395 = sadd.s32 %s393, %s394
        %s396 = smul.addr %s395, 8
        %s397 = scalar_lea.vmem %s0, %s396
        %p398 = pneg %p61
        %p399 = pneg %p58
        %p400 = pneg %p82
        %p401 = pneg %p79
        %p402 = pneg %p103
        %p403 = pneg %p100
        %p404 = pneg %p124
        %p405 = pneg %p121
        %p406 = pneg %p145
        %p407 = pneg %p142
        %p408 = pneg %p166
        %p409 = pneg %p163
        %p410 = pneg %p187
        %p411 = pneg %p184
        %p412 = pneg %p208
        %p413 = pneg %p205
        %p414 = pneg %p229
        %p415 = pneg %p226
        %p416 = pneg %p250
        %p417 = pneg %p247
        %p418 = pneg %p271
        %p419 = pneg %p268
        %p420 = pneg %p292
        %p421 = pneg %p289
        %p422 = pneg %p320
        %p423 = pneg %p317
        %s424 = sand.u32 %s307, 1
        %s425 = scalar_lea.sflag [#allocation8], %s424
        %s426 = sand.u32 %s307, 1
        %s427 = smul.addr %s426, 8
        %s428 = scalar_lea.vmem [#allocation7], %s427
        %p429 = scmp.lt.s32.totalorder %s30, 1
        %s430 = scalar_select %p429, %s30, 1
        %p431 = scmp.lt.s32.totalorder %s31, 1
        %s432 = scalar_select %p431, %s31, 1
        %s433 = smul.addr %s430, 2
        %s434 = sadd.s32 %s432, %s433
        %s435 = smul.addr %s434, 8
        %s436 = scalar_lea.vmem %s0, %s435
        %v438 = vld [vmem:[%s436] sm:$0xff]
        %v439 = vld [vmem:[%s4] sm:$0x1]
        %v440 = vld [vmem:[%s5] sm:$0x1]
        %vm441 = vcmask 523264
        %v442 = vsel %vm441, %v438, 0.0
        %443 = vadd.xlane.f32.xlu0 %v442
        %v444 = vpop.xlane.xlu0 %443
        %v445 = vrcp.pop 64.0
        %v446 = vmul.f32 %v444, %v445
        %v447 = vsub.f32 %v438, %v446
        %v448 = vmul.f32 %v447, %v447
        %v449 = vsel %vm441, %v448, 0.0
        %450 = vadd.xlane.f32.xlu0 %v449
        %v451 = vpop.xlane.xlu0 %450
        %v452 = vmul.f32 %v451, %v445
        %v453 = vadd.f32 %v452, 1e-05
        %v454 = vrsqrt.pop %v453
        %v455 = vmul.f32 %v447, %v454
        %v457 = vlaneseq
        %v458 = vshrl.u32 %v457, 7
        %v459 = vsub.s32 0, %v458
        %v460 = vrot.slane %v439, %v459
        %v462 = vmul.f32 %v455, %v460
        %v464 = vlaneseq
        %v465 = vshrl.u32 %v464, 7
        %v466 = vsub.s32 0, %v465
        %v467 = vrot.slane %v440, %v466
        %v469 = vadd.f32 %v462, %v467
        %v470 = vpack.c.bf16 %v469, %v469
        %v471 = vld [vmem:[%s1] sm:$0xf]
        %v472 = vld [vmem:[%s1 + $0x4] sm:$0xf]
        %v473 = vld [vmem:[%s1 + $0x8] sm:$0xf]
        %v474 = vld [vmem:[%s1 + $0xc] sm:$0xf]
        %v475 = vld [vmem:[%s1 + $0x10] sm:$0xf]
        %v476 = vld [vmem:[%s1 + $0x14] sm:$0xf]
        %v477 = vld [vmem:[%s1 + $0x18] sm:$0xf]
        %v478 = vld [vmem:[%s1 + $0x1c] sm:$0xf]
        %v487 = vunpack.c.l.b16 %v471
        %v488 = vunpack.c.l.b16 %v472
        %v489 = vunpack.c.l.b16 %v473
        %v490 = vunpack.c.l.b16 %v474
        %v491 = vunpack.c.l.b16 %v475
        %v492 = vunpack.c.l.b16 %v476
        %v493 = vunpack.c.l.b16 %v477
        %v494 = vunpack.c.l.b16 %v478
        %v495 = vpack.c.b16 %v488, %v487
        %v496 = vpack.c.b16 %v490, %v489
        %v497 = vpack.c.b16 %v492, %v491
        %v498 = vpack.c.b16 %v494, %v493
        %v504 = vsel %vm441, %v470, 0
        %506 = vmatprep.subr.bf16.mxu0 0
        %507 = vmatpush1.bf16.msra.mxu0 0
        %508 = vmatprep.subr.bf16.mxu0 0
        %509 = vmatpush1.bf16.msra.mxu0 0
        %510 = vmatprep.subr.bf16.mxu0 0
        %511 = vmatpush1.bf16.msra.mxu0 0
        %512 = vmatprep.subr.bf16.mxu0 0
        %513 = vmatpush1.bf16.msra.mxu0 0
        %514 = vmatprep.subr.bf16.mxu0 0
        %515 = vmatpush1.bf16.msra.mxu0 %v498
        %516 = vmatprep.subr.bf16.mxu0 0
        %517 = vmatpush1.bf16.msra.mxu0 %v497
        %518 = vmatprep.subr.bf16.mxu0 0
        %519 = vmatpush1.bf16.msra.mxu0 %v496
        %520 = vmatprep.subr.bf16.mxu0 0
        %521 = vmatpush1.bf16.msra.mxu0 %v495
        %522 = vmatprep.subr.bf16.mxu0 0
        %523 = vmatpush2.bf16.msra.mxu0 0
        %524 = vmatprep.subr.bf16.mxu0 0
        %525 = vmatpush2.bf16.msra.mxu0 0
        %526 = vmatprep.subr.bf16.mxu0 0
        %527 = vmatpush2.bf16.msra.mxu0 0
        %528 = vmatprep.subr.bf16.mxu0 0
        %529 = vmatpush2.bf16.msra.mxu0 0
        %530 = vmatprep.subr.bf16.mxu0 0
        %531 = vmatpush2.bf16.msra.mxu0 0
        %532 = vmatprep.subr.bf16.mxu0 0
        %533 = vmatpush2.bf16.msra.mxu0 0
        %534 = vmatprep.subr.bf16.mxu0 0
        %535 = vmatpush2.bf16.msra.mxu0 0
        %536 = vmatprep.subr.bf16.mxu0 0
        %537 = vmatpush2.bf16.msra.mxu0 0
        %538 = vmatprep.mubr.bf16.mxu0 0
        %539 = vmatmul.mubr.bf16.gmra.mxu0 %v504
        %v540 = vpop.f32.mrf.mxu0
        %v541 = vadd.f32 0.0, %v540
        %v542 = vpop.f32.mrf.mxu0
        %v543 = vpop.f32.mrf.mxu0
        %v544 = vpop.f32.mrf.mxu0
        %545 = vdwg.mxu0
        %v546 = vmul.f32 %v541, 0.25
        %v547 = vld [vmem:[%s2] sm:$0xf]
        %v548 = vld [vmem:[%s2 + $0x4] sm:$0xf]
        %v549 = vld [vmem:[%s2 + $0x8] sm:$0xf]
        %v550 = vld [vmem:[%s2 + $0xc] sm:$0xf]
        %v551 = vld [vmem:[%s2 + $0x10] sm:$0xf]
        %v552 = vld [vmem:[%s2 + $0x14] sm:$0xf]
        %v553 = vld [vmem:[%s2 + $0x18] sm:$0xf]
        %v554 = vld [vmem:[%s2 + $0x1c] sm:$0xf]
        %v563 = vunpack.c.l.b16 %v547
        %v564 = vunpack.c.l.b16 %v548
        %v565 = vunpack.c.l.b16 %v549
        %v566 = vunpack.c.l.b16 %v550
        %v567 = vunpack.c.l.b16 %v551
        %v568 = vunpack.c.l.b16 %v552
        %v569 = vunpack.c.l.b16 %v553
        %v570 = vunpack.c.l.b16 %v554
        %v571 = vpack.c.b16 %v564, %v563
        %v572 = vpack.c.b16 %v566, %v565
        %v573 = vpack.c.b16 %v568, %v567
        %v574 = vpack.c.b16 %v570, %v569
        %579 = vmatprep.subr.bf16.mxu0 0
        %580 = vmatpush1.bf16.msra.mxu0 0
        %581 = vmatprep.subr.bf16.mxu0 0
        %582 = vmatpush1.bf16.msra.mxu0 0
        %583 = vmatprep.subr.bf16.mxu0 0
        %584 = vmatpush1.bf16.msra.mxu0 0
        %585 = vmatprep.subr.bf16.mxu0 0
        %586 = vmatpush1.bf16.msra.mxu0 0
        %587 = vmatprep.subr.bf16.mxu0 0
        %588 = vmatpush1.bf16.msra.mxu0 %v574
        %589 = vmatprep.subr.bf16.mxu0 0
        %590 = vmatpush1.bf16.msra.mxu0 %v573
        %591 = vmatprep.subr.bf16.mxu0 0
        %592 = vmatpush1.bf16.msra.mxu0 %v572
        %593 = vmatprep.subr.bf16.mxu0 0
        %594 = vmatpush1.bf16.msra.mxu0 %v571
        %595 = vmatprep.subr.bf16.mxu0 0
        %596 = vmatpush2.bf16.msra.mxu0 0
        %597 = vmatprep.subr.bf16.mxu0 0
        %598 = vmatpush2.bf16.msra.mxu0 0
        %599 = vmatprep.subr.bf16.mxu0 0
        %600 = vmatpush2.bf16.msra.mxu0 0
        %601 = vmatprep.subr.bf16.mxu0 0
        %602 = vmatpush2.bf16.msra.mxu0 0
        %603 = vmatprep.subr.bf16.mxu0 0
        %604 = vmatpush2.bf16.msra.mxu0 0
        %605 = vmatprep.subr.bf16.mxu0 0
        %606 = vmatpush2.bf16.msra.mxu0 0
        %607 = vmatprep.subr.bf16.mxu0 0
        %608 = vmatpush2.bf16.msra.mxu0 0
        %609 = vmatprep.subr.bf16.mxu0 0
        %610 = vmatpush2.bf16.msra.mxu0 0
        %611 = vmatprep.mubr.bf16.mxu0 0
        %612 = vmatmul.mubr.bf16.gmra.mxu0 %v504
        %v613 = vpop.f32.mrf.mxu0
        %v614 = vadd.f32 0.0, %v613
        %v615 = vpop.f32.mrf.mxu0
        %v616 = vpop.f32.mrf.mxu0
        %v617 = vpop.f32.mrf.mxu0
        %618 = vdwg.mxu0
        %v619 = vld [vmem:[%s3] sm:$0xf]
        %v620 = vld [vmem:[%s3 + $0x4] sm:$0xf]
        %v621 = vld [vmem:[%s3 + $0x8] sm:$0xf]
        %v622 = vld [vmem:[%s3 + $0xc] sm:$0xf]
        %v623 = vld [vmem:[%s3 + $0x10] sm:$0xf]
        %v624 = vld [vmem:[%s3 + $0x14] sm:$0xf]
        %v625 = vld [vmem:[%s3 + $0x18] sm:$0xf]
        %v626 = vld [vmem:[%s3 + $0x1c] sm:$0xf]
        %v635 = vunpack.c.l.b16 %v619
        %v636 = vunpack.c.l.b16 %v620
        %v637 = vunpack.c.l.b16 %v621
        %v638 = vunpack.c.l.b16 %v622
        %v639 = vunpack.c.l.b16 %v623
        %v640 = vunpack.c.l.b16 %v624
        %v641 = vunpack.c.l.b16 %v625
        %v642 = vunpack.c.l.b16 %v626
        %v643 = vpack.c.b16 %v636, %v635
        %v644 = vpack.c.b16 %v638, %v637
        %v645 = vpack.c.b16 %v640, %v639
        %v646 = vpack.c.b16 %v642, %v641
        %651 = vmatprep.subr.bf16.mxu0 0
        %652 = vmatpush1.bf16.msra.mxu0 0
        %653 = vmatprep.subr.bf16.mxu0 0
        %654 = vmatpush1.bf16.msra.mxu0 0
        %655 = vmatprep.subr.bf16.mxu0 0
        %656 = vmatpush1.bf16.msra.mxu0 0
        %657 = vmatprep.subr.bf16.mxu0 0
        %658 = vmatpush1.bf16.msra.mxu0 0
        %659 = vmatprep.subr.bf16.mxu0 0
        %660 = vmatpush1.bf16.msra.mxu0 %v646
        %661 = vmatprep.subr.bf16.mxu0 0
        %662 = vmatpush1.bf16.msra.mxu0 %v645
        %663 = vmatprep.subr.bf16.mxu0 0
        %664 = vmatpush1.bf16.msra.mxu0 %v644
        %665 = vmatprep.subr.bf16.mxu0 0
        %666 = vmatpush1.bf16.msra.mxu0 %v643
        %667 = vmatprep.subr.bf16.mxu0 0
        %668 = vmatpush2.bf16.msra.mxu0 0
        %669 = vmatprep.subr.bf16.mxu0 0
        %670 = vmatpush2.bf16.msra.mxu0 0
        %671 = vmatprep.subr.bf16.mxu0 0
        %672 = vmatpush2.bf16.msra.mxu0 0
        %673 = vmatprep.subr.bf16.mxu0 0
        %674 = vmatpush2.bf16.msra.mxu0 0
        %675 = vmatprep.subr.bf16.mxu0 0
        %676 = vmatpush2.bf16.msra.mxu0 0
        %677 = vmatprep.subr.bf16.mxu0 0
        %678 = vmatpush2.bf16.msra.mxu0 0
        %679 = vmatprep.subr.bf16.mxu0 0
        %680 = vmatpush2.bf16.msra.mxu0 0
        %681 = vmatprep.subr.bf16.mxu0 0
        %682 = vmatpush2.bf16.msra.mxu0 0
        %683 = vmatprep.mubr.bf16.mxu0 0
        %684 = vmatmul.mubr.bf16.gmra.mxu0 %v504
        %v685 = vpop.f32.mrf.mxu0
        %v686 = vadd.f32 0.0, %v685
        %v687 = vpop.f32.mrf.mxu0
        %v688 = vpop.f32.mrf.mxu0
        %v689 = vpop.f32.mrf.mxu0
        %690 = vdwg.mxu0
        %692 = vrot.lane.b32.xlu0 %v546, 112
        %v693 = vpop.permute.xlu0 %692
        %695 = vrot.lane.b32.xlu0 %v546, 96
        %v696 = vpop.permute.xlu0 %695
        %698 = vrot.lane.b32.xlu0 %v546, 80
        %v699 = vpop.permute.xlu0 %698
        %v701 = vcombine.low %v546, %v696
        %v702 = vcombine.high %v546, %v696
        %v704 = vunpack.c.l.s4 1983009808
        %v705 = vunpack.c.0.s8 %v704
        %v706 = vlaneseq
        %v707 = vshrl.u32 %v706, 7
        %v708 = vsub.s32 %v705, %v707
        %v709 = vrot.slane %v701, %v708
        %v711 = vunpack.c.l.s4 1983009808
        %v712 = vunpack.c.0.s8 %v711
        %v713 = vlaneseq
        %v714 = vshrl.u32 %v713, 7
        %v715 = vsub.s32 %v712, %v714
        %v716 = vrot.slane %v702, %v715
        %v717 = vcombine.low %v693, %v699
        %v718 = vcombine.high %v693, %v699
        %v720 = vunpack.c.l.s4 1983009808
        %v721 = vunpack.c.0.s8 %v720
        %v722 = vlaneseq
        %v723 = vshrl.u32 %v722, 7
        %v724 = vsub.s32 %v721, %v723
        %v725 = vrot.slane %v717, %v724
        %v727 = vunpack.c.l.s4 1983009808
        %v728 = vunpack.c.0.s8 %v727
        %v729 = vlaneseq
        %v730 = vshrl.u32 %v729, 7
        %v731 = vsub.s32 %v728, %v730
        %v732 = vrot.slane %v718, %v731
        %v733 = vcombine.low %v709, %v725
        %v734 = vcombine.high %v709, %v725
        %v736 = vunpack.c.l.s4 1934713408
        %v737 = vunpack.c.0.s8 %v736
        %v738 = vlaneseq
        %v739 = vshrl.u32 %v738, 7
        %v740 = vsub.s32 %v737, %v739
        %v741 = vrot.slane %v733, %v740
        %v743 = vunpack.c.l.s4 1934713408
        %v744 = vunpack.c.0.s8 %v743
        %v745 = vlaneseq
        %v746 = vshrl.u32 %v745, 7
        %v747 = vsub.s32 %v744, %v746
        %v748 = vrot.slane %v734, %v747
        %v749 = vcombine.low %v716, %v732
        %v750 = vcombine.high %v716, %v732
        %v752 = vunpack.c.l.s4 1934713408
        %v753 = vunpack.c.0.s8 %v752
        %v754 = vlaneseq
        %v755 = vshrl.u32 %v754, 7
        %v756 = vsub.s32 %v753, %v755
        %v757 = vrot.slane %v749, %v756
        %v759 = vunpack.c.l.s4 1934713408
        %v760 = vunpack.c.0.s8 %v759
        %v761 = vlaneseq
        %v762 = vshrl.u32 %v761, 7
        %v763 = vsub.s32 %v760, %v762
        %v764 = vrot.slane %v750, %v763
        %v765 = vcombine.high %v741, 0.0
        %v766 = vcombine.high %v748, 0.0
        %v767 = vcombine.high %v757, 0.0
        %v768 = vcombine.high %v764, 0.0
        %v769 = vcombine.low %v741, %v748
        %v771 = vunpack.c.l.s4 1983009808
        %v772 = vunpack.c.0.s8 %v771
        %v773 = vlaneseq
        %v774 = vshrl.u32 %v773, 7
        %v775 = vsub.s32 %v772, %v774
        %v776 = vrot.slane %v769, %v775
        %v777 = vcombine.low %v765, %v766
        %v779 = vunpack.c.l.s4 1983009808
        %v780 = vunpack.c.0.s8 %v779
        %v781 = vlaneseq
        %v782 = vshrl.u32 %v781, 7
        %v783 = vsub.s32 %v780, %v782
        %v784 = vrot.slane %v777, %v783
        %v785 = vcombine.low %v757, %v764
        %v787 = vunpack.c.l.s4 1983009808
        %v788 = vunpack.c.0.s8 %v787
        %v789 = vlaneseq
        %v790 = vshrl.u32 %v789, 7
        %v791 = vsub.s32 %v788, %v790
        %v792 = vrot.slane %v785, %v791
        %v793 = vcombine.low %v767, %v768
        %v795 = vunpack.c.l.s4 1983009808
        %v796 = vunpack.c.0.s8 %v795
        %v797 = vlaneseq
        %v798 = vshrl.u32 %v797, 7
        %v799 = vsub.s32 %v796, %v798
        %v800 = vrot.slane %v793, %v799
        %v801 = vcombine.low %v776, %v784
        %v802 = vcombine.high %v776, %v784
        %v804 = vunpack.c.l.s4 1934713408
        %v805 = vunpack.c.0.s8 %v804
        %v806 = vlaneseq
        %v807 = vshrl.u32 %v806, 7
        %v808 = vsub.s32 %v805, %v807
        %v809 = vrot.slane %v801, %v808
        %v811 = vunpack.c.l.s4 1934713408
        %v812 = vunpack.c.0.s8 %v811
        %v813 = vlaneseq
        %v814 = vshrl.u32 %v813, 7
        %v815 = vsub.s32 %v812, %v814
        %v816 = vrot.slane %v802, %v815
        %v817 = vcombine.low %v792, %v800
        %v818 = vcombine.high %v792, %v800
        %v820 = vunpack.c.l.s4 1934713408
        %v821 = vunpack.c.0.s8 %v820
        %v822 = vlaneseq
        %v823 = vshrl.u32 %v822, 7
        %v824 = vsub.s32 %v821, %v823
        %v825 = vrot.slane %v817, %v824
        %v827 = vunpack.c.l.s4 1934713408
        %v828 = vunpack.c.0.s8 %v827
        %v829 = vlaneseq
        %v830 = vshrl.u32 %v829, 7
        %v831 = vsub.s32 %v828, %v830
        %v832 = vrot.slane %v818, %v831
        %v833 = vcombine.low %v809, %v825
        %v834 = vcombine.high %v809, %v825
        %v835 = vcombine.low %v816, %v832
        %v836 = vcombine.high %v816, %v832
        %v837 = vpack.c.bf16 %v833, %v833
        %v838 = vpack.c.bf16 %v834, %v834
        %v839 = vpack.c.bf16 %v835, %v835
        %v840 = vpack.c.bf16 %v836, %v836
        %842 = vrot.lane.b32.xlu0 %v614, 112
        %v843 = vpop.permute.xlu0 %842
        %845 = vrot.lane.b32.xlu0 %v614, 96
        %v846 = vpop.permute.xlu0 %845
        %848 = vrot.lane.b32.xlu0 %v614, 80
        %v849 = vpop.permute.xlu0 %848
        %v851 = vcombine.low %v614, %v846
        %v852 = vcombine.high %v614, %v846
        %v854 = vunpack.c.l.s4 1983009808
        %v855 = vunpack.c.0.s8 %v854
        %v856 = vlaneseq
        %v857 = vshrl.u32 %v856, 7
        %v858 = vsub.s32 %v855, %v857
        %v859 = vrot.slane %v851, %v858
        %v861 = vunpack.c.l.s4 1983009808
        %v862 = vunpack.c.0.s8 %v861
        %v863 = vlaneseq
        %v864 = vshrl.u32 %v863, 7
        %v865 = vsub.s32 %v862, %v864
        %v866 = vrot.slane %v852, %v865
        %v867 = vcombine.low %v843, %v849
        %v868 = vcombine.high %v843, %v849
        %v870 = vunpack.c.l.s4 1983009808
        %v871 = vunpack.c.0.s8 %v870
        %v872 = vlaneseq
        %v873 = vshrl.u32 %v872, 7
        %v874 = vsub.s32 %v871, %v873
        %v875 = vrot.slane %v867, %v874
        %v877 = vunpack.c.l.s4 1983009808
        %v878 = vunpack.c.0.s8 %v877
        %v879 = vlaneseq
        %v880 = vshrl.u32 %v879, 7
        %v881 = vsub.s32 %v878, %v880
        %v882 = vrot.slane %v868, %v881
        %v883 = vcombine.low %v859, %v875
        %v884 = vcombine.high %v859, %v875
        %v886 = vunpack.c.l.s4 1934713408
        %v887 = vunpack.c.0.s8 %v886
        %v888 = vlaneseq
        %v889 = vshrl.u32 %v888, 7
        %v890 = vsub.s32 %v887, %v889
        %v891 = vrot.slane %v883, %v890
        %v893 = vunpack.c.l.s4 1934713408
        %v894 = vunpack.c.0.s8 %v893
        %v895 = vlaneseq
        %v896 = vshrl.u32 %v895, 7
        %v897 = vsub.s32 %v894, %v896
        %v898 = vrot.slane %v884, %v897
        %v899 = vcombine.low %v866, %v882
        %v900 = vcombine.high %v866, %v882
        %v902 = vunpack.c.l.s4 1934713408
        %v903 = vunpack.c.0.s8 %v902
        %v904 = vlaneseq
        %v905 = vshrl.u32 %v904, 7
        %v906 = vsub.s32 %v903, %v905
        %v907 = vrot.slane %v899, %v906
        %v909 = vunpack.c.l.s4 1934713408
        %v910 = vunpack.c.0.s8 %v909
        %v911 = vlaneseq
        %v912 = vshrl.u32 %v911, 7
        %v913 = vsub.s32 %v910, %v912
        %v914 = vrot.slane %v900, %v913
        %v915 = vcombine.high %v891, 0.0
        %v916 = vcombine.high %v898, 0.0
        %v917 = vcombine.high %v907, 0.0
        %v918 = vcombine.high %v914, 0.0
        %v919 = vcombine.low %v891, %v898
        %v921 = vunpack.c.l.s4 1983009808
        %v922 = vunpack.c.0.s8 %v921
        %v923 = vlaneseq
        %v924 = vshrl.u32 %v923, 7
        %v925 = vsub.s32 %v922, %v924
        %v926 = vrot.slane %v919, %v925
        %v927 = vcombine.low %v915, %v916
        %v929 = vunpack.c.l.s4 1983009808
        %v930 = vunpack.c.0.s8 %v929
        %v931 = vlaneseq
        %v932 = vshrl.u32 %v931, 7
        %v933 = vsub.s32 %v930, %v932
        %v934 = vrot.slane %v927, %v933
        %v935 = vcombine.low %v907, %v914
        %v937 = vunpack.c.l.s4 1983009808
        %v938 = vunpack.c.0.s8 %v937
        %v939 = vlaneseq
        %v940 = vshrl.u32 %v939, 7
        %v941 = vsub.s32 %v938, %v940
        %v942 = vrot.slane %v935, %v941
        %v943 = vcombine.low %v917, %v918
        %v945 = vunpack.c.l.s4 1983009808
        %v946 = vunpack.c.0.s8 %v945
        %v947 = vlaneseq
        %v948 = vshrl.u32 %v947, 7
        %v949 = vsub.s32 %v946, %v948
        %v950 = vrot.slane %v943, %v949
        %v951 = vcombine.low %v926, %v934
        %v952 = vcombine.high %v926, %v934
        %v954 = vunpack.c.l.s4 1934713408
        %v955 = vunpack.c.0.s8 %v954
        %v956 = vlaneseq
        %v957 = vshrl.u32 %v956, 7
        %v958 = vsub.s32 %v955, %v957
        %v959 = vrot.slane %v951, %v958
        %v961 = vunpack.c.l.s4 1934713408
        %v962 = vunpack.c.0.s8 %v961
        %v963 = vlaneseq
        %v964 = vshrl.u32 %v963, 7
        %v965 = vsub.s32 %v962, %v964
        %v966 = vrot.slane %v952, %v965
        %v967 = vcombine.low %v942, %v950
        %v968 = vcombine.high %v942, %v950
        %v970 = vunpack.c.l.s4 1934713408
        %v971 = vunpack.c.0.s8 %v970
        %v972 = vlaneseq
        %v973 = vshrl.u32 %v972, 7
        %v974 = vsub.s32 %v971, %v973
        %v975 = vrot.slane %v967, %v974
        %v977 = vunpack.c.l.s4 1934713408
        %v978 = vunpack.c.0.s8 %v977
        %v979 = vlaneseq
        %v980 = vshrl.u32 %v979, 7
        %v981 = vsub.s32 %v978, %v980
        %v982 = vrot.slane %v968, %v981
        %v983 = vcombine.low %v959, %v975
        %v984 = vcombine.high %v959, %v975
        %v985 = vcombine.low %v966, %v982
        %v986 = vcombine.high %v966, %v982
        %v987 = vpack.c.bf16 %v983, %v983
        %v988 = vpack.c.bf16 %v984, %v984
        %v989 = vpack.c.bf16 %v985, %v985
        %v990 = vpack.c.bf16 %v986, %v986
        %992 = vrot.lane.b32.xlu0 %v686, 112
        %v993 = vpop.permute.xlu0 %992
        %995 = vrot.lane.b32.xlu0 %v686, 96
        %v996 = vpop.permute.xlu0 %995
        %998 = vrot.lane.b32.xlu0 %v686, 80
        %v999 = vpop.permute.xlu0 %998
        %v1001 = vcombine.low %v686, %v996
        %v1002 = vcombine.high %v686, %v996
        %v1004 = vunpack.c.l.s4 1983009808
        %v1005 = vunpack.c.0.s8 %v1004
        %v1006 = vlaneseq
        %v1007 = vshrl.u32 %v1006, 7
        %v1008 = vsub.s32 %v1005, %v1007
        %v1009 = vrot.slane %v1001, %v1008
        %v1011 = vunpack.c.l.s4 1983009808
        %v1012 = vunpack.c.0.s8 %v1011
        %v1013 = vlaneseq
        %v1014 = vshrl.u32 %v1013, 7
        %v1015 = vsub.s32 %v1012, %v1014
        %v1016 = vrot.slane %v1002, %v1015
        %v1017 = vcombine.low %v993, %v999
        %v1018 = vcombine.high %v993, %v999
        %v1020 = vunpack.c.l.s4 1983009808
        %v1021 = vunpack.c.0.s8 %v1020
        %v1022 = vlaneseq
        %v1023 = vshrl.u32 %v1022, 7
        %v1024 = vsub.s32 %v1021, %v1023
        %v1025 = vrot.slane %v1017, %v1024
        %v1027 = vunpack.c.l.s4 1983009808
        %v1028 = vunpack.c.0.s8 %v1027
        %v1029 = vlaneseq
        %v1030 = vshrl.u32 %v1029, 7
        %v1031 = vsub.s32 %v1028, %v1030
        %v1032 = vrot.slane %v1018, %v1031
        %v1033 = vcombine.low %v1009, %v1025
        %v1034 = vcombine.high %v1009, %v1025
        %v1036 = vunpack.c.l.s4 1934713408
        %v1037 = vunpack.c.0.s8 %v1036
        %v1038 = vlaneseq
        %v1039 = vshrl.u32 %v1038, 7
        %v1040 = vsub.s32 %v1037, %v1039
        %v1041 = vrot.slane %v1033, %v1040
        %v1043 = vunpack.c.l.s4 1934713408
        %v1044 = vunpack.c.0.s8 %v1043
        %v1045 = vlaneseq
        %v1046 = vshrl.u32 %v1045, 7
        %v1047 = vsub.s32 %v1044, %v1046
        %v1048 = vrot.slane %v1034, %v1047
        %v1049 = vcombine.low %v1016, %v1032
        %v1050 = vcombine.high %v1016, %v1032
        %v1052 = vunpack.c.l.s4 1934713408
        %v1053 = vunpack.c.0.s8 %v1052
        %v1054 = vlaneseq
        %v1055 = vshrl.u32 %v1054, 7
        %v1056 = vsub.s32 %v1053, %v1055
        %v1057 = vrot.slane %v1049, %v1056
        %v1059 = vunpack.c.l.s4 1934713408
        %v1060 = vunpack.c.0.s8 %v1059
        %v1061 = vlaneseq
        %v1062 = vshrl.u32 %v1061, 7
        %v1063 = vsub.s32 %v1060, %v1062
        %v1064 = vrot.slane %v1050, %v1063
        %v1065 = vcombine.high %v1041, 0.0
        %v1066 = vcombine.high %v1048, 0.0
        %v1067 = vcombine.high %v1057, 0.0
        %v1068 = vcombine.high %v1064, 0.0
        %v1069 = vcombine.low %v1041, %v1048
        %v1071 = vunpack.c.l.s4 1983009808
        %v1072 = vunpack.c.0.s8 %v1071
        %v1073 = vlaneseq
        %v1074 = vshrl.u32 %v1073, 7
        %v1075 = vsub.s32 %v1072, %v1074
        %v1076 = vrot.slane %v1069, %v1075
        %v1077 = vcombine.low %v1065, %v1066
        %v1079 = vunpack.c.l.s4 1983009808
        %v1080 = vunpack.c.0.s8 %v1079
        %v1081 = vlaneseq
        %v1082 = vshrl.u32 %v1081, 7
        %v1083 = vsub.s32 %v1080, %v1082
        %v1084 = vrot.slane %v1077, %v1083
        %v1085 = vcombine.low %v1057, %v1064
        %v1087 = vunpack.c.l.s4 1983009808
        %v1088 = vunpack.c.0.s8 %v1087
        %v1089 = vlaneseq
        %v1090 = vshrl.u32 %v1089, 7
        %v1091 = vsub.s32 %v1088, %v1090
        %v1092 = vrot.slane %v1085, %v1091
        %v1093 = vcombine.low %v1067, %v1068
        %v1095 = vunpack.c.l.s4 1983009808
        %v1096 = vunpack.c.0.s8 %v1095
        %v1097 = vlaneseq
        %v1098 = vshrl.u32 %v1097, 7
        %v1099 = vsub.s32 %v1096, %v1098
        %v1100 = vrot.slane %v1093, %v1099
        %v1101 = vcombine.low %v1076, %v1084
        %v1102 = vcombine.high %v1076, %v1084
        %v1104 = vunpack.c.l.s4 1934713408
        %v1105 = vunpack.c.0.s8 %v1104
        %v1106 = vlaneseq
        %v1107 = vshrl.u32 %v1106, 7
        %v1108 = vsub.s32 %v1105, %v1107
        %v1109 = vrot.slane %v1101, %v1108
        %v1111 = vunpack.c.l.s4 1934713408
        %v1112 = vunpack.c.0.s8 %v1111
        %v1113 = vlaneseq
        %v1114 = vshrl.u32 %v1113, 7
        %v1115 = vsub.s32 %v1112, %v1114
        %v1116 = vrot.slane %v1102, %v1115
        %v1117 = vcombine.low %v1092, %v1100
        %v1118 = vcombine.high %v1092, %v1100
        %v1120 = vunpack.c.l.s4 1934713408
        %v1121 = vunpack.c.0.s8 %v1120
        %v1122 = vlaneseq
        %v1123 = vshrl.u32 %v1122, 7
        %v1124 = vsub.s32 %v1121, %v1123
        %v1125 = vrot.slane %v1117, %v1124
        %v1127 = vunpack.c.l.s4 1934713408
        %v1128 = vunpack.c.0.s8 %v1127
        %v1129 = vlaneseq
        %v1130 = vshrl.u32 %v1129, 7
        %v1131 = vsub.s32 %v1128, %v1130
        %v1132 = vrot.slane %v1118, %v1131
        %v1133 = vcombine.low %v1109, %v1125
        %v1134 = vcombine.high %v1109, %v1125
        %v1135 = vcombine.low %v1116, %v1132
        %v1136 = vcombine.high %v1116, %v1132
        %v1137 = vpack.c.bf16 %v1133, %v1133
        %v1138 = vpack.c.bf16 %v1134, %v1134
        %v1139 = vpack.c.bf16 %v1135, %v1135
        %v1140 = vpack.c.bf16 %v1136, %v1136
        %s1141 = smul.u32 %s31, 4
        %s1142 = smul.addr %s1141, 4
        %s1143 = scalar_lea.vmem [#allocation2], %s1142
        %vm1144 = vcmask 125952
        %1145 = vst.msk [vmem:[%s1143] sm:$0xf] %vm1144, %v987
        %1146 = vst.msk [vmem:[%s1143 + $0x4] sm:$0xf] %vm1144, %v988
        %1147 = vst.msk [vmem:[%s1143 + $0x8] sm:$0xf] %vm1144, %v989
        %1148 = vst.msk [vmem:[%s1143 + $0xc] sm:$0xf] %vm1144, %v990
        %s1149 = smul.addr %s1141, 4
        %s1150 = scalar_lea.vmem [#allocation3], %s1149
        %1151 = vst.msk [vmem:[%s1150] sm:$0xf] %vm1144, %v1137
        %1152 = vst.msk [vmem:[%s1150 + $0x4] sm:$0xf] %vm1144, %v1138
        %1153 = vst.msk [vmem:[%s1150 + $0x8] sm:$0xf] %vm1144, %v1139
        %1154 = vst.msk [vmem:[%s1150 + $0xc] sm:$0xf] %vm1144, %v1140
        %vm1155 = vcmask 7168
        %1156 = vst.msk [vmem:[#allocation4] sm:$0xff] %vm1155, -1e+30
        %1157 = vst.msk [vmem:[#allocation4 + $0x8] sm:$0xff] %vm1155, -1e+30
        %1158 = vst.msk [vmem:[#allocation4 + $0x10] sm:$0xff] %vm1155, -1e+30
        %1159 = vst.msk [vmem:[#allocation4 + $0x18] sm:$0xff] %vm1155, -1e+30
        %1160 = vst.msk [vmem:[#allocation5] sm:$0xff] %vm1155, 0.0
        %1161 = vst.msk [vmem:[#allocation5 + $0x8] sm:$0xff] %vm1155, 0.0
        %1162 = vst.msk [vmem:[#allocation5 + $0x10] sm:$0xff] %vm1155, 0.0
        %1163 = vst.msk [vmem:[#allocation5 + $0x18] sm:$0xff] %vm1155, 0.0
        %vm1164 = vcmask 130048
        %1165 = vst.msk [vmem:[#allocation6] sm:$0xff] %vm1164, 0.0
        %1166 = vst.msk [vmem:[#allocation6 + $0x8] sm:$0xff] %vm1164, 0.0
        %1167 = vst.msk [vmem:[#allocation6 + $0x10] sm:$0xff] %vm1164, 0.0
        %1168 = vst.msk [vmem:[#allocation6 + $0x18] sm:$0xff] %vm1164, 0.0
        // While loop
        $region69: #{tpu_custom_call.1} parent=67 // loop_pre_header
          _
        $region70: #{tpu_custom_call.1} parent=67 // loop_header
          %s1170 = sphi 0, %s1172
          %p1171 = scmp.ge.s32.totalorder %s1170, %s31
        $region71: #{tpu_custom_call.1} parent=67 // loop_header_branch
          %1174 = sbr.rel (%p1171) target = $region75
        $region72: #{tpu_custom_call.1} parent=67 // loop_body
          %s1175 = smul.u32 %s1170, 4
          %s1176 = smul.addr %s1175, 4
          %s1177 = scalar_lea.vmem [#allocation2], %s1176
          %v1178 = vld [vmem:[%s1177] sm:$0xf]
          %v1179 = vld [vmem:[%s1177 + $0x4] sm:$0xf]
          %v1180 = vld [vmem:[%s1177 + $0x8] sm:$0xf]
          %v1181 = vld [vmem:[%s1177 + $0xc] sm:$0xf]
          %s1182 = smul.addr %s1175, 4
          %s1183 = scalar_lea.vmem [#allocation3], %s1182
          %v1184 = vld [vmem:[%s1183] sm:$0xf]
          %v1185 = vld [vmem:[%s1183 + $0x4] sm:$0xf]
          %v1186 = vld [vmem:[%s1183 + $0x8] sm:$0xf]
          %v1187 = vld [vmem:[%s1183 + $0xc] sm:$0xf]
          %v1189 = vsel %vm1164, %v837, 0
          %v1192 = vsel %vm1164, %v1178, 0
          %1194 = vmatprep.subr.bf16.mxu0 0
          %1195 = vmatpush1.bf16.xpose.msra.mxu0 0
          %1196 = vmatprep.subr.bf16.mxu0 0
          %1197 = vmatpush1.bf16.xpose.msra.mxu0 0
          %1198 = vmatprep.subr.bf16.mxu0 0
          %1199 = vmatpush1.bf16.xpose.msra.mxu0 0
          %1200 = vmatprep.subr.bf16.mxu0 0
          %1201 = vmatpush1.bf16.xpose.msra.mxu0 0
          %1202 = vmatprep.subr.bf16.mxu0 0
          %1203 = vmatpush1.bf16.xpose.msra.mxu0 0
          %1204 = vmatprep.subr.bf16.mxu0 0
          %1205 = vmatpush1.bf16.xpose.msra.mxu0 0
          %1206 = vmatprep.subr.bf16.mxu0 0
          %1207 = vmatpush1.bf16.xpose.msra.mxu0 0
          %1208 = vmatprep.subr.bf16.mxu0 0
          %1209 = vmatpush1.bf16.xpose.msra.mxu0 %v1192
          %1210 = vmatprep.subr.bf16.mxu0 0
          %1211 = vmatpush2.bf16.xpose.msra.mxu0 0
          %1212 = vmatprep.subr.bf16.mxu0 0
          %1213 = vmatpush2.bf16.xpose.msra.mxu0 0
          %1214 = vmatprep.subr.bf16.mxu0 0
          %1215 = vmatpush2.bf16.xpose.msra.mxu0 0
          %1216 = vmatprep.subr.bf16.mxu0 0
          %1217 = vmatpush2.bf16.xpose.msra.mxu0 0
          %1218 = vmatprep.subr.bf16.mxu0 0
          %1219 = vmatpush2.bf16.xpose.msra.mxu0 0
          %1220 = vmatprep.subr.bf16.mxu0 0
          %1221 = vmatpush2.bf16.xpose.msra.mxu0 0
          %1222 = vmatprep.subr.bf16.mxu0 0
          %1223 = vmatpush2.bf16.xpose.msra.mxu0 0
          %1224 = vmatprep.subr.bf16.mxu0 0
          %1225 = vmatpush2.bf16.xpose.msra.mxu0 0
          %1226 = vmatprep.mubr.bf16.mxu0 0
          %1227 = vmatmul.mubr.bf16.gmra.mxu0 %v1189
          %v1228 = vpop.f32.mrf.mxu0
          %v1229 = vadd.f32 0.0, %v1228
          %v1230 = vpop.f32.mrf.mxu0
          %v1231 = vpop.f32.mrf.mxu0
          %v1232 = vpop.f32.mrf.mxu0
          %1233 = vdwg.mxu0
          %v1235 = vsel %vm1164, %v838, 0
          %v1238 = vsel %vm1164, %v1179, 0
          %1240 = vmatprep.subr.bf16.mxu0 0
          %1241 = vmatpush1.bf16.xpose.msra.mxu0 0
          %1242 = vmatprep.subr.bf16.mxu0 0
          %1243 = vmatpush1.bf16.xpose.msra.mxu0 0
          %1244 = vmatprep.subr.bf16.mxu0 0
          %1245 = vmatpush1.bf16.xpose.msra.mxu0 0
          %1246 = vmatprep.subr.bf16.mxu0 0
          %1247 = vmatpush1.bf16.xpose.msra.mxu0 0
          %1248 = vmatprep.subr.bf16.mxu0 0
          %1249 = vmatpush1.bf16.xpose.msra.mxu0 0
          %1250 = vmatprep.subr.bf16.mxu0 0
          %1251 = vmatpush1.bf16.xpose.msra.mxu0 0
          %1252 = vmatprep.subr.bf16.mxu0 0
          %1253 = vmatpush1.bf16.xpose.msra.mxu0 0
          %1254 = vmatprep.subr.bf16.mxu0 0
          %1255 = vmatpush1.bf16.xpose.msra.mxu0 %v1238
          %1256 = vmatprep.subr.bf16.mxu0 0
          %1257 = vmatpush2.bf16.xpose.msra.mxu0 0
          %1258 = vmatprep.subr.bf16.mxu0 0
          %1259 = vmatpush2.bf16.xpose.msra.mxu0 0
          %1260 = vmatprep.subr.bf16.mxu0 0
          %1261 = vmatpush2.bf16.xpose.msra.mxu0 0
          %1262 = vmatprep.subr.bf16.mxu0 0
          %1263 = vmatpush2.bf16.xpose.msra.mxu0 0
          %1264 = vmatprep.subr.bf16.mxu0 0
          %1265 = vmatpush2.bf16.xpose.msra.mxu0 0
          %1266 = vmatprep.subr.bf16.mxu0 0
          %1267 = vmatpush2.bf16.xpose.msra.mxu0 0
          %1268 = vmatprep.subr.bf16.mxu0 0
          %1269 = vmatpush2.bf16.xpose.msra.mxu0 0
          %1270 = vmatprep.subr.bf16.mxu0 0
          %1271 = vmatpush2.bf16.xpose.msra.mxu0 0
          %1272 = vmatprep.mubr.bf16.mxu0 0
          %1273 = vmatmul.mubr.bf16.gmra.mxu0 %v1235
          %v1274 = vpop.f32.mrf.mxu0
          %v1275 = vadd.f32 0.0, %v1274
          %v1276 = vpop.f32.mrf.mxu0
          %v1277 = vpop.f32.mrf.mxu0
          %v1278 = vpop.f32.mrf.mxu0
          %1279 = vdwg.mxu0
          %v1281 = vsel %vm1164, %v839, 0
          %v1284 = vsel %vm1164, %v1180, 0
          %1286 = vmatprep.subr.bf16.mxu0 0
          %1287 = vmatpush1.bf16.xpose.msra.mxu0 0
          %1288 = vmatprep.subr.bf16.mxu0 0
          %1289 = vmatpush1.bf16.xpose.msra.mxu0 0
          %1290 = vmatprep.subr.bf16.mxu0 0
          %1291 = vmatpush1.bf16.xpose.msra.mxu0 0
          %1292 = vmatprep.subr.bf16.mxu0 0
          %1293 = vmatpush1.bf16.xpose.msra.mxu0 0
          %1294 = vmatprep.subr.bf16.mxu0 0
          %1295 = vmatpush1.bf16.xpose.msra.mxu0 0
          %1296 = vmatprep.subr.bf16.mxu0 0
          %1297 = vmatpush1.bf16.xpose.msra.mxu0 0
          %1298 = vmatprep.subr.bf16.mxu0 0
          %1299 = vmatpush1.bf16.xpose.msra.mxu0 0
          %1300 = vmatprep.subr.bf16.mxu0 0
          %1301 = vmatpush1.bf16.xpose.msra.mxu0 %v1284
          %1302 = vmatprep.subr.bf16.mxu0 0
          %1303 = vmatpush2.bf16.xpose.msra.mxu0 0
          %1304 = vmatprep.subr.bf16.mxu0 0
          %1305 = vmatpush2.bf16.xpose.msra.mxu0 0
          %1306 = vmatprep.subr.bf16.mxu0 0
          %1307 = vmatpush2.bf16.xpose.msra.mxu0 0
          %1308 = vmatprep.subr.bf16.mxu0 0
          %1309 = vmatpush2.bf16.xpose.msra.mxu0 0
          %1310 = vmatprep.subr.bf16.mxu0 0
          %1311 = vmatpush2.bf16.xpose.msra.mxu0 0
          %1312 = vmatprep.subr.bf16.mxu0 0
          %1313 = vmatpush2.bf16.xpose.msra.mxu0 0
          %1314 = vmatprep.subr.bf16.mxu0 0
          %1315 = vmatpush2.bf16.xpose.msra.mxu0 0
          %1316 = vmatprep.subr.bf16.mxu0 0
          %1317 = vmatpush2.bf16.xpose.msra.mxu0 0
          %1318 = vmatprep.mubr.bf16.mxu0 0
          %1319 = vmatmul.mubr.bf16.gmra.mxu0 %v1281
          %v1320 = vpop.f32.mrf.mxu0
          %v1321 = vadd.f32 0.0, %v1320
          %v1322 = vpop.f32.mrf.mxu0
          %v1323 = vpop.f32.mrf.mxu0
          %v1324 = vpop.f32.mrf.mxu0
          %1325 = vdwg.mxu0
          %v1327 = vsel %vm1164, %v840, 0
          %v1330 = vsel %vm1164, %v1181, 0
          %1332 = vmatprep.subr.bf16.mxu0 0
          %1333 = vmatpush1.bf16.xpose.msra.mxu0 0
          %1334 = vmatprep.subr.bf16.mxu0 0
          %1335 = vmatpush1.bf16.xpose.msra.mxu0 0
          %1336 = vmatprep.subr.bf16.mxu0 0
          %1337 = vmatpush1.bf16.xpose.msra.mxu0 0
          %1338 = vmatprep.subr.bf16.mxu0 0
          %1339 = vmatpush1.bf16.xpose.msra.mxu0 0
          %1340 = vmatprep.subr.bf16.mxu0 0
          %1341 = vmatpush1.bf16.xpose.msra.mxu0 0
          %1342 = vmatprep.subr.bf16.mxu0 0
          %1343 = vmatpush1.bf16.xpose.msra.mxu0 0
          %1344 = vmatprep.subr.bf16.mxu0 0
          %1345 = vmatpush1.bf16.xpose.msra.mxu0 0
          %1346 = vmatprep.subr.bf16.mxu0 0
          %1347 = vmatpush1.bf16.xpose.msra.mxu0 %v1330
          %1348 = vmatprep.subr.bf16.mxu0 0
          %1349 = vmatpush2.bf16.xpose.msra.mxu0 0
          %1350 = vmatprep.subr.bf16.mxu0 0
          %1351 = vmatpush2.bf16.xpose.msra.mxu0 0
          %1352 = vmatprep.subr.bf16.mxu0 0
          %1353 = vmatpush2.bf16.xpose.msra.mxu0 0
          %1354 = vmatprep.subr.bf16.mxu0 0
          %1355 = vmatpush2.bf16.xpose.msra.mxu0 0
          %1356 = vmatprep.subr.bf16.mxu0 0
          %1357 = vmatpush2.bf16.xpose.msra.mxu0 0
          %1358 = vmatprep.subr.bf16.mxu0 0
          %1359 = vmatpush2.bf16.xpose.msra.mxu0 0
          %1360 = vmatprep.subr.bf16.mxu0 0
          %1361 = vmatpush2.bf16.xpose.msra.mxu0 0
          %1362 = vmatprep.subr.bf16.mxu0 0
          %1363 = vmatpush2.bf16.xpose.msra.mxu0 0
          %1364 = vmatprep.mubr.bf16.mxu0 0
          %1365 = vmatmul.mubr.bf16.gmra.mxu0 %v1327
          %v1366 = vpop.f32.mrf.mxu0
          %v1367 = vadd.f32 0.0, %v1366
          %v1368 = vpop.f32.mrf.mxu0
          %v1369 = vpop.f32.mrf.mxu0
          %v1370 = vpop.f32.mrf.mxu0
          %1371 = vdwg.mxu0
          %v1372 = vld [vmem:[#allocation4] sm:$0xff]
          %v1373 = vld [vmem:[#allocation4 + $0x8] sm:$0xff]
          %v1374 = vld [vmem:[#allocation4 + $0x10] sm:$0xff]
          %v1375 = vld [vmem:[#allocation4 + $0x18] sm:$0xff]
          %vm1376 = vcmask 64512
          %v1377 = vsel %vm1376, %v1229, -inf
          %1378 = vmax.xlane.f32.xlu0 %v1377
          %v1379 = vpop.xlane.xlu0 %1378
          %v1380 = vsel %vm1376, %v1275, -inf
          %1381 = vmax.xlane.f32.xlu0 %v1380
          %v1382 = vpop.xlane.xlu0 %1381
          %v1383 = vsel %vm1376, %v1321, -inf
          %1384 = vmax.xlane.f32.xlu0 %v1383
          %v1385 = vpop.xlane.xlu0 %1384
          %v1386 = vsel %vm1376, %v1367, -inf
          %1387 = vmax.xlane.f32.xlu0 %v1386
          %v1388 = vpop.xlane.xlu0 %1387
          %v1389 = vmax.f32 %v1372, %v1379
          %v1390 = vmax.f32 %v1373, %v1382
          %v1391 = vmax.f32 %v1374, %v1385
          %v1392 = vmax.f32 %v1375, %v1388
          %v1393 = vsub.f32 %v1372, %v1389
          %v1394 = vsub.f32 %v1373, %v1390
          %v1395 = vsub.f32 %v1374, %v1391
          %v1396 = vsub.f32 %v1375, %v1392
          %v1397 = vmul.f32 %v1393, 1.442695
          %v1398 = vpow.pop %v1397
          %v1399 = vmul.f32 %v1394, 1.442695
          %v1400 = vpow.pop %v1399
          %v1401 = vmul.f32 %v1395, 1.442695
          %v1402 = vpow.pop %v1401
          %v1403 = vmul.f32 %v1396, 1.442695
          %v1404 = vpow.pop %v1403
          %1406 = vset.pattern.permute.xlu0 0
          %1407 = vperm.xlu0 %1406, %v1389
          %v1408 = vpop.permute.xlu0 %1407
          %1411 = vset.pattern.permute.xlu0 0
          %1412 = vperm.xlu0 %1411, %v1390
          %v1413 = vpop.permute.xlu0 %1412
          %1416 = vset.pattern.permute.xlu0 0
          %1417 = vperm.xlu0 %1416, %v1391
          %v1418 = vpop.permute.xlu0 %1417
          %1421 = vset.pattern.permute.xlu0 0
          %1422 = vperm.xlu0 %1421, %v1392
          %v1423 = vpop.permute.xlu0 %1422
          %v1425 = vsub.f32 %v1229, %v1408
          %v1426 = vsub.f32 %v1275, %v1413
          %v1427 = vsub.f32 %v1321, %v1418
          %v1428 = vsub.f32 %v1367, %v1423
          %v1429 = vmul.f32 %v1425, 1.442695
          %v1430 = vpow.pop %v1429
          %v1431 = vmul.f32 %v1426, 1.442695
          %v1432 = vpow.pop %v1431
          %v1433 = vmul.f32 %v1427, 1.442695
          %v1434 = vpow.pop %v1433
          %v1435 = vmul.f32 %v1428, 1.442695
          %v1436 = vpow.pop %v1435
          %v1437 = vld [vmem:[#allocation5] sm:$0xff]
          %v1438 = vld [vmem:[#allocation5 + $0x8] sm:$0xff]
          %v1439 = vld [vmem:[#allocation5 + $0x10] sm:$0xff]
          %v1440 = vld [vmem:[#allocation5 + $0x18] sm:$0xff]
          %v1441 = vmul.f32 %v1398, %v1437
          %v1442 = vmul.f32 %v1400, %v1438
          %v1443 = vmul.f32 %v1402, %v1439
          %v1444 = vmul.f32 %v1404, %v1440
          %v1445 = vsel %vm1376, %v1430, 0.0
          %1446 = vadd.xlane.f32.xlu0 %v1445
          %v1447 = vpop.xlane.xlu0 %1446
          %v1448 = vsel %vm1376, %v1432, 0.0
          %1449 = vadd.xlane.f32.xlu0 %v1448
          %v1450 = vpop.xlane.xlu0 %1449
          %v1451 = vsel %vm1376, %v1434, 0.0
          %1452 = vadd.xlane.f32.xlu0 %v1451
          %v1453 = vpop.xlane.xlu0 %1452
          %v1454 = vsel %vm1376, %v1436, 0.0
          %1455 = vadd.xlane.f32.xlu0 %v1454
          %v1456 = vpop.xlane.xlu0 %1455
          %v1457 = vadd.f32 %v1441, %v1447
          %v1458 = vadd.f32 %v1442, %v1450
          %v1459 = vadd.f32 %v1443, %v1453
          %v1460 = vadd.f32 %v1444, %v1456
          %1461 = vst.msk [vmem:[#allocation5] sm:$0xff] %vm1155, %v1457
          %1462 = vst.msk [vmem:[#allocation5 + $0x8] sm:$0xff] %vm1155, %v1458
          %1463 = vst.msk [vmem:[#allocation5 + $0x10] sm:$0xff] %vm1155, %v1459
          %1464 = vst.msk [vmem:[#allocation5 + $0x18] sm:$0xff] %vm1155, %v1460
          %v1465 = vld [vmem:[#allocation6] sm:$0xff]
          %v1466 = vld [vmem:[#allocation6 + $0x8] sm:$0xff]
          %v1467 = vld [vmem:[#allocation6 + $0x10] sm:$0xff]
          %v1468 = vld [vmem:[#allocation6 + $0x18] sm:$0xff]
          %1470 = vset.pattern.permute.xlu0 0
          %1471 = vperm.xlu0 %1470, %v1398
          %v1472 = vpop.permute.xlu0 %1471
          %1475 = vset.pattern.permute.xlu0 0
          %1476 = vperm.xlu0 %1475, %v1400
          %v1477 = vpop.permute.xlu0 %1476
          %1480 = vset.pattern.permute.xlu0 0
          %1481 = vperm.xlu0 %1480, %v1402
          %v1482 = vpop.permute.xlu0 %1481
          %1485 = vset.pattern.permute.xlu0 0
          %1486 = vperm.xlu0 %1485, %v1404
          %v1487 = vpop.permute.xlu0 %1486
          %v1489 = vmul.f32 %v1472, %v1465
          %v1490 = vmul.f32 %v1477, %v1466
          %v1491 = vmul.f32 %v1482, %v1467
          %v1492 = vmul.f32 %v1487, %v1468
          %v1493 = vpack.c.bf16 %v1430, %v1430
          %v1494 = vpack.c.bf16 %v1432, %v1432
          %v1495 = vpack.c.bf16 %v1434, %v1434
          %v1496 = vpack.c.bf16 %v1436, %v1436
          %v1498 = vsel %vm1376, %v1493, 0
          %vm1500 = vcmask 1043456
          %v1502 = vsel %vm1500, %v1184, 0
          %1504 = vmatprep.subr.bf16.mxu0 0
          %1505 = vmatpush1.bf16.msra.mxu0 0
          %1506 = vmatprep.subr.bf16.mxu0 0
          %1507 = vmatpush1.bf16.msra.mxu0 0
          %1508 = vmatprep.subr.bf16.mxu0 0
          %1509 = vmatpush1.bf16.msra.mxu0 0
          %1510 = vmatprep.subr.bf16.mxu0 0
          %1511 = vmatpush1.bf16.msra.mxu0 0
          %1512 = vmatprep.subr.bf16.mxu0 0
          %1513 = vmatpush1.bf16.msra.mxu0 0
          %1514 = vmatprep.subr.bf16.mxu0 0
          %1515 = vmatpush1.bf16.msra.mxu0 0
          %1516 = vmatprep.subr.bf16.mxu0 0
          %1517 = vmatpush1.bf16.msra.mxu0 0
          %1518 = vmatprep.subr.bf16.mxu0 0
          %1519 = vmatpush1.bf16.msra.mxu0 %v1502
          %1520 = vmatprep.subr.bf16.mxu0 0
          %1521 = vmatpush2.bf16.msra.mxu0 0
          %1522 = vmatprep.subr.bf16.mxu0 0
          %1523 = vmatpush2.bf16.msra.mxu0 0
          %1524 = vmatprep.subr.bf16.mxu0 0
          %1525 = vmatpush2.bf16.msra.mxu0 0
          %1526 = vmatprep.subr.bf16.mxu0 0
          %1527 = vmatpush2.bf16.msra.mxu0 0
          %1528 = vmatprep.subr.bf16.mxu0 0
          %1529 = vmatpush2.bf16.msra.mxu0 0
          %1530 = vmatprep.subr.bf16.mxu0 0
          %1531 = vmatpush2.bf16.msra.mxu0 0
          %1532 = vmatprep.subr.bf16.mxu0 0
          %1533 = vmatpush2.bf16.msra.mxu0 0
          %1534 = vmatprep.subr.bf16.mxu0 0
          %1535 = vmatpush2.bf16.msra.mxu0 0
          %1536 = vmatprep.mubr.bf16.mxu0 0
          %1537 = vmatmul.mubr.bf16.gmra.mxu0 %v1498
          %v1538 = vpop.f32.mrf.mxu0
          %v1539 = vadd.f32 0.0, %v1538
          %v1540 = vpop.f32.mrf.mxu0
          %v1541 = vpop.f32.mrf.mxu0
          %v1542 = vpop.f32.mrf.mxu0
          %1543 = vdwg.mxu0
          %v1545 = vsel %vm1376, %v1494, 0
          %v1548 = vsel %vm1500, %v1185, 0
          %1550 = vmatprep.subr.bf16.mxu0 0
          %1551 = vmatpush1.bf16.msra.mxu0 0
          %1552 = vmatprep.subr.bf16.mxu0 0
          %1553 = vmatpush1.bf16.msra.mxu0 0
          %1554 = vmatprep.subr.bf16.mxu0 0
          %1555 = vmatpush1.bf16.msra.mxu0 0
          %1556 = vmatprep.subr.bf16.mxu0 0
          %1557 = vmatpush1.bf16.msra.mxu0 0
          %1558 = vmatprep.subr.bf16.mxu0 0
          %1559 = vmatpush1.bf16.msra.mxu0 0
          %1560 = vmatprep.subr.bf16.mxu0 0
          %1561 = vmatpush1.bf16.msra.mxu0 0
          %1562 = vmatprep.subr.bf16.mxu0 0
          %1563 = vmatpush1.bf16.msra.mxu0 0
          %1564 = vmatprep.subr.bf16.mxu0 0
          %1565 = vmatpush1.bf16.msra.mxu0 %v1548
          %1566 = vmatprep.subr.bf16.mxu0 0
          %1567 = vmatpush2.bf16.msra.mxu0 0
          %1568 = vmatprep.subr.bf16.mxu0 0
          %1569 = vmatpush2.bf16.msra.mxu0 0
          %1570 = vmatprep.subr.bf16.mxu0 0
          %1571 = vmatpush2.bf16.msra.mxu0 0
          %1572 = vmatprep.subr.bf16.mxu0 0
          %1573 = vmatpush2.bf16.msra.mxu0 0
          %1574 = vmatprep.subr.bf16.mxu0 0
          %1575 = vmatpush2.bf16.msra.mxu0 0
          %1576 = vmatprep.subr.bf16.mxu0 0
          %1577 = vmatpush2.bf16.msra.mxu0 0
          %1578 = vmatprep.subr.bf16.mxu0 0
          %1579 = vmatpush2.bf16.msra.mxu0 0
          %1580 = vmatprep.subr.bf16.mxu0 0
          %1581 = vmatpush2.bf16.msra.mxu0 0
          %1582 = vmatprep.mubr.bf16.mxu0 0
          %1583 = vmatmul.mubr.bf16.gmra.mxu0 %v1545
          %v1584 = vpop.f32.mrf.mxu0
          %v1585 = vadd.f32 0.0, %v1584
          %v1586 = vpop.f32.mrf.mxu0
          %v1587 = vpop.f32.mrf.mxu0
          %v1588 = vpop.f32.mrf.mxu0
          %1589 = vdwg.mxu0
          %v1591 = vsel %vm1376, %v1495, 0
          %v1594 = vsel %vm1500, %v1186, 0
          %1596 = vmatprep.subr.bf16.mxu0 0
          %1597 = vmatpush1.bf16.msra.mxu0 0
          %1598 = vmatprep.subr.bf16.mxu0 0
          %1599 = vmatpush1.bf16.msra.mxu0 0
          %1600 = vmatprep.subr.bf16.mxu0 0
          %1601 = vmatpush1.bf16.msra.mxu0 0
          %1602 = vmatprep.subr.bf16.mxu0 0
          %1603 = vmatpush1.bf16.msra.mxu0 0
          %1604 = vmatprep.subr.bf16.mxu0 0
          %1605 = vmatpush1.bf16.msra.mxu0 0
          %1606 = vmatprep.subr.bf16.mxu0 0
          %1607 = vmatpush1.bf16.msra.mxu0 0
          %1608 = vmatprep.subr.bf16.mxu0 0
          %1609 = vmatpush1.bf16.msra.mxu0 0
          %1610 = vmatprep.subr.bf16.mxu0 0
          %1611 = vmatpush1.bf16.msra.mxu0 %v1594
          %1612 = vmatprep.subr.bf16.mxu0 0
          %1613 = vmatpush2.bf16.msra.mxu0 0
          %1614 = vmatprep.subr.bf16.mxu0 0
          %1615 = vmatpush2.bf16.msra.mxu0 0
          %1616 = vmatprep.subr.bf16.mxu0 0
          %1617 = vmatpush2.bf16.msra.mxu0 0
          %1618 = vmatprep.subr.bf16.mxu0 0
          %1619 = vmatpush2.bf16.msra.mxu0 0
          %1620 = vmatprep.subr.bf16.mxu0 0
          %1621 = vmatpush2.bf16.msra.mxu0 0
          %1622 = vmatprep.subr.bf16.mxu0 0
          %1623 = vmatpush2.bf16.msra.mxu0 0
          %1624 = vmatprep.subr.bf16.mxu0 0
          %1625 = vmatpush2.bf16.msra.mxu0 0
          %1626 = vmatprep.subr.bf16.mxu0 0
          %1627 = vmatpush2.bf16.msra.mxu0 0
          %1628 = vmatprep.mubr.bf16.mxu0 0
          %1629 = vmatmul.mubr.bf16.gmra.mxu0 %v1591
          %v1630 = vpop.f32.mrf.mxu0
          %v1631 = vadd.f32 0.0, %v1630
          %v1632 = vpop.f32.mrf.mxu0
          %v1633 = vpop.f32.mrf.mxu0
          %v1634 = vpop.f32.mrf.mxu0
          %1635 = vdwg.mxu0
          %v1637 = vsel %vm1376, %v1496, 0
          %v1640 = vsel %vm1500, %v1187, 0
          %1642 = vmatprep.subr.bf16.mxu0 0
          %1643 = vmatpush1.bf16.msra.mxu0 0
          %1644 = vmatprep.subr.bf16.mxu0 0
          %1645 = vmatpush1.bf16.msra.mxu0 0
          %1646 = vmatprep.subr.bf16.mxu0 0
          %1647 = vmatpush1.bf16.msra.mxu0 0
          %1648 = vmatprep.subr.bf16.mxu0 0
          %1649 = vmatpush1.bf16.msra.mxu0 0
          %1650 = vmatprep.subr.bf16.mxu0 0
          %1651 = vmatpush1.bf16.msra.mxu0 0
          %1652 = vmatprep.subr.bf16.mxu0 0
          %1653 = vmatpush1.bf16.msra.mxu0 0
          %1654 = vmatprep.subr.bf16.mxu0 0
          %1655 = vmatpush1.bf16.msra.mxu0 0
          %1656 = vmatprep.subr.bf16.mxu0 0
          %1657 = vmatpush1.bf16.msra.mxu0 %v1640
          %1658 = vmatprep.subr.bf16.mxu0 0
          %1659 = vmatpush2.bf16.msra.mxu0 0
          %1660 = vmatprep.subr.bf16.mxu0 0
          %1661 = vmatpush2.bf16.msra.mxu0 0
          %1662 = vmatprep.subr.bf16.mxu0 0
          %1663 = vmatpush2.bf16.msra.mxu0 0
          %1664 = vmatprep.subr.bf16.mxu0 0
          %1665 = vmatpush2.bf16.msra.mxu0 0
          %1666 = vmatprep.subr.bf16.mxu0 0
          %1667 = vmatpush2.bf16.msra.mxu0 0
          %1668 = vmatprep.subr.bf16.mxu0 0
          %1669 = vmatpush2.bf16.msra.mxu0 0
          %1670 = vmatprep.subr.bf16.mxu0 0
          %1671 = vmatpush2.bf16.msra.mxu0 0
          %1672 = vmatprep.subr.bf16.mxu0 0
          %1673 = vmatpush2.bf16.msra.mxu0 0
          %1674 = vmatprep.mubr.bf16.mxu0 0
          %1675 = vmatmul.mubr.bf16.gmra.mxu0 %v1637
          %v1676 = vpop.f32.mrf.mxu0
          %v1677 = vadd.f32 0.0, %v1676
          %v1678 = vpop.f32.mrf.mxu0
          %v1679 = vpop.f32.mrf.mxu0
          %v1680 = vpop.f32.mrf.mxu0
          %1681 = vdwg.mxu0
          %v1682 = vadd.f32 %v1489, %v1539
          %v1683 = vadd.f32 %v1490, %v1585
          %v1684 = vadd.f32 %v1491, %v1631
          %v1685 = vadd.f32 %v1492, %v1677
          %1686 = vst.msk [vmem:[#allocation6] sm:$0xff] %vm1164, %v1682
          %1687 = vst.msk [vmem:[#allocation6 + $0x8] sm:$0xff] %vm1164, %v1683
          %1688 = vst.msk [vmem:[#allocation6 + $0x10] sm:$0xff] %vm1164, %v1684
          %1689 = vst.msk [vmem:[#allocation6 + $0x18] sm:$0xff] %vm1164, %v1685
          %1690 = vst.msk [vmem:[#allocation4] sm:$0xff] %vm1155, %v1389
          %1691 = vst.msk [vmem:[#allocation4 + $0x8] sm:$0xff] %vm1155, %v1390
          %1692 = vst.msk [vmem:[#allocation4 + $0x10] sm:$0xff] %vm1155, %v1391
          %1693 = vst.msk [vmem:[#allocation4 + $0x18] sm:$0xff] %vm1155, %v1392
        $region73: #{tpu_custom_call.1} parent=67 // loop_footer
          %s1172 = sadd.s32 %s1170, 1
        $region74: #{tpu_custom_call.1} parent=67 // loop_footer_branch
          %1169 = sbr.rel target = $region70
        $region75: #{tpu_custom_call.1} parent=67 // loop_exit
          _
        %v1695 = vsel %vm1164, %v837, 0
        %v1698 = vsel %vm1164, %v987, 0
        %1700 = vmatprep.subr.bf16.mxu0 0
        %1701 = vmatpush1.bf16.xpose.msra.mxu0 0
        %1702 = vmatprep.subr.bf16.mxu0 0
        %1703 = vmatpush1.bf16.xpose.msra.mxu0 0
        %1704 = vmatprep.subr.bf16.mxu0 0
        %1705 = vmatpush1.bf16.xpose.msra.mxu0 0
        %1706 = vmatprep.subr.bf16.mxu0 0
        %1707 = vmatpush1.bf16.xpose.msra.mxu0 0
        %1708 = vmatprep.subr.bf16.mxu0 0
        %1709 = vmatpush1.bf16.xpose.msra.mxu0 0
        %1710 = vmatprep.subr.bf16.mxu0 0
        %1711 = vmatpush1.bf16.xpose.msra.mxu0 0
        %1712 = vmatprep.subr.bf16.mxu0 0
        %1713 = vmatpush1.bf16.xpose.msra.mxu0 0
        %1714 = vmatprep.subr.bf16.mxu0 0
        %1715 = vmatpush1.bf16.xpose.msra.mxu0 %v1698
        %1716 = vmatprep.subr.bf16.mxu0 0
        %1717 = vmatpush2.bf16.xpose.msra.mxu0 0
        %1718 = vmatprep.subr.bf16.mxu0 0
        %1719 = vmatpush2.bf16.xpose.msra.mxu0 0
        %1720 = vmatprep.subr.bf16.mxu0 0
        %1721 = vmatpush2.bf16.xpose.msra.mxu0 0
        %1722 = vmatprep.subr.bf16.mxu0 0
        %1723 = vmatpush2.bf16.xpose.msra.mxu0 0
        %1724 = vmatprep.subr.bf16.mxu0 0
        %1725 = vmatpush2.bf16.xpose.msra.mxu0 0
        %1726 = vmatprep.subr.bf16.mxu0 0
        %1727 = vmatpush2.bf16.xpose.msra.mxu0 0
        %1728 = vmatprep.subr.bf16.mxu0 0
        %1729 = vmatpush2.bf16.xpose.msra.mxu0 0
        %1730 = vmatprep.subr.bf16.mxu0 0
        %1731 = vmatpush2.bf16.xpose.msra.mxu0 0
        %1732 = vmatprep.mubr.bf16.mxu0 0
        %1733 = vmatmul.mubr.bf16.gmra.mxu0 %v1695
        %v1734 = vpop.f32.mrf.mxu0
        %v1735 = vadd.f32 0.0, %v1734
        %v1736 = vpop.f32.mrf.mxu0
        %v1737 = vpop.f32.mrf.mxu0
        %v1738 = vpop.f32.mrf.mxu0
        %1739 = vdwg.mxu0
        %v1741 = vsel %vm1164, %v838, 0
        %v1744 = vsel %vm1164, %v988, 0
        %1746 = vmatprep.subr.bf16.mxu0 0
        %1747 = vmatpush1.bf16.xpose.msra.mxu0 0
        %1748 = vmatprep.subr.bf16.mxu0 0
        %1749 = vmatpush1.bf16.xpose.msra.mxu0 0
        %1750 = vmatprep.subr.bf16.mxu0 0
        %1751 = vmatpush1.bf16.xpose.msra.mxu0 0
        %1752 = vmatprep.subr.bf16.mxu0 0
        %1753 = vmatpush1.bf16.xpose.msra.mxu0 0
        %1754 = vmatprep.subr.bf16.mxu0 0
        %1755 = vmatpush1.bf16.xpose.msra.mxu0 0
        %1756 = vmatprep.subr.bf16.mxu0 0
        %1757 = vmatpush1.bf16.xpose.msra.mxu0 0
        %1758 = vmatprep.subr.bf16.mxu0 0
        %1759 = vmatpush1.bf16.xpose.msra.mxu0 0
        %1760 = vmatprep.subr.bf16.mxu0 0
        %1761 = vmatpush1.bf16.xpose.msra.mxu0 %v1744
        %1762 = vmatprep.subr.bf16.mxu0 0
        %1763 = vmatpush2.bf16.xpose.msra.mxu0 0
        %1764 = vmatprep.subr.bf16.mxu0 0
        %1765 = vmatpush2.bf16.xpose.msra.mxu0 0
        %1766 = vmatprep.subr.bf16.mxu0 0
        %1767 = vmatpush2.bf16.xpose.msra.mxu0 0
        %1768 = vmatprep.subr.bf16.mxu0 0
        %1769 = vmatpush2.bf16.xpose.msra.mxu0 0
        %1770 = vmatprep.subr.bf16.mxu0 0
        %1771 = vmatpush2.bf16.xpose.msra.mxu0 0
        %1772 = vmatprep.subr.bf16.mxu0 0
        %1773 = vmatpush2.bf16.xpose.msra.mxu0 0
        %1774 = vmatprep.subr.bf16.mxu0 0
        %1775 = vmatpush2.bf16.xpose.msra.mxu0 0
        %1776 = vmatprep.subr.bf16.mxu0 0
        %1777 = vmatpush2.bf16.xpose.msra.mxu0 0
        %1778 = vmatprep.mubr.bf16.mxu0 0
        %1779 = vmatmul.mubr.bf16.gmra.mxu0 %v1741
        %v1780 = vpop.f32.mrf.mxu0
        %v1781 = vadd.f32 0.0, %v1780
        %v1782 = vpop.f32.mrf.mxu0
        %v1783 = vpop.f32.mrf.mxu0
        %v1784 = vpop.f32.mrf.mxu0
        %1785 = vdwg.mxu0
        %v1787 = vsel %vm1164, %v839, 0
        %v1790 = vsel %vm1164, %v989, 0
        %1792 = vmatprep.subr.bf16.mxu0 0
        %1793 = vmatpush1.bf16.xpose.msra.mxu0 0
        %1794 = vmatprep.subr.bf16.mxu0 0
        %1795 = vmatpush1.bf16.xpose.msra.mxu0 0
        %1796 = vmatprep.subr.bf16.mxu0 0
        %1797 = vmatpush1.bf16.xpose.msra.mxu0 0
        %1798 = vmatprep.subr.bf16.mxu0 0
        %1799 = vmatpush1.bf16.xpose.msra.mxu0 0
        %1800 = vmatprep.subr.bf16.mxu0 0
        %1801 = vmatpush1.bf16.xpose.msra.mxu0 0
        %1802 = vmatprep.subr.bf16.mxu0 0
        %1803 = vmatpush1.bf16.xpose.msra.mxu0 0
        %1804 = vmatprep.subr.bf16.mxu0 0
        %1805 = vmatpush1.bf16.xpose.msra.mxu0 0
        %1806 = vmatprep.subr.bf16.mxu0 0
        %1807 = vmatpush1.bf16.xpose.msra.mxu0 %v1790
        %1808 = vmatprep.subr.bf16.mxu0 0
        %1809 = vmatpush2.bf16.xpose.msra.mxu0 0
        %1810 = vmatprep.subr.bf16.mxu0 0
        %1811 = vmatpush2.bf16.xpose.msra.mxu0 0
        %1812 = vmatprep.subr.bf16.mxu0 0
        %1813 = vmatpush2.bf16.xpose.msra.mxu0 0
        %1814 = vmatprep.subr.bf16.mxu0 0
        %1815 = vmatpush2.bf16.xpose.msra.mxu0 0
        %1816 = vmatprep.subr.bf16.mxu0 0
        %1817 = vmatpush2.bf16.xpose.msra.mxu0 0
        %1818 = vmatprep.subr.bf16.mxu0 0
        %1819 = vmatpush2.bf16.xpose.msra.mxu0 0
        %1820 = vmatprep.subr.bf16.mxu0 0
        %1821 = vmatpush2.bf16.xpose.msra.mxu0 0
        %1822 = vmatprep.subr.bf16.mxu0 0
        %1823 = vmatpush2.bf16.xpose.msra.mxu0 0
        %1824 = vmatprep.mubr.bf16.mxu0 0
        %1825 = vmatmul.mubr.bf16.gmra.mxu0 %v1787
        %v1826 = vpop.f32.mrf.mxu0
        %v1827 = vadd.f32 0.0, %v1826
        %v1828 = vpop.f32.mrf.mxu0
        %v1829 = vpop.f32.mrf.mxu0
        %v1830 = vpop.f32.mrf.mxu0
        %1831 = vdwg.mxu0
        %v1833 = vsel %vm1164, %v840, 0
        %v1836 = vsel %vm1164, %v990, 0
        %1838 = vmatprep.subr.bf16.mxu0 0
        %1839 = vmatpush1.bf16.xpose.msra.mxu0 0
        %1840 = vmatprep.subr.bf16.mxu0 0
        %1841 = vmatpush1.bf16.xpose.msra.mxu0 0
        %1842 = vmatprep.subr.bf16.mxu0 0
        %1843 = vmatpush1.bf16.xpose.msra.mxu0 0
        %1844 = vmatprep.subr.bf16.mxu0 0
        %1845 = vmatpush1.bf16.xpose.msra.mxu0 0
        %1846 = vmatprep.subr.bf16.mxu0 0
        %1847 = vmatpush1.bf16.xpose.msra.mxu0 0
        %1848 = vmatprep.subr.bf16.mxu0 0
        %1849 = vmatpush1.bf16.xpose.msra.mxu0 0
        %1850 = vmatprep.subr.bf16.mxu0 0
        %1851 = vmatpush1.bf16.xpose.msra.mxu0 0
        %1852 = vmatprep.subr.bf16.mxu0 0
        %1853 = vmatpush1.bf16.xpose.msra.mxu0 %v1836
        %1854 = vmatprep.subr.bf16.mxu0 0
        %1855 = vmatpush2.bf16.xpose.msra.mxu0 0
        %1856 = vmatprep.subr.bf16.mxu0 0
        %1857 = vmatpush2.bf16.xpose.msra.mxu0 0
        %1858 = vmatprep.subr.bf16.mxu0 0
        %1859 = vmatpush2.bf16.xpose.msra.mxu0 0
        %1860 = vmatprep.subr.bf16.mxu0 0
        %1861 = vmatpush2.bf16.xpose.msra.mxu0 0
        %1862 = vmatprep.subr.bf16.mxu0 0
        %1863 = vmatpush2.bf16.xpose.msra.mxu0 0
        %1864 = vmatprep.subr.bf16.mxu0 0
        %1865 = vmatpush2.bf16.xpose.msra.mxu0 0
        %1866 = vmatprep.subr.bf16.mxu0 0
        %1867 = vmatpush2.bf16.xpose.msra.mxu0 0
        %1868 = vmatprep.subr.bf16.mxu0 0
        %1869 = vmatpush2.bf16.xpose.msra.mxu0 0
        %1870 = vmatprep.mubr.bf16.mxu0 0
        %1871 = vmatmul.mubr.bf16.gmra.mxu0 %v1833
        %v1872 = vpop.f32.mrf.mxu0
        %v1873 = vadd.f32 0.0, %v1872
        %v1874 = vpop.f32.mrf.mxu0
        %v1875 = vpop.f32.mrf.mxu0
        %v1876 = vpop.f32.mrf.mxu0
        %1877 = vdwg.mxu0
        %v1878 = vlaneseq
        %v1879 = vshrl.u32 %v1878, 7
        %v1880 = vlaneseq
        %v1881 = vand.u32 %v1880, 127
        %vm1882 = vcmp.ge.s32.totalorder %v1879, %v1881
        %v1883 = vsel %vm1882, 1, 0
        %vm1884 = vcmp.eq.s32.totalorder %v1883, 1
        %v1885 = vsel %vm1884, %v1735, -1e+30
        %v1886 = vsel %vm1884, %v1781, -1e+30
        %v1887 = vsel %vm1884, %v1827, -1e+30
        %v1888 = vsel %vm1884, %v1873, -1e+30
        %v1889 = vld [vmem:[#allocation4] sm:$0xff]
        %v1890 = vld [vmem:[#allocation4 + $0x8] sm:$0xff]
        %v1891 = vld [vmem:[#allocation4 + $0x10] sm:$0xff]
        %v1892 = vld [vmem:[#allocation4 + $0x18] sm:$0xff]
        %vm1893 = vcmask 64512
        %v1894 = vsel %vm1893, %v1885, -inf
        %1895 = vmax.xlane.f32.xlu0 %v1894
        %v1896 = vpop.xlane.xlu0 %1895
        %v1897 = vsel %vm1893, %v1886, -inf
        %1898 = vmax.xlane.f32.xlu0 %v1897
        %v1899 = vpop.xlane.xlu0 %1898
        %v1900 = vsel %vm1893, %v1887, -inf
        %1901 = vmax.xlane.f32.xlu0 %v1900
        %v1902 = vpop.xlane.xlu0 %1901
        %v1903 = vsel %vm1893, %v1888, -inf
        %1904 = vmax.xlane.f32.xlu0 %v1903
        %v1905 = vpop.xlane.xlu0 %1904
        %v1906 = vmax.f32 %v1889, %v1896
        %v1907 = vmax.f32 %v1890, %v1899
        %v1908 = vmax.f32 %v1891, %v1902
        %v1909 = vmax.f32 %v1892, %v1905
        %v1910 = vsub.f32 %v1889, %v1906
        %v1911 = vsub.f32 %v1890, %v1907
        %v1912 = vsub.f32 %v1891, %v1908
        %v1913 = vsub.f32 %v1892, %v1909
        %v1914 = vmul.f32 %v1910, 1.442695
        %v1915 = vpow.pop %v1914
        %v1916 = vmul.f32 %v1911, 1.442695
        %v1917 = vpow.pop %v1916
        %v1918 = vmul.f32 %v1912, 1.442695
        %v1919 = vpow.pop %v1918
        %v1920 = vmul.f32 %v1913, 1.442695
        %v1921 = vpow.pop %v1920
        %1923 = vset.pattern.permute.xlu0 0
        %1924 = vperm.xlu0 %1923, %v1906
        %v1925 = vpop.permute.xlu0 %1924
        %1928 = vset.pattern.permute.xlu0 0
        %1929 = vperm.xlu0 %1928, %v1907
        %v1930 = vpop.permute.xlu0 %1929
        %1933 = vset.pattern.permute.xlu0 0
        %1934 = vperm.xlu0 %1933, %v1908
        %v1935 = vpop.permute.xlu0 %1934
        %1938 = vset.pattern.permute.xlu0 0
        %1939 = vperm.xlu0 %1938, %v1909
        %v1940 = vpop.permute.xlu0 %1939
        %v1942 = vsub.f32 %v1885, %v1925
        %v1943 = vsub.f32 %v1886, %v1930
        %v1944 = vsub.f32 %v1887, %v1935
        %v1945 = vsub.f32 %v1888, %v1940
        %v1946 = vmul.f32 %v1942, 1.442695
        %v1947 = vpow.pop %v1946
        %v1948 = vmul.f32 %v1943, 1.442695
        %v1949 = vpow.pop %v1948
        %v1950 = vmul.f32 %v1944, 1.442695
        %v1951 = vpow.pop %v1950
        %v1952 = vmul.f32 %v1945, 1.442695
        %v1953 = vpow.pop %v1952
        %v1954 = vld [vmem:[#allocation5] sm:$0xff]
        %v1955 = vld [vmem:[#allocation5 + $0x8] sm:$0xff]
        %v1956 = vld [vmem:[#allocation5 + $0x10] sm:$0xff]
        %v1957 = vld [vmem:[#allocation5 + $0x18] sm:$0xff]
        %v1958 = vmul.f32 %v1915, %v1954
        %v1959 = vmul.f32 %v1917, %v1955
        %v1960 = vmul.f32 %v1919, %v1956
        %v1961 = vmul.f32 %v1921, %v1957
        %v1962 = vsel %vm1893, %v1947, 0.0
        %1963 = vadd.xlane.f32.xlu0 %v1962
        %v1964 = vpop.xlane.xlu0 %1963
        %v1965 = vsel %vm1893, %v1949, 0.0
        %1966 = vadd.xlane.f32.xlu0 %v1965
        %v1967 = vpop.xlane.xlu0 %1966
        %v1968 = vsel %vm1893, %v1951, 0.0
        %1969 = vadd.xlane.f32.xlu0 %v1968
        %v1970 = vpop.xlane.xlu0 %1969
        %v1971 = vsel %vm1893, %v1953, 0.0
        %1972 = vadd.xlane.f32.xlu0 %v1971
        %v1973 = vpop.xlane.xlu0 %1972
        %v1974 = vadd.f32 %v1958, %v1964
        %v1975 = vadd.f32 %v1959, %v1967
        %v1976 = vadd.f32 %v1960, %v1970
        %v1977 = vadd.f32 %v1961, %v1973
        %v1978 = vld [vmem:[#allocation6] sm:$0xff]
        %v1979 = vld [vmem:[#allocation6 + $0x8] sm:$0xff]
        %v1980 = vld [vmem:[#allocation6 + $0x10] sm:$0xff]
        %v1981 = vld [vmem:[#allocation6 + $0x18] sm:$0xff]
        %1983 = vset.pattern.permute.xlu0 0
        %1984 = vperm.xlu0 %1983, %v1915
        %v1985 = vpop.permute.xlu0 %1984
        %1988 = vset.pattern.permute.xlu0 0
        %1989 = vperm.xlu0 %1988, %v1917
        %v1990 = vpop.permute.xlu0 %1989
        %1993 = vset.pattern.permute.xlu0 0
        %1994 = vperm.xlu0 %1993, %v1919
        %v1995 = vpop.permute.xlu0 %1994
        %1998 = vset.pattern.permute.xlu0 0
        %1999 = vperm.xlu0 %1998, %v1921
        %v2000 = vpop.permute.xlu0 %1999
        %v2002 = vmul.f32 %v1985, %v1978
        %v2003 = vmul.f32 %v1990, %v1979
        %v2004 = vmul.f32 %v1995, %v1980
        %v2005 = vmul.f32 %v2000, %v1981
        %v2006 = vpack.c.bf16 %v1947, %v1947
        %v2007 = vpack.c.bf16 %v1949, %v1949
        %v2008 = vpack.c.bf16 %v1951, %v1951
        %v2009 = vpack.c.bf16 %v1953, %v1953
        %v2011 = vsel %vm1893, %v2006, 0
        %vm2013 = vcmask 1043456
        %v2015 = vsel %vm2013, %v1137, 0
        %2017 = vmatprep.subr.bf16.mxu0 0
        %2018 = vmatpush1.bf16.msra.mxu0 0
        %2019 = vmatprep.subr.bf16.mxu0 0
        %2020 = vmatpush1.bf16.msra.mxu0 0
        %2021 = vmatprep.subr.bf16.mxu0 0
        %2022 = vmatpush1.bf16.msra.mxu0 0
        %2023 = vmatprep.subr.bf16.mxu0 0
        %2024 = vmatpush1.bf16.msra.mxu0 0
        %2025 = vmatprep.subr.bf16.mxu0 0
        %2026 = vmatpush1.bf16.msra.mxu0 0
        %2027 = vmatprep.subr.bf16.mxu0 0
        %2028 = vmatpush1.bf16.msra.mxu0 0
        %2029 = vmatprep.subr.bf16.mxu0 0
        %2030 = vmatpush1.bf16.msra.mxu0 0
        %2031 = vmatprep.subr.bf16.mxu0 0
        %2032 = vmatpush1.bf16.msra.mxu0 %v2015
        %2033 = vmatprep.subr.bf16.mxu0 0
        %2034 = vmatpush2.bf16.msra.mxu0 0
        %2035 = vmatprep.subr.bf16.mxu0 0
        %2036 = vmatpush2.bf16.msra.mxu0 0
        %2037 = vmatprep.subr.bf16.mxu0 0
        %2038 = vmatpush2.bf16.msra.mxu0 0
        %2039 = vmatprep.subr.bf16.mxu0 0
        %2040 = vmatpush2.bf16.msra.mxu0 0
        %2041 = vmatprep.subr.bf16.mxu0 0
        %2042 = vmatpush2.bf16.msra.mxu0 0
        %2043 = vmatprep.subr.bf16.mxu0 0
        %2044 = vmatpush2.bf16.msra.mxu0 0
        %2045 = vmatprep.subr.bf16.mxu0 0
        %2046 = vmatpush2.bf16.msra.mxu0 0
        %2047 = vmatprep.subr.bf16.mxu0 0
        %2048 = vmatpush2.bf16.msra.mxu0 0
        %2049 = vmatprep.mubr.bf16.mxu0 0
        %2050 = vmatmul.mubr.bf16.gmra.mxu0 %v2011
        %v2051 = vpop.f32.mrf.mxu0
        %v2052 = vadd.f32 0.0, %v2051
        %v2053 = vpop.f32.mrf.mxu0
        %v2054 = vpop.f32.mrf.mxu0
        %v2055 = vpop.f32.mrf.mxu0
        %2056 = vdwg.mxu0
        %v2058 = vsel %vm1893, %v2007, 0
        %v2061 = vsel %vm2013, %v1138, 0
        %2063 = vmatprep.subr.bf16.mxu0 0
        %2064 = vmatpush1.bf16.msra.mxu0 0
        %2065 = vmatprep.subr.bf16.mxu0 0
        %2066 = vmatpush1.bf16.msra.mxu0 0
        %2067 = vmatprep.subr.bf16.mxu0 0
        %2068 = vmatpush1.bf16.msra.mxu0 0
        %2069 = vmatprep.subr.bf16.mxu0 0
        %2070 = vmatpush1.bf16.msra.mxu0 0
        %2071 = vmatprep.subr.bf16.mxu0 0
        %2072 = vmatpush1.bf16.msra.mxu0 0
        %2073 = vmatprep.subr.bf16.mxu0 0
        %2074 = vmatpush1.bf16.msra.mxu0 0
        %2075 = vmatprep.subr.bf16.mxu0 0
        %2076 = vmatpush1.bf16.msra.mxu0 0
        %2077 = vmatprep.subr.bf16.mxu0 0
        %2078 = vmatpush1.bf16.msra.mxu0 %v2061
        %2079 = vmatprep.subr.bf16.mxu0 0
        %2080 = vmatpush2.bf16.msra.mxu0 0
        %2081 = vmatprep.subr.bf16.mxu0 0
        %2082 = vmatpush2.bf16.msra.mxu0 0
        %2083 = vmatprep.subr.bf16.mxu0 0
        %2084 = vmatpush2.bf16.msra.mxu0 0
        %2085 = vmatprep.subr.bf16.mxu0 0
        %2086 = vmatpush2.bf16.msra.mxu0 0
        %2087 = vmatprep.subr.bf16.mxu0 0
        %2088 = vmatpush2.bf16.msra.mxu0 0
        %2089 = vmatprep.subr.bf16.mxu0 0
        %2090 = vmatpush2.bf16.msra.mxu0 0
        %2091 = vmatprep.subr.bf16.mxu0 0
        %2092 = vmatpush2.bf16.msra.mxu0 0
        %2093 = vmatprep.subr.bf16.mxu0 0
        %2094 = vmatpush2.bf16.msra.mxu0 0
        %2095 = vmatprep.mubr.bf16.mxu0 0
        %2096 = vmatmul.mubr.bf16.gmra.mxu0 %v2058
        %v2097 = vpop.f32.mrf.mxu0
        %v2098 = vadd.f32 0.0, %v2097
        %v2099 = vpop.f32.mrf.mxu0
        %v2100 = vpop.f32.mrf.mxu0
        %v2101 = vpop.f32.mrf.mxu0
        %2102 = vdwg.mxu0
        %v2104 = vsel %vm1893, %v2008, 0
        %v2107 = vsel %vm2013, %v1139, 0
        %2109 = vmatprep.subr.bf16.mxu0 0
        %2110 = vmatpush1.bf16.msra.mxu0 0
        %2111 = vmatprep.subr.bf16.mxu0 0
        %2112 = vmatpush1.bf16.msra.mxu0 0
        %2113 = vmatprep.subr.bf16.mxu0 0
        %2114 = vmatpush1.bf16.msra.mxu0 0
        %2115 = vmatprep.subr.bf16.mxu0 0
        %2116 = vmatpush1.bf16.msra.mxu0 0
        %2117 = vmatprep.subr.bf16.mxu0 0
        %2118 = vmatpush1.bf16.msra.mxu0 0
        %2119 = vmatprep.subr.bf16.mxu0 0
        %2120 = vmatpush1.bf16.msra.mxu0 0
        %2121 = vmatprep.subr.bf16.mxu0 0
        %2122 = vmatpush1.bf16.msra.mxu0 0
        %2123 = vmatprep.subr.bf16.mxu0 0
        %2124 = vmatpush1.bf16.msra.mxu0 %v2107
        %2125 = vmatprep.subr.bf16.mxu0 0
        %2126 = vmatpush2.bf16.msra.mxu0 0
        %2127 = vmatprep.subr.bf16.mxu0 0
        %2128 = vmatpush2.bf16.msra.mxu0 0
        %2129 = vmatprep.subr.bf16.mxu0 0
        %2130 = vmatpush2.bf16.msra.mxu0 0
        %2131 = vmatprep.subr.bf16.mxu0 0
        %2132 = vmatpush2.bf16.msra.mxu0 0
        %2133 = vmatprep.subr.bf16.mxu0 0
        %2134 = vmatpush2.bf16.msra.mxu0 0
        %2135 = vmatprep.subr.bf16.mxu0 0
        %2136 = vmatpush2.bf16.msra.mxu0 0
        %2137 = vmatprep.subr.bf16.mxu0 0
        %2138 = vmatpush2.bf16.msra.mxu0 0
        %2139 = vmatprep.subr.bf16.mxu0 0
        %2140 = vmatpush2.bf16.msra.mxu0 0
        %2141 = vmatprep.mubr.bf16.mxu0 0
        %2142 = vmatmul.mubr.bf16.gmra.mxu0 %v2104
        %v2143 = vpop.f32.mrf.mxu0
        %v2144 = vadd.f32 0.0, %v2143
        %v2145 = vpop.f32.mrf.mxu0
        %v2146 = vpop.f32.mrf.mxu0
        %v2147 = vpop.f32.mrf.mxu0
        %2148 = vdwg.mxu0
        %v2150 = vsel %vm1893, %v2009, 0
        %v2153 = vsel %vm2013, %v1140, 0
        %2155 = vmatprep.subr.bf16.mxu0 0
        %2156 = vmatpush1.bf16.msra.mxu0 0
        %2157 = vmatprep.subr.bf16.mxu0 0
        %2158 = vmatpush1.bf16.msra.mxu0 0
        %2159 = vmatprep.subr.bf16.mxu0 0
        %2160 = vmatpush1.bf16.msra.mxu0 0
        %2161 = vmatprep.subr.bf16.mxu0 0
        %2162 = vmatpush1.bf16.msra.mxu0 0
        %2163 = vmatprep.subr.bf16.mxu0 0
        %2164 = vmatpush1.bf16.msra.mxu0 0
        %2165 = vmatprep.subr.bf16.mxu0 0
        %2166 = vmatpush1.bf16.msra.mxu0 0
        %2167 = vmatprep.subr.bf16.mxu0 0
        %2168 = vmatpush1.bf16.msra.mxu0 0
        %2169 = vmatprep.subr.bf16.mxu0 0
        %2170 = vmatpush1.bf16.msra.mxu0 %v2153
        %2171 = vmatprep.subr.bf16.mxu0 0
        %2172 = vmatpush2.bf16.msra.mxu0 0
        %2173 = vmatprep.subr.bf16.mxu0 0
        %2174 = vmatpush2.bf16.msra.mxu0 0
        %2175 = vmatprep.subr.bf16.mxu0 0
        %2176 = vmatpush2.bf16.msra.mxu0 0
        %2177 = vmatprep.subr.bf16.mxu0 0
        %2178 = vmatpush2.bf16.msra.mxu0 0
        %2179 = vmatprep.subr.bf16.mxu0 0
        %2180 = vmatpush2.bf16.msra.mxu0 0
        %2181 = vmatprep.subr.bf16.mxu0 0
        %2182 = vmatpush2.bf16.msra.mxu0 0
        %2183 = vmatprep.subr.bf16.mxu0 0
        %2184 = vmatpush2.bf16.msra.mxu0 0
        %2185 = vmatprep.subr.bf16.mxu0 0
        %2186 = vmatpush2.bf16.msra.mxu0 0
        %2187 = vmatprep.mubr.bf16.mxu0 0
        %2188 = vmatmul.mubr.bf16.gmra.mxu0 %v2150
        %v2189 = vpop.f32.mrf.mxu0
        %v2190 = vadd.f32 0.0, %v2189
        %v2191 = vpop.f32.mrf.mxu0
        %v2192 = vpop.f32.mrf.mxu0
        %v2193 = vpop.f32.mrf.mxu0
        %2194 = vdwg.mxu0
        %v2195 = vadd.f32 %v2002, %v2052
        %v2196 = vadd.f32 %v2003, %v2098
        %v2197 = vadd.f32 %v2004, %v2144
        %v2198 = vadd.f32 %v2005, %v2190
        %v2199 = vrcp.pop %v1974
        %v2200 = vrcp.pop %v1975
        %v2201 = vrcp.pop %v1976
        %v2202 = vrcp.pop %v1977
        %2204 = vset.pattern.permute.xlu0 0
        %2205 = vperm.xlu0 %2204, %v2199
        %v2206 = vpop.permute.xlu0 %2205
        %2209 = vset.pattern.permute.xlu0 0
        %2210 = vperm.xlu0 %2209, %v2200
        %v2211 = vpop.permute.xlu0 %2210
        %2214 = vset.pattern.permute.xlu0 0
        %2215 = vperm.xlu0 %2214, %v2201
        %v2216 = vpop.permute.xlu0 %2215
        %2219 = vset.pattern.permute.xlu0 0
        %2220 = vperm.xlu0 %2219, %v2202
        %v2221 = vpop.permute.xlu0 %2220
        %v2223 = vmul.f32 %v2195, %v2206
        %v2224 = vmul.f32 %v2196, %v2211
        %v2225 = vmul.f32 %v2197, %v2216
        %v2226 = vmul.f32 %v2198, %v2221
        %v2227 = vcombine.low %v2223, %v2225
        %v2228 = vcombine.high %v2223, %v2225
        %v2230 = vunpack.c.l.s4 1983009808
        %v2231 = vunpack.c.0.s8 %v2230
        %v2232 = vlaneseq
        %v2233 = vshrl.u32 %v2232, 7
        %v2234 = vsub.s32 %v2231, %v2233
        %v2235 = vrot.slane %v2227, %v2234
        %v2237 = vunpack.c.l.s4 1983009808
        %v2238 = vunpack.c.0.s8 %v2237
        %v2239 = vlaneseq
        %v2240 = vshrl.u32 %v2239, 7
        %v2241 = vsub.s32 %v2238, %v2240
        %v2242 = vrot.slane %v2228, %v2241
        %v2243 = vcombine.low %v2224, %v2226
        %v2244 = vcombine.high %v2224, %v2226
        %v2246 = vunpack.c.l.s4 1983009808
        %v2247 = vunpack.c.0.s8 %v2246
        %v2248 = vlaneseq
        %v2249 = vshrl.u32 %v2248, 7
        %v2250 = vsub.s32 %v2247, %v2249
        %v2251 = vrot.slane %v2243, %v2250
        %v2253 = vunpack.c.l.s4 1983009808
        %v2254 = vunpack.c.0.s8 %v2253
        %v2255 = vlaneseq
        %v2256 = vshrl.u32 %v2255, 7
        %v2257 = vsub.s32 %v2254, %v2256
        %v2258 = vrot.slane %v2244, %v2257
        %v2259 = vcombine.low %v2235, %v2251
        %v2260 = vcombine.high %v2235, %v2251
        %v2262 = vunpack.c.l.s4 1934713408
        %v2263 = vunpack.c.0.s8 %v2262
        %v2264 = vlaneseq
        %v2265 = vshrl.u32 %v2264, 7
        %v2266 = vsub.s32 %v2263, %v2265
        %v2267 = vrot.slane %v2259, %v2266
        %v2269 = vunpack.c.l.s4 1934713408
        %v2270 = vunpack.c.0.s8 %v2269
        %v2271 = vlaneseq
        %v2272 = vshrl.u32 %v2271, 7
        %v2273 = vsub.s32 %v2270, %v2272
        %v2274 = vrot.slane %v2260, %v2273
        %v2275 = vcombine.low %v2242, %v2258
        %v2276 = vcombine.high %v2242, %v2258
        %v2278 = vunpack.c.l.s4 1934713408
        %v2279 = vunpack.c.0.s8 %v2278
        %v2280 = vlaneseq
        %v2281 = vshrl.u32 %v2280, 7
        %v2282 = vsub.s32 %v2279, %v2281
        %v2283 = vrot.slane %v2275, %v2282
        %v2285 = vunpack.c.l.s4 1934713408
        %v2286 = vunpack.c.0.s8 %v2285
        %v2287 = vlaneseq
        %v2288 = vshrl.u32 %v2287, 7
        %v2289 = vsub.s32 %v2286, %v2288
        %v2290 = vrot.slane %v2276, %v2289
        %v2291 = vcombine.high %v2267, 0.0
        %v2292 = vcombine.high %v2274, 0.0
        %v2293 = vcombine.high %v2283, 0.0
        %v2294 = vcombine.high %v2290, 0.0
        %v2295 = vcombine.low %v2267, %v2274
        %v2297 = vunpack.c.l.s4 1983009808
        %v2298 = vunpack.c.0.s8 %v2297
        %v2299 = vlaneseq
        %v2300 = vshrl.u32 %v2299, 7
        %v2301 = vsub.s32 %v2298, %v2300
        %v2302 = vrot.slane %v2295, %v2301
        %v2303 = vcombine.low %v2291, %v2292
        %v2305 = vunpack.c.l.s4 1983009808
        %v2306 = vunpack.c.0.s8 %v2305
        %v2307 = vlaneseq
        %v2308 = vshrl.u32 %v2307, 7
        %v2309 = vsub.s32 %v2306, %v2308
        %v2310 = vrot.slane %v2303, %v2309
        %v2311 = vcombine.low %v2283, %v2290
        %v2313 = vunpack.c.l.s4 1983009808
        %v2314 = vunpack.c.0.s8 %v2313
        %v2315 = vlaneseq
        %v2316 = vshrl.u32 %v2315, 7
        %v2317 = vsub.s32 %v2314, %v2316
        %v2318 = vrot.slane %v2311, %v2317
        %v2319 = vcombine.low %v2293, %v2294
        %v2321 = vunpack.c.l.s4 1983009808
        %v2322 = vunpack.c.0.s8 %v2321
        %v2323 = vlaneseq
        %v2324 = vshrl.u32 %v2323, 7
        %v2325 = vsub.s32 %v2322, %v2324
        %v2326 = vrot.slane %v2319, %v2325
        %v2327 = vcombine.low %v2302, %v2310
        %v2328 = vcombine.high %v2302, %v2310
        %v2330 = vunpack.c.l.s4 1934713408
        %v2331 = vunpack.c.0.s8 %v2330
        %v2332 = vlaneseq
        %v2333 = vshrl.u32 %v2332, 7
        %v2334 = vsub.s32 %v2331, %v2333
        %v2335 = vrot.slane %v2327, %v2334
        %v2337 = vunpack.c.l.s4 1934713408
        %v2338 = vunpack.c.0.s8 %v2337
        %v2339 = vlaneseq
        %v2340 = vshrl.u32 %v2339, 7
        %v2341 = vsub.s32 %v2338, %v2340
        %v2342 = vrot.slane %v2328, %v2341
        %v2343 = vcombine.low %v2318, %v2326
        %v2344 = vcombine.high %v2318, %v2326
        %v2346 = vunpack.c.l.s4 1934713408
        %v2347 = vunpack.c.0.s8 %v2346
        %v2348 = vlaneseq
        %v2349 = vshrl.u32 %v2348, 7
        %v2350 = vsub.s32 %v2347, %v2349
        %v2351 = vrot.slane %v2343, %v2350
        %v2353 = vunpack.c.l.s4 1934713408
        %v2354 = vunpack.c.0.s8 %v2353
        %v2355 = vlaneseq
        %v2356 = vshrl.u32 %v2355, 7
        %v2357 = vsub.s32 %v2354, %v2356
        %v2358 = vrot.slane %v2344, %v2357
        %v2359 = vcombine.low %v2335, %v2351
        %v2360 = vcombine.high %v2335, %v2351
        %v2361 = vcombine.low %v2342, %v2358
        %v2362 = vcombine.high %v2342, %v2358
        %2364 = vrot.lane.b32.xlu0 %v2360, 16
        %v2365 = vpop.permute.xlu0 %2364
        %2368 = vrot.lane.b32.xlu0 %v2361, 32
        %v2369 = vpop.permute.xlu0 %2368
        %2372 = vrot.lane.b32.xlu0 %v2362, 48
        %v2373 = vpop.permute.xlu0 %2372
        %v2375 = vsel %vm1164, %v2359, %v2365
        %vm2376 = vcmask 261120
        %v2377 = vsel %vm2376, %v2375, %v2369
        %vm2378 = vcmask 392192
        %v2379 = vsel %vm2378, %v2377, %v2373
        %v2380 = vadd.f32 %v2379, %v438
        %v2381 = vld [vmem:[%s6] sm:$0x1]
        %v2382 = vld [vmem:[%s7] sm:$0x1]
        %v2383 = vsel %vm441, %v2380, 0.0
        %2384 = vadd.xlane.f32.xlu0 %v2383
        %v2385 = vpop.xlane.xlu0 %2384
        %v2386 = vmul.f32 %v2385, %v445
        %v2387 = vsub.f32 %v2380, %v2386
        %v2388 = vmul.f32 %v2387, %v2387
        %v2389 = vsel %vm441, %v2388, 0.0
        %2390 = vadd.xlane.f32.xlu0 %v2389
        %v2391 = vpop.xlane.xlu0 %2390
        %v2392 = vmul.f32 %v2391, %v445
        %v2393 = vadd.f32 %v2392, 1e-05
        %v2394 = vrsqrt.pop %v2393
        %v2395 = vmul.f32 %v2387, %v2394
        %v2397 = vlaneseq
        %v2398 = vshrl.u32 %v2397, 7
        %v2399 = vsub.s32 0, %v2398
        %v2400 = vrot.slane %v2381, %v2399
        %v2402 = vmul.f32 %v2395, %v2400
        %v2404 = vlaneseq
        %v2405 = vshrl.u32 %v2404, 7
        %v2406 = vsub.s32 0, %v2405
        %v2407 = vrot.slane %v2382, %v2406
        %v2409 = vadd.f32 %v2402, %v2407
        %v2410 = vpack.c.bf16 %v2409, %v2409
        %v2411 = vld [vmem:[%s8] sm:$0xf]
        %v2412 = vld [vmem:[%s8 + $0x4] sm:$0xf]
        %v2413 = vld [vmem:[%s8 + $0x8] sm:$0xf]
        %v2414 = vld [vmem:[%s8 + $0xc] sm:$0xf]
        %v2415 = vld [vmem:[%s8 + $0x10] sm:$0xf]
        %v2416 = vld [vmem:[%s8 + $0x14] sm:$0xf]
        %v2417 = vld [vmem:[%s8 + $0x18] sm:$0xf]
        %v2418 = vld [vmem:[%s8 + $0x1c] sm:$0xf]
        %v2419 = vld [vmem:[%s9] sm:$0x1]
        %v2421 = vlaneseq
        %v2422 = vshrl.u32 %v2421, 7
        %v2423 = vsub.s32 0, %v2422
        %v2424 = vrot.slane %v2419, %v2423
        %v2434 = vunpack.c.l.b16 %v2411
        %v2435 = vunpack.c.l.b16 %v2412
        %v2436 = vunpack.c.l.b16 %v2413
        %v2437 = vunpack.c.l.b16 %v2414
        %v2438 = vunpack.c.l.b16 %v2415
        %v2439 = vunpack.c.l.b16 %v2416
        %v2440 = vunpack.c.l.b16 %v2417
        %v2441 = vunpack.c.l.b16 %v2418
        %v2442 = vpack.c.b16 %v2435, %v2434
        %v2443 = vpack.c.b16 %v2437, %v2436
        %v2444 = vpack.c.b16 %v2439, %v2438
        %v2445 = vpack.c.b16 %v2441, %v2440
        %v2451 = vsel %vm441, %v2410, 0
        %2453 = vmatprep.subr.bf16.mxu0 0
        %2454 = vmatpush1.bf16.msra.mxu0 0
        %2455 = vmatprep.subr.bf16.mxu0 0
        %2456 = vmatpush1.bf16.msra.mxu0 0
        %2457 = vmatprep.subr.bf16.mxu0 0
        %2458 = vmatpush1.bf16.msra.mxu0 0
        %2459 = vmatprep.subr.bf16.mxu0 0
        %2460 = vmatpush1.bf16.msra.mxu0 0
        %2461 = vmatprep.subr.bf16.mxu0 0
        %2462 = vmatpush1.bf16.msra.mxu0 %v2445
        %2463 = vmatprep.subr.bf16.mxu0 0
        %2464 = vmatpush1.bf16.msra.mxu0 %v2444
        %2465 = vmatprep.subr.bf16.mxu0 0
        %2466 = vmatpush1.bf16.msra.mxu0 %v2443
        %2467 = vmatprep.subr.bf16.mxu0 0
        %2468 = vmatpush1.bf16.msra.mxu0 %v2442
        %2469 = vmatprep.subr.bf16.mxu0 0
        %2470 = vmatpush2.bf16.msra.mxu0 0
        %2471 = vmatprep.subr.bf16.mxu0 0
        %2472 = vmatpush2.bf16.msra.mxu0 0
        %2473 = vmatprep.subr.bf16.mxu0 0
        %2474 = vmatpush2.bf16.msra.mxu0 0
        %2475 = vmatprep.subr.bf16.mxu0 0
        %2476 = vmatpush2.bf16.msra.mxu0 0
        %2477 = vmatprep.subr.bf16.mxu0 0
        %2478 = vmatpush2.bf16.msra.mxu0 0
        %2479 = vmatprep.subr.bf16.mxu0 0
        %2480 = vmatpush2.bf16.msra.mxu0 0
        %2481 = vmatprep.subr.bf16.mxu0 0
        %2482 = vmatpush2.bf16.msra.mxu0 0
        %2483 = vmatprep.subr.bf16.mxu0 0
        %2484 = vmatpush2.bf16.msra.mxu0 0
        %2485 = vmatprep.mubr.bf16.mxu0 0
        %2486 = vmatmul.mubr.bf16.gmra.mxu0 %v2451
        %v2487 = vpop.f32.mrf.mxu0
        %v2488 = vadd.f32 %v2424, %v2487
        %v2489 = vpop.f32.mrf.mxu0
        %v2490 = vpop.f32.mrf.mxu0
        %v2491 = vpop.f32.mrf.mxu0
        %2492 = vdwg.mxu0
        %v2493 = vmax.f32 %v2488, 0.0
        %v2494 = vpack.c.bf16 %v2493, %v2493
        %v2495 = vld [vmem:[%s10] sm:$0xf]
        %v2496 = vld [vmem:[%s10 + $0x4] sm:$0xf]
        %v2497 = vld [vmem:[%s10 + $0x8] sm:$0xf]
        %v2498 = vld [vmem:[%s10 + $0xc] sm:$0xf]
        %v2499 = vld [vmem:[%s10 + $0x10] sm:$0xf]
        %v2500 = vld [vmem:[%s10 + $0x14] sm:$0xf]
        %v2501 = vld [vmem:[%s10 + $0x18] sm:$0xf]
        %v2502 = vld [vmem:[%s10 + $0x1c] sm:$0xf]
        %v2503 = vld [vmem:[%s10 + $0x20] sm:$0xf]
        %v2504 = vld [vmem:[%s10 + $0x24] sm:$0xf]
        %v2505 = vld [vmem:[%s10 + $0x28] sm:$0xf]
        %v2506 = vld [vmem:[%s10 + $0x2c] sm:$0xf]
        %v2507 = vld [vmem:[%s10 + $0x30] sm:$0xf]
        %v2508 = vld [vmem:[%s10 + $0x34] sm:$0xf]
        %v2509 = vld [vmem:[%s10 + $0x38] sm:$0xf]
        %v2510 = vld [vmem:[%s10 + $0x3c] sm:$0xf]
        %s2511 = scalar_lea.vmem %s8, 32
        %v2512 = vld [vmem:[%s2511] sm:$0xf]
        %v2513 = vld [vmem:[%s2511 + $0x4] sm:$0xf]
        %v2514 = vld [vmem:[%s2511 + $0x8] sm:$0xf]
        %v2515 = vld [vmem:[%s2511 + $0xc] sm:$0xf]
        %v2516 = vld [vmem:[%s2511 + $0x10] sm:$0xf]
        %v2517 = vld [vmem:[%s2511 + $0x14] sm:$0xf]
        %v2518 = vld [vmem:[%s2511 + $0x18] sm:$0xf]
        %v2519 = vld [vmem:[%s2511 + $0x1c] sm:$0xf]
        %s2520 = scalar_lea.vmem %s9, 1
        %v2521 = vld [vmem:[%s2520] sm:$0x1]
        %v2523 = vlaneseq
        %v2524 = vshrl.u32 %v2523, 7
        %v2525 = vsub.s32 0, %v2524
        %v2526 = vrot.slane %v2521, %v2525
        %v2536 = vunpack.c.l.b16 %v2512
        %v2537 = vunpack.c.l.b16 %v2513
        %v2538 = vunpack.c.l.b16 %v2514
        %v2539 = vunpack.c.l.b16 %v2515
        %v2540 = vunpack.c.l.b16 %v2516
        %v2541 = vunpack.c.l.b16 %v2517
        %v2542 = vunpack.c.l.b16 %v2518
        %v2543 = vunpack.c.l.b16 %v2519
        %v2544 = vpack.c.b16 %v2537, %v2536
        %v2545 = vpack.c.b16 %v2539, %v2538
        %v2546 = vpack.c.b16 %v2541, %v2540
        %v2547 = vpack.c.b16 %v2543, %v2542
        %2552 = vmatprep.subr.bf16.mxu0 0
        %2553 = vmatpush1.bf16.msra.mxu0 0
        %2554 = vmatprep.subr.bf16.mxu0 0
        %2555 = vmatpush1.bf16.msra.mxu0 0
        %2556 = vmatprep.subr.bf16.mxu0 0
        %2557 = vmatpush1.bf16.msra.mxu0 0
        %2558 = vmatprep.subr.bf16.mxu0 0
        %2559 = vmatpush1.bf16.msra.mxu0 0
        %2560 = vmatprep.subr.bf16.mxu0 0
        %2561 = vmatpush1.bf16.msra.mxu0 %v2547
        %2562 = vmatprep.subr.bf16.mxu0 0
        %2563 = vmatpush1.bf16.msra.mxu0 %v2546
        %2564 = vmatprep.subr.bf16.mxu0 0
        %2565 = vmatpush1.bf16.msra.mxu0 %v2545
        %2566 = vmatprep.subr.bf16.mxu0 0
        %2567 = vmatpush1.bf16.msra.mxu0 %v2544
        %2568 = vmatprep.subr.bf16.mxu0 0
        %2569 = vmatpush2.bf16.msra.mxu0 0
        %2570 = vmatprep.subr.bf16.mxu0 0
        %2571 = vmatpush2.bf16.msra.mxu0 0
        %2572 = vmatprep.subr.bf16.mxu0 0
        %2573 = vmatpush2.bf16.msra.mxu0 0
        %2574 = vmatprep.subr.bf16.mxu0 0
        %2575 = vmatpush2.bf16.msra.mxu0 0
        %2576 = vmatprep.subr.bf16.mxu0 0
        %2577 = vmatpush2.bf16.msra.mxu0 0
        %2578 = vmatprep.subr.bf16.mxu0 0
        %2579 = vmatpush2.bf16.msra.mxu0 0
        %2580 = vmatprep.subr.bf16.mxu0 0
        %2581 = vmatpush2.bf16.msra.mxu0 0
        %2582 = vmatprep.subr.bf16.mxu0 0
        %2583 = vmatpush2.bf16.msra.mxu0 0
        %2584 = vmatprep.mubr.bf16.mxu0 0
        %2585 = vmatmul.mubr.bf16.gmra.mxu0 %v2451
        %v2586 = vpop.f32.mrf.mxu0
        %v2587 = vadd.f32 %v2526, %v2586
        %v2588 = vpop.f32.mrf.mxu0
        %v2589 = vpop.f32.mrf.mxu0
        %v2590 = vpop.f32.mrf.mxu0
        %2591 = vdwg.mxu0
        %v2592 = vmax.f32 %v2587, 0.0
        %v2593 = vpack.c.bf16 %v2592, %v2592
        %s2594 = scalar_lea.vmem %s10, 64
        %v2595 = vld [vmem:[%s2594] sm:$0xf]
        %v2596 = vld [vmem:[%s2594 + $0x4] sm:$0xf]
        %v2597 = vld [vmem:[%s2594 + $0x8] sm:$0xf]
        %v2598 = vld [vmem:[%s2594 + $0xc] sm:$0xf]
        %v2599 = vld [vmem:[%s2594 + $0x10] sm:$0xf]
        %v2600 = vld [vmem:[%s2594 + $0x14] sm:$0xf]
        %v2601 = vld [vmem:[%s2594 + $0x18] sm:$0xf]
        %v2602 = vld [vmem:[%s2594 + $0x1c] sm:$0xf]
        %v2603 = vld [vmem:[%s2594 + $0x20] sm:$0xf]
        %v2604 = vld [vmem:[%s2594 + $0x24] sm:$0xf]
        %v2605 = vld [vmem:[%s2594 + $0x28] sm:$0xf]
        %v2606 = vld [vmem:[%s2594 + $0x2c] sm:$0xf]
        %v2607 = vld [vmem:[%s2594 + $0x30] sm:$0xf]
        %v2608 = vld [vmem:[%s2594 + $0x34] sm:$0xf]
        %v2609 = vld [vmem:[%s2594 + $0x38] sm:$0xf]
        %v2610 = vld [vmem:[%s2594 + $0x3c] sm:$0xf]
        %v2627 = vunpack.c.l.b16 %v2595
        %v2628 = vunpack.c.l.b16 %v2596
        %v2629 = vunpack.c.l.b16 %v2597
        %v2630 = vunpack.c.l.b16 %v2598
        %v2631 = vunpack.c.l.b16 %v2599
        %v2632 = vunpack.c.l.b16 %v2600
        %v2633 = vunpack.c.l.b16 %v2601
        %v2634 = vunpack.c.l.b16 %v2602
        %v2635 = vunpack.c.l.b16 %v2603
        %v2636 = vunpack.c.l.b16 %v2604
        %v2637 = vunpack.c.l.b16 %v2605
        %v2638 = vunpack.c.l.b16 %v2606
        %v2639 = vunpack.c.l.b16 %v2607
        %v2640 = vunpack.c.l.b16 %v2608
        %v2641 = vunpack.c.l.b16 %v2609
        %v2642 = vunpack.c.l.b16 %v2610
        %v2643 = vpack.c.b16 %v2628, %v2627
        %v2644 = vpack.c.b16 %v2630, %v2629
        %v2645 = vpack.c.b16 %v2632, %v2631
        %v2646 = vpack.c.b16 %v2634, %v2633
        %v2647 = vpack.c.b16 %v2636, %v2635
        %v2648 = vpack.c.b16 %v2638, %v2637
        %v2649 = vpack.c.b16 %v2640, %v2639
        %v2650 = vpack.c.b16 %v2642, %v2641
        %2659 = vmatprep.subr.bf16.mxu0 0
        %2660 = vmatpush1.bf16.msra.mxu0 %v2650
        %2661 = vmatprep.subr.bf16.mxu0 0
        %2662 = vmatpush1.bf16.msra.mxu0 %v2649
        %2663 = vmatprep.subr.bf16.mxu0 0
        %2664 = vmatpush1.bf16.msra.mxu0 %v2648
        %2665 = vmatprep.subr.bf16.mxu0 0
        %2666 = vmatpush1.bf16.msra.mxu0 %v2647
        %2667 = vmatprep.subr.bf16.mxu0 0
        %2668 = vmatpush1.bf16.msra.mxu0 %v2646
        %2669 = vmatprep.subr.bf16.mxu0 0
        %2670 = vmatpush1.bf16.msra.mxu0 %v2645
        %2671 = vmatprep.subr.bf16.mxu0 0
        %2672 = vmatpush1.bf16.msra.mxu0 %v2644
        %2673 = vmatprep.subr.bf16.mxu0 0
        %2674 = vmatpush1.bf16.msra.mxu0 %v2643
        %2675 = vmatprep.subr.bf16.mxu0 0
        %2676 = vmatpush2.bf16.msra.mxu0 0
        %2677 = vmatprep.subr.bf16.mxu0 0
        %2678 = vmatpush2.bf16.msra.mxu0 0
        %2679 = vmatprep.subr.bf16.mxu0 0
        %2680 = vmatpush2.bf16.msra.mxu0 0
        %2681 = vmatprep.subr.bf16.mxu0 0
        %2682 = vmatpush2.bf16.msra.mxu0 0
        %2683 = vmatprep.subr.bf16.mxu0 0
        %2684 = vmatpush2.bf16.msra.mxu0 0
        %2685 = vmatprep.subr.bf16.mxu0 0
        %2686 = vmatpush2.bf16.msra.mxu0 0
        %2687 = vmatprep.subr.bf16.mxu0 0
        %2688 = vmatpush2.bf16.msra.mxu0 0
        %2689 = vmatprep.subr.bf16.mxu0 0
        %2690 = vmatpush2.bf16.msra.mxu0 0
        %2691 = vmatprep.mubr.bf16.mxu0 0
        %2692 = vmatmul.mubr.bf16.gmra.mxu0 %v2593
        %v2693 = vpop.f32.mrf.mxu0
        %v2694 = vadd.f32 0.0, %v2693
        %v2695 = vpop.f32.mrf.mxu0
        %v2696 = vpop.f32.mrf.mxu0
        %v2697 = vpop.f32.mrf.mxu0
        %2698 = vdwg.mxu0
        %v2715 = vunpack.c.l.b16 %v2495
        %v2716 = vunpack.c.l.b16 %v2496
        %v2717 = vunpack.c.l.b16 %v2497
        %v2718 = vunpack.c.l.b16 %v2498
        %v2719 = vunpack.c.l.b16 %v2499
        %v2720 = vunpack.c.l.b16 %v2500
        %v2721 = vunpack.c.l.b16 %v2501
        %v2722 = vunpack.c.l.b16 %v2502
        %v2723 = vunpack.c.l.b16 %v2503
        %v2724 = vunpack.c.l.b16 %v2504
        %v2725 = vunpack.c.l.b16 %v2505
        %v2726 = vunpack.c.l.b16 %v2506
        %v2727 = vunpack.c.l.b16 %v2507
        %v2728 = vunpack.c.l.b16 %v2508
        %v2729 = vunpack.c.l.b16 %v2509
        %v2730 = vunpack.c.l.b16 %v2510
        %v2731 = vpack.c.b16 %v2716, %v2715
        %v2732 = vpack.c.b16 %v2718, %v2717
        %v2733 = vpack.c.b16 %v2720, %v2719
        %v2734 = vpack.c.b16 %v2722, %v2721
        %v2735 = vpack.c.b16 %v2724, %v2723
        %v2736 = vpack.c.b16 %v2726, %v2725
        %v2737 = vpack.c.b16 %v2728, %v2727
        %v2738 = vpack.c.b16 %v2730, %v2729
        %2747 = vmatprep.subr.bf16.mxu0 0
        %2748 = vmatpush1.bf16.msra.mxu0 %v2738
        %2749 = vmatprep.subr.bf16.mxu0 0
        %2750 = vmatpush1.bf16.msra.mxu0 %v2737
        %2751 = vmatprep.subr.bf16.mxu0 0
        %2752 = vmatpush1.bf16.msra.mxu0 %v2736
        %2753 = vmatprep.subr.bf16.mxu0 0
        %2754 = vmatpush1.bf16.msra.mxu0 %v2735
        %2755 = vmatprep.subr.bf16.mxu0 0
        %2756 = vmatpush1.bf16.msra.mxu0 %v2734
        %2757 = vmatprep.subr.bf16.mxu0 0
        %2758 = vmatpush1.bf16.msra.mxu0 %v2733
        %2759 = vmatprep.subr.bf16.mxu0 0
        %2760 = vmatpush1.bf16.msra.mxu0 %v2732
        %2761 = vmatprep.subr.bf16.mxu0 0
        %2762 = vmatpush1.bf16.msra.mxu0 %v2731
        %2763 = vmatprep.subr.bf16.mxu0 0
        %2764 = vmatpush2.bf16.msra.mxu0 0
        %2765 = vmatprep.subr.bf16.mxu0 0
        %2766 = vmatpush2.bf16.msra.mxu0 0
        %2767 = vmatprep.subr.bf16.mxu0 0
        %2768 = vmatpush2.bf16.msra.mxu0 0
        %2769 = vmatprep.subr.bf16.mxu0 0
        %2770 = vmatpush2.bf16.msra.mxu0 0
        %2771 = vmatprep.subr.bf16.mxu0 0
        %2772 = vmatpush2.bf16.msra.mxu0 0
        %2773 = vmatprep.subr.bf16.mxu0 0
        %2774 = vmatpush2.bf16.msra.mxu0 0
        %2775 = vmatprep.subr.bf16.mxu0 0
        %2776 = vmatpush2.bf16.msra.mxu0 0
        %2777 = vmatprep.subr.bf16.mxu0 0
        %2778 = vmatpush2.bf16.msra.mxu0 0
        %2779 = vmatprep.mubr.bf16.mxu0 0
        %2780 = vmatmul.mubr.bf16.gmra.mxu0 %v2494
        %v2781 = vpop.f32.mrf.mxu0
        %v2782 = vadd.f32 %v2694, %v2781
        %v2783 = vpop.f32.mrf.mxu0
        %v2784 = vpop.f32.mrf.mxu0
        %v2785 = vpop.f32.mrf.mxu0
        %2786 = vdwg.mxu0
        %v2787 = vld [vmem:[%s11] sm:$0x1]
        %v2789 = vlaneseq
        %v2790 = vshrl.u32 %v2789, 7
        %v2791 = vsub.s32 0, %v2790
        %v2792 = vrot.slane %v2787, %v2791
        %v2794 = vadd.f32 %v2782, %v2792
        %v2795 = vadd.f32 %v2794, %v2380
        %2796 = vst.msk [vmem:[%s428] sm:$0xff] %vm441, %v2795
        %s2797 = sand.u32 %s307, 1
        %s2798 = scalar_lea.sflag [#allocation8], %s2797
        %s2799 = sand.u32 %s307, 1
        %s2800 = smul.addr %s2799, 8
        %s2801 = scalar_lea.vmem [#allocation7], %s2800
        // Predicated region
        $region76: #{tpu_custom_call.1} parent=67 // pred_check
          %p2802 = pneg %p317
        $region77: #{tpu_custom_call.1} parent=67 // pred_check_branch
          %2804 = sbr.rel (%p2802) target = $region79
        $region78: #{tpu_custom_call.1} parent=67 // pred_region
          %s2806 = ssub.s32 128, 128
          %2807 = vsyncadd %s2798, %s2806
          %s2808 = smul.addr %s30, 2
          %s2809 = sadd.s32 %s31, %s2808
          %s2810 = smul.addr %s2809, 128
          %s2811 = scalar_lea.hbm %s12, %s2810
          %s2813 = sshll.u32 %s2801, 4
          %s2814 = int_to_ptr.vmem [resolvable:$true] %s2813
          %2816 = dma.vmem_to_hbm [thread:$0]  %s2814, 128, %s2811, %s2798
        $region79: #{tpu_custom_call.1} parent=67 // pred_fallthru
          _
      $region68: #{tpu_custom_call.1} parent=5 // pred_fallthru
        _
      %p2817 = scmp.le.s32.totalorder 2, %s21
      // Predicated region
      $region80: #{tpu_custom_call.1} parent=5 // pred_check
        %p2818 = pneg %p2817
      $region81: #{tpu_custom_call.1} parent=5 // pred_check_branch
        %2820 = sbr.rel (%p2818) target = $region83
      $region82: #{tpu_custom_call.1} parent=5 // pred_region
        %s2821 = ssub.s32 %s21, 2
        // Predicated region
        $region84: #{tpu_custom_call.1} parent=82 // pred_check
          %p2822 = pneg %p323
        $region85: #{tpu_custom_call.1} parent=82 // pred_check_branch
          %2824 = sbr.rel (%p2822) target = $region87
        $region86: #{tpu_custom_call.1} parent=82 // pred_region
          %s2825 = sand.u32 %s308, 1
          %s2826 = scalar_lea.sflag [#allocation8], %s2825
          %s2827 = sand.u32 %s308, 1
          %s2828 = smul.addr %s2827, 8
          %s2829 = scalar_lea.vmem [#allocation7], %s2828
          %2830 = dma.done %s2826, 128
        $region87: #{tpu_custom_call.1} parent=82 // pred_fallthru
          _
      $region83: #{tpu_custom_call.1} parent=5 // pred_fallthru
        _
    $region6: #{tpu_custom_call.1} parent=1 // loop_footer
      %s25 = sadd.s32 1, %s21
    $region7: #{tpu_custom_call.1} parent=1 // loop_footer_branch
      %20 = sbr.rel target = $region3
    $region8: #{tpu_custom_call.1} parent=1 // loop_exit
      _
    %2831 = vsyncpa [#allocation8], 1
    %s2832 = scalar_lea.sflag [#allocation8], 1
    %2833 = vsyncpa %s2832, 1

</llo_original>
